<compile_context>
chip_gen: v7x
topology: tpu7x:2x2x1
jax: 0.10.0
libtpu: 0.0.40
codegen_flags: <defaults>
</compile_context>

<pallas_src>
import jax
import jax.numpy as jnp
import numpy as np
from jax import lax
from jax.experimental import pallas as pl
from jax.experimental.pallas import tpu as pltpu

NEG_SLOPE = 0.01  # PyTorch nn.LeakyReLU default negative_slope


def _round_up(x, m):
    return (x + m - 1) // m * m


def basic_block_kernel(s1_ref, s2_ref, x_ref, w1_ref, w2_ref, o_ref, pad_ref):
    """One batch element per grid step.

    x_ref  : (1, H, W, C)   VMEM f32 (NHWC)
    w*_ref : (3, 3, C, C)   VMEM bf16 (HWIO)
    s*_ref : (1,)           SMEM f32 (scale1 / scale2)
    o_ref  : (1, H, W, C)   VMEM f32
    pad_ref: (H+2, Wp, C)   VMEM f32, shared zero-halo buffer for both convs
    """
    _, H, W, C = x_ref.shape
    HW = H * W
    Wp = pad_ref.shape[1]

    s1 = jnp.maximum(s1_ref[0], 0.0)   # scale1.clamp(min=0)
    s2 = jnp.maximum(s2_ref[0], 0.0)   # scale2.clamp(min=0)

    def clip_lrelu(v, s):
        v = jnp.minimum(jnp.maximum(v, -s), s)        # clip to [-s, s]
        return jnp.where(v >= 0.0, v, NEG_SLOPE * v)  # LeakyReLU

    # Zero only the 1-px halo border the taps actually read (rows 0 / H+1 and
    # cols 0 / W+1).  The interior is fully rewritten before every conv, so no
    # full-buffer memset is needed.  Done unconditionally (not gated on
    # program_id) so it stays correct if the batch axis is sharded across
    # TensorCores on megacore parts.
    zrow = jnp.zeros((1, Wp, C), pad_ref.dtype)
    zcol = jnp.zeros((H, 1, C), pad_ref.dtype)
    pad_ref[pl.ds(0, 1), :, :] = zrow
    pad_ref[pl.ds(H + 1, 1), :, :] = zrow
    pad_ref[pl.ds(1, H), pl.ds(0, 1), :] = zcol
    pad_ref[pl.ds(1, H), pl.ds(W + 1, 1), :] = zcol

    def conv3x3(act_hwc, w_ref):
        """3x3 conv, stride=1, pad=1: 9 shifted (H*W, C)x(C, C) bf16 MXU matmuls."""
        pad_ref[pl.ds(1, H), pl.ds(1, W), :] = act_hwc.astype(pad_ref.dtype)
        acc = jnp.zeros((HW, C), jnp.float32)
        for kh in range(3):
            for kw in range(3):
                patch = pad_ref[pl.ds(kh, H), pl.ds(kw, W), :]        # (H, W, C)
                patch = patch.reshape(HW, C).astype(jnp.bfloat16)     # lane = C
                acc = acc + jnp.dot(patch, w_ref[kh, kw],
                                    preferred_element_type=jnp.float32)
        return acc                                                    # (H*W, C) f32

    act1 = clip_lrelu(x_ref[0].astype(jnp.float32), s1)               # (H, W, C)
    acc1 = conv3x3(act1, w1_ref)                                      # conv1
    act2 = clip_lrelu(acc1, s2).reshape(H, W, C)
    acc2 = conv3x3(act2, w2_ref)                                      # conv2

    # TODO(synk): downsample branch (scale3 clip) not implemented — the module
    # default is downsample=None / stride=1, which is what this kernel covers.
    identity = x_ref[0].astype(jnp.float32)       # re-read: keep live range short
    o_ref[0] = (acc2.reshape(H, W, C) + identity).astype(o_ref.dtype)


def basic_block_forward(x_nchw, w1_oihw, w2_oihw, scale1, scale2):
    N, Cin, H, W = x_nchw.shape
    Cout = w1_oihw.shape[0]
    assert Cin == Cout, "residual add requires inplanes == planes (stride=1, downsample=None)"
    C = Cin

    # TODO(synk): for production keep the surrounding model in NHWC so these
    # boundary transposes (full HBM passes) disappear.
    x = jnp.transpose(x_nchw, (0, 2, 3, 1))                          # NCHW -> NHWC
    w1 = jnp.transpose(w1_oihw, (2, 3, 1, 0)).astype(jnp.bfloat16)   # OIHW -> HWIO bf16
    w2 = jnp.transpose(w2_oihw, (2, 3, 1, 0)).astype(jnp.bfloat16)

    Hp = H + 2
    Wp = _round_up(W + 2, 8)                 # sublane-aligned halo width

    # VMEM footprint (double-buffered in/out blocks + weights + scratch) -> limit.
    block_bytes = H * W * C * 4
    weight_bytes = 2 * 9 * C * C * 2
    scratch_bytes = Hp * Wp * C * 4
    footprint = 2 * 2 * block_bytes + 2 * weight_bytes + scratch_bytes
    vmem_limit = int(min(56 * 2**20, max(32 * 2**20, 2 * footprint)))

    flops = N * 2 * (2 * H * W * 9 * C * C)  # two 3x3 convs, 2 flops per MAC
    bytes_accessed = 2 * N * H * W * C * 4 + 2 * 9 * C * C * 2

    out_nhwc = pl.pallas_call(
        basic_block_kernel,
        out_shape=jax.ShapeDtypeStruct((N, H, W, C), x.dtype),
        grid_spec=pltpu.PrefetchScalarGridSpec(
            num_scalar_prefetch=0,
            grid=(N,),
            # TODO(synk): add an H-tile grid axis (with a 1-row halo) for large
            # images so blocks fit v7x's 64 MiB VMEM and shard across its 2 TCs.
            in_specs=[
                pl.BlockSpec(memory_space=pltpu.MemorySpace.SMEM),   # scale1
                pl.BlockSpec(memory_space=pltpu.MemorySpace.SMEM),   # scale2
                pl.BlockSpec((1, H, W, C), lambda n: (n, 0, 0, 0)),
                pl.BlockSpec((3, 3, C, C), lambda n: (0, 0, 0, 0)),
                pl.BlockSpec((3, 3, C, C), lambda n: (0, 0, 0, 0)),
            ],
            out_specs=pl.BlockSpec((1, H, W, C), lambda n: (n, 0, 0, 0)),
            scratch_shapes=[
                pltpu.VMEM((Hp, Wp, C), jnp.float32),   # shared halo buffer
            ],
        ),
        compiler_params=pltpu.CompilerParams(
            dimension_semantics=("parallel",),
            vmem_limit_bytes=vmem_limit),
        cost_estimate=pl.CostEstimate(flops=flops, transcendentals=0,
                                      bytes_accessed=bytes_accessed),
    )(scale1, scale2, x, w1, w2)

    return jnp.transpose(out_nhwc, (0, 3, 1, 2))                     # NHWC -> NCHW


def _reference(x, w1, w2, s1, s2):
    """Pure-JAX reference of the PyTorch forward (NCHW), using the same bf16
    conv-input / f32-accumulate precision as the kernel."""
    def clip_lrelu(v, s):
        sc = jnp.maximum(s, 0.0)
        v = jnp.minimum(jnp.maximum(v, -sc), sc)
        return jnp.where(v >= 0.0, v, NEG_SLOPE * v)

    def conv3x3(a, w):
        return lax.conv_general_dilated(
            a.astype(jnp.bfloat16), w.astype(jnp.bfloat16),
            window_strides=(1, 1), padding=((1, 1), (1, 1)),
            dimension_numbers=('NCHW', 'OIHW', 'NCHW'),
            preferred_element_type=jnp.float32)

    out = clip_lrelu(x, s1[0])
    out = conv3x3(out, w1)
    out = clip_lrelu(out, s2[0])
    out = conv3x3(out, w2)
    return out + x


if __name__ == "__main__":
    key = jax.random.PRNGKey(0)
    N, C, H, W = 2, 4, 16, 16          # inplanes = planes = 4, stride = 1
    planes = C
    k1, k2, k3 = jax.random.split(key, 3)

    x = jax.random.normal(k1, (N, C, H, W), jnp.float32)

    # kaiming_normal_(mode='fan_out', nonlinearity='relu'):
    #   std = sqrt(2 / (out_channels * k * k))
    std = (2.0 / (planes * 3 * 3)) ** 0.5
    w1 = jax.random.normal(k2, (planes, C, 3, 3), jnp.float32) * std
    w2 = jax.random.normal(k3, (planes, planes, 3, 3), jnp.float32) * std

    scale1 = jnp.ones((1,), jnp.float32)
    scale2 = jnp.ones((1,), jnp.float32)
    # scale3 exists in the module but is only used when downsample is not None.

    out = basic_block_forward(x, w1, w2, scale1, scale2)
    out = jax.block_until_ready(out)

    ref = _reference(x, w1, w2, scale1, scale2)
    np.testing.assert_allclose(np.asarray(out), np.asarray(ref),
                               atol=5e-3, rtol=5e-3)
    print("KERNEL_OK")
</pallas_src>

<mosaic_0001>
module attributes {stable_mosaic.version = 11 : i64} {
  func.func @basic_block_kernel(%arg0: i32, %arg1: memref<1xf32, #tpu.memory_space<smem>>, %arg2: memref<1xf32, #tpu.memory_space<smem>>, %arg3: memref<1x16x16x4xf32, #tpu.memory_space<vmem>>, %arg4: memref<3x3x4x4xbf16, #tpu.memory_space<vmem>>, %arg5: memref<3x3x4x4xbf16, #tpu.memory_space<vmem>>, %arg6: memref<1x16x16x4xf32, #tpu.memory_space<vmem>>, %arg7: memref<18x24x4xf32, #tpu.memory_space<vmem>>) attributes {dimension_semantics = [#tpu.dimension_semantics<parallel>], iteration_bounds = array<i64: 2>, scalar_prefetch = 0 : i64, scratch_operands = 1 : i64, tpu.core_type = #tpu.core_type<tc>, window_params = [{transform_indices = @transform_0, window_bounds = array<i64: 1>}, {transform_indices = @transform_1, window_bounds = array<i64: 1>}, {transform_indices = @transform_2, window_bounds = array<i64: 1, 16, 16, 4>}, {pipeline_mode = #tpu.pipeline_mode<synchronous>, transform_indices = @transform_3, window_bounds = array<i64: 3, 3, 4, 4>}, {pipeline_mode = #tpu.pipeline_mode<synchronous>, transform_indices = @transform_4, window_bounds = array<i64: 3, 3, 4, 4>}, {transform_indices = @transform_5, window_bounds = array<i64: 1, 16, 16, 4>}]} {
    %c0 = arith.constant 0 : index
    %0 = memref.load %arg1[%c0] : memref<1xf32, #tpu.memory_space<smem>>
    %cst = arith.constant 0.000000e+00 : f32
    %1 = arith.maximumf %0, %cst : f32
    %c0_0 = arith.constant 0 : index
    %2 = memref.load %arg2[%c0_0] : memref<1xf32, #tpu.memory_space<smem>>
    %cst_1 = arith.constant 0.000000e+00 : f32
    %3 = arith.maximumf %2, %cst_1 : f32
    %cst_2 = arith.constant 0.000000e+00 : f32
    %4 = vector.broadcast %cst_2 : f32 to vector<1x24x4xf32>
    %cst_3 = arith.constant 0.000000e+00 : f32
    %5 = vector.broadcast %cst_3 : f32 to vector<16x1x4xf32>
    %c0_4 = arith.constant 0 : index
    %c0_5 = arith.constant 0 : index
    %c0_6 = arith.constant 0 : index
    %6 = vector.load %arg7[%c0_4, %c0_5, %c0_6] : memref<18x24x4xf32, #tpu.memory_space<vmem>>, vector<1x24x4xf32>
    tpu.vector_store %arg7[%c0_4, %c0_5, %c0_6], %4 {strides = array<i32>} : memref<18x24x4xf32, #tpu.memory_space<vmem>>, vector<1x24x4xf32>,
    %c17 = arith.constant 17 : index
    %c0_7 = arith.constant 0 : index
    %c0_8 = arith.constant 0 : index
    %7 = vector.load %arg7[%c17, %c0_7, %c0_8] : memref<18x24x4xf32, #tpu.memory_space<vmem>>, vector<1x24x4xf32>
    tpu.vector_store %arg7[%c17, %c0_7, %c0_8], %4 {strides = array<i32>} : memref<18x24x4xf32, #tpu.memory_space<vmem>>, vector<1x24x4xf32>,
    %c1 = arith.constant 1 : index
    %c0_9 = arith.constant 0 : index
    %c0_10 = arith.constant 0 : index
    %8 = vector.load %arg7[%c1, %c0_9, %c0_10] : memref<18x24x4xf32, #tpu.memory_space<vmem>>, vector<16x1x4xf32>
    tpu.vector_store %arg7[%c1, %c0_9, %c0_10], %5 {strides = array<i32>} : memref<18x24x4xf32, #tpu.memory_space<vmem>>, vector<16x1x4xf32>,
    %c1_11 = arith.constant 1 : index
    %c17_12 = arith.constant 17 : index
    %c0_13 = arith.constant 0 : index
    %9 = vector.load %arg7[%c1_11, %c17_12, %c0_13] : memref<18x24x4xf32, #tpu.memory_space<vmem>>, vector<16x1x4xf32>
    tpu.vector_store %arg7[%c1_11, %c17_12, %c0_13], %5 {strides = array<i32>} : memref<18x24x4xf32, #tpu.memory_space<vmem>>, vector<16x1x4xf32>,
    %c0_14 = arith.constant 0 : index
    %c0_15 = arith.constant 0 : index
    %c0_16 = arith.constant 0 : index
    %c0_17 = arith.constant 0 : index
    %10 = vector.load %arg3[%c0_14, %c0_15, %c0_16, %c0_17] : memref<1x16x16x4xf32, #tpu.memory_space<vmem>>, vector<1x16x16x4xf32>
    %11 = vector.shape_cast %10 : vector<1x16x16x4xf32> to vector<16x16x4xf32>
    %cst_18 = arith.constant 0.000000e+00 : f32
    %12 = arith.subf %cst_18, %1 : f32
    %13 = vector.broadcast %12 : f32 to vector<16x16x4xf32>
    %14 = arith.maximumf %11, %13 : vector<16x16x4xf32>
    %15 = vector.broadcast %1 : f32 to vector<16x16x4xf32>
    %16 = arith.minimumf %14, %15 : vector<16x16x4xf32>
    %cst_19 = arith.constant 0.000000e+00 : f32
    %17 = vector.broadcast %cst_19 : f32 to vector<16x16x4xf32>
    %18 = arith.cmpf oge, %16, %17 : vector<16x16x4xf32>
    %cst_20 = arith.constant 0.00999999977 : f32
    %19 = vector.broadcast %cst_20 : f32 to vector<16x16x4xf32>
    %20 = arith.mulf %19, %16 : vector<16x16x4xf32>
    %21 = arith.select %18, %16, %20 : vector<16x16x4xi1>, vector<16x16x4xf32>
    %c1_21 = arith.constant 1 : index
    %c1_22 = arith.constant 1 : index
    %c0_23 = arith.constant 0 : index
    %22 = vector.load %arg7[%c1_21, %c1_22, %c0_23] : memref<18x24x4xf32, #tpu.memory_space<vmem>>, vector<16x16x4xf32>
    tpu.vector_store %arg7[%c1_21, %c1_22, %c0_23], %21 {strides = array<i32>} : memref<18x24x4xf32, #tpu.memory_space<vmem>>, vector<16x16x4xf32>,
    %cst_24 = arith.constant 0.000000e+00 : f32
    %23 = vector.broadcast %cst_24 : f32 to vector<256x4xf32>
    %c0_25 = arith.constant 0 : index
    %c0_26 = arith.constant 0 : index
    %c0_27 = arith.constant 0 : index
    %24 = vector.load %arg7[%c0_25, %c0_26, %c0_27] : memref<18x24x4xf32, #tpu.memory_space<vmem>>, vector<16x16x4xf32>
    %25 = vector.shape_cast %24 : vector<16x16x4xf32> to vector<256x4xf32>
    %26 = arith.truncf %25 : vector<256x4xf32> to vector<256x4xbf16>
    %c0_28 = arith.constant 0 : index
    %c0_29 = arith.constant 0 : index
    %c0_30 = arith.constant 0 : index
    %c0_31 = arith.constant 0 : index
    %27 = vector.load %arg4[%c0_28, %c0_29, %c0_30, %c0_31] : memref<3x3x4x4xbf16, #tpu.memory_space<vmem>>, vector<1x1x4x4xbf16>
    %28 = vector.shape_cast %27 : vector<1x1x4x4xbf16> to vector<4x4xbf16>
    %cst_32 = arith.constant dense<0.000000e+00> : vector<256x4xf32>
    %29 = tpu.matmul %26, %28, %cst_32 {dimension_numbers = #tpu.dot_dimension_numbers<[1], [0], [0], [1], [0, 0, 1, 1], [], []>} : vector<256x4xbf16>, vector<4x4xbf16>, vector<256x4xf32> -> vector<256x4xf32>
    %30 = arith.addf %23, %29 : vector<256x4xf32>
    %c0_33 = arith.constant 0 : index
    %c1_34 = arith.constant 1 : index
    %c0_35 = arith.constant 0 : index
    %31 = vector.load %arg7[%c0_33, %c1_34, %c0_35] : memref<18x24x4xf32, #tpu.memory_space<vmem>>, vector<16x16x4xf32>
    %32 = vector.shape_cast %31 : vector<16x16x4xf32> to vector<256x4xf32>
    %33 = arith.truncf %32 : vector<256x4xf32> to vector<256x4xbf16>
    %c0_36 = arith.constant 0 : index
    %c1_37 = arith.constant 1 : index
    %c0_38 = arith.constant 0 : index
    %c0_39 = arith.constant 0 : index
    %34 = vector.load %arg4[%c0_36, %c1_37, %c0_38, %c0_39] : memref<3x3x4x4xbf16, #tpu.memory_space<vmem>>, vector<1x1x4x4xbf16>
    %35 = vector.shape_cast %34 : vector<1x1x4x4xbf16> to vector<4x4xbf16>
    %cst_40 = arith.constant dense<0.000000e+00> : vector<256x4xf32>
    %36 = tpu.matmul %33, %35, %cst_40 {dimension_numbers = #tpu.dot_dimension_numbers<[1], [0], [0], [1], [0, 0, 1, 1], [], []>} : vector<256x4xbf16>, vector<4x4xbf16>, vector<256x4xf32> -> vector<256x4xf32>
    %37 = arith.addf %30, %36 : vector<256x4xf32>
    %c0_41 = arith.constant 0 : index
    %c2 = arith.constant 2 : index
    %c0_42 = arith.constant 0 : index
    %38 = vector.load %arg7[%c0_41, %c2, %c0_42] : memref<18x24x4xf32, #tpu.memory_space<vmem>>, vector<16x16x4xf32>
    %39 = vector.shape_cast %38 : vector<16x16x4xf32> to vector<256x4xf32>
    %40 = arith.truncf %39 : vector<256x4xf32> to vector<256x4xbf16>
    %c0_43 = arith.constant 0 : index
    %c2_44 = arith.constant 2 : index
    %c0_45 = arith.constant 0 : index
    %c0_46 = arith.constant 0 : index
    %41 = vector.load %arg4[%c0_43, %c2_44, %c0_45, %c0_46] : memref<3x3x4x4xbf16, #tpu.memory_space<vmem>>, vector<1x1x4x4xbf16>
    %42 = vector.shape_cast %41 : vector<1x1x4x4xbf16> to vector<4x4xbf16>
    %cst_47 = arith.constant dense<0.000000e+00> : vector<256x4xf32>
    %43 = tpu.matmul %40, %42, %cst_47 {dimension_numbers = #tpu.dot_dimension_numbers<[1], [0], [0], [1], [0, 0, 1, 1], [], []>} : vector<256x4xbf16>, vector<4x4xbf16>, vector<256x4xf32> -> vector<256x4xf32>
    %44 = arith.addf %37, %43 : vector<256x4xf32>
    %c1_48 = arith.constant 1 : index
    %c0_49 = arith.constant 0 : index
    %c0_50 = arith.constant 0 : index
    %45 = vector.load %arg7[%c1_48, %c0_49, %c0_50] : memref<18x24x4xf32, #tpu.memory_space<vmem>>, vector<16x16x4xf32>
    %46 = vector.shape_cast %45 : vector<16x16x4xf32> to vector<256x4xf32>
    %47 = arith.truncf %46 : vector<256x4xf32> to vector<256x4xbf16>
    %c1_51 = arith.constant 1 : index
    %c0_52 = arith.constant 0 : index
    %c0_53 = arith.constant 0 : index
    %c0_54 = arith.constant 0 : index
    %48 = vector.load %arg4[%c1_51, %c0_52, %c0_53, %c0_54] : memref<3x3x4x4xbf16, #tpu.memory_space<vmem>>, vector<1x1x4x4xbf16>
    %49 = vector.shape_cast %48 : vector<1x1x4x4xbf16> to vector<4x4xbf16>
    %cst_55 = arith.constant dense<0.000000e+00> : vector<256x4xf32>
    %50 = tpu.matmul %47, %49, %cst_55 {dimension_numbers = #tpu.dot_dimension_numbers<[1], [0], [0], [1], [0, 0, 1, 1], [], []>} : vector<256x4xbf16>, vector<4x4xbf16>, vector<256x4xf32> -> vector<256x4xf32>
    %51 = arith.addf %44, %50 : vector<256x4xf32>
    %c1_56 = arith.constant 1 : index
    %c1_57 = arith.constant 1 : index
    %c0_58 = arith.constant 0 : index
    %52 = vector.load %arg7[%c1_56, %c1_57, %c0_58] : memref<18x24x4xf32, #tpu.memory_space<vmem>>, vector<16x16x4xf32>
    %53 = vector.shape_cast %52 : vector<16x16x4xf32> to vector<256x4xf32>
    %54 = arith.truncf %53 : vector<256x4xf32> to vector<256x4xbf16>
    %c1_59 = arith.constant 1 : index
    %c1_60 = arith.constant 1 : index
    %c0_61 = arith.constant 0 : index
    %c0_62 = arith.constant 0 : index
    %55 = vector.load %arg4[%c1_59, %c1_60, %c0_61, %c0_62] : memref<3x3x4x4xbf16, #tpu.memory_space<vmem>>, vector<1x1x4x4xbf16>
    %56 = vector.shape_cast %55 : vector<1x1x4x4xbf16> to vector<4x4xbf16>
    %cst_63 = arith.constant dense<0.000000e+00> : vector<256x4xf32>
    %57 = tpu.matmul %54, %56, %cst_63 {dimension_numbers = #tpu.dot_dimension_numbers<[1], [0], [0], [1], [0, 0, 1, 1], [], []>} : vector<256x4xbf16>, vector<4x4xbf16>, vector<256x4xf32> -> vector<256x4xf32>
    %58 = arith.addf %51, %57 : vector<256x4xf32>
    %c1_64 = arith.constant 1 : index
    %c2_65 = arith.constant 2 : index
    %c0_66 = arith.constant 0 : index
    %59 = vector.load %arg7[%c1_64, %c2_65, %c0_66] : memref<18x24x4xf32, #tpu.memory_space<vmem>>, vector<16x16x4xf32>
    %60 = vector.shape_cast %59 : vector<16x16x4xf32> to vector<256x4xf32>
    %61 = arith.truncf %60 : vector<256x4xf32> to vector<256x4xbf16>
    %c1_67 = arith.constant 1 : index
    %c2_68 = arith.constant 2 : index
    %c0_69 = arith.constant 0 : index
    %c0_70 = arith.constant 0 : index
    %62 = vector.load %arg4[%c1_67, %c2_68, %c0_69, %c0_70] : memref<3x3x4x4xbf16, #tpu.memory_space<vmem>>, vector<1x1x4x4xbf16>
    %63 = vector.shape_cast %62 : vector<1x1x4x4xbf16> to vector<4x4xbf16>
    %cst_71 = arith.constant dense<0.000000e+00> : vector<256x4xf32>
    %64 = tpu.matmul %61, %63, %cst_71 {dimension_numbers = #tpu.dot_dimension_numbers<[1], [0], [0], [1], [0, 0, 1, 1], [], []>} : vector<256x4xbf16>, vector<4x4xbf16>, vector<256x4xf32> -> vector<256x4xf32>
    %65 = arith.addf %58, %64 : vector<256x4xf32>
    %c2_72 = arith.constant 2 : index
    %c0_73 = arith.constant 0 : index
    %c0_74 = arith.constant 0 : index
    %66 = vector.load %arg7[%c2_72, %c0_73, %c0_74] : memref<18x24x4xf32, #tpu.memory_space<vmem>>, vector<16x16x4xf32>
    %67 = vector.shape_cast %66 : vector<16x16x4xf32> to vector<256x4xf32>
    %68 = arith.truncf %67 : vector<256x4xf32> to vector<256x4xbf16>
    %c2_75 = arith.constant 2 : index
    %c0_76 = arith.constant 0 : index
    %c0_77 = arith.constant 0 : index
    %c0_78 = arith.constant 0 : index
    %69 = vector.load %arg4[%c2_75, %c0_76, %c0_77, %c0_78] : memref<3x3x4x4xbf16, #tpu.memory_space<vmem>>, vector<1x1x4x4xbf16>
    %70 = vector.shape_cast %69 : vector<1x1x4x4xbf16> to vector<4x4xbf16>
    %cst_79 = arith.constant dense<0.000000e+00> : vector<256x4xf32>
    %71 = tpu.matmul %68, %70, %cst_79 {dimension_numbers = #tpu.dot_dimension_numbers<[1], [0], [0], [1], [0, 0, 1, 1], [], []>} : vector<256x4xbf16>, vector<4x4xbf16>, vector<256x4xf32> -> vector<256x4xf32>
    %72 = arith.addf %65, %71 : vector<256x4xf32>
    %c2_80 = arith.constant 2 : index
    %c1_81 = arith.constant 1 : index
    %c0_82 = arith.constant 0 : index
    %73 = vector.load %arg7[%c2_80, %c1_81, %c0_82] : memref<18x24x4xf32, #tpu.memory_space<vmem>>, vector<16x16x4xf32>
    %74 = vector.shape_cast %73 : vector<16x16x4xf32> to vector<256x4xf32>
    %75 = arith.truncf %74 : vector<256x4xf32> to vector<256x4xbf16>
    %c2_83 = arith.constant 2 : index
    %c1_84 = arith.constant 1 : index
    %c0_85 = arith.constant 0 : index
    %c0_86 = arith.constant 0 : index
    %76 = vector.load %arg4[%c2_83, %c1_84, %c0_85, %c0_86] : memref<3x3x4x4xbf16, #tpu.memory_space<vmem>>, vector<1x1x4x4xbf16>
    %77 = vector.shape_cast %76 : vector<1x1x4x4xbf16> to vector<4x4xbf16>
    %cst_87 = arith.constant dense<0.000000e+00> : vector<256x4xf32>
    %78 = tpu.matmul %75, %77, %cst_87 {dimension_numbers = #tpu.dot_dimension_numbers<[1], [0], [0], [1], [0, 0, 1, 1], [], []>} : vector<256x4xbf16>, vector<4x4xbf16>, vector<256x4xf32> -> vector<256x4xf32>
    %79 = arith.addf %72, %78 : vector<256x4xf32>
    %c2_88 = arith.constant 2 : index
    %c2_89 = arith.constant 2 : index
    %c0_90 = arith.constant 0 : index
    %80 = vector.load %arg7[%c2_88, %c2_89, %c0_90] : memref<18x24x4xf32, #tpu.memory_space<vmem>>, vector<16x16x4xf32>
    %81 = vector.shape_cast %80 : vector<16x16x4xf32> to vector<256x4xf32>
    %82 = arith.truncf %81 : vector<256x4xf32> to vector<256x4xbf16>
    %c2_91 = arith.constant 2 : index
    %c2_92 = arith.constant 2 : index
    %c0_93 = arith.constant 0 : index
    %c0_94 = arith.constant 0 : index
    %83 = vector.load %arg4[%c2_91, %c2_92, %c0_93, %c0_94] : memref<3x3x4x4xbf16, #tpu.memory_space<vmem>>, vector<1x1x4x4xbf16>
    %84 = vector.shape_cast %83 : vector<1x1x4x4xbf16> to vector<4x4xbf16>
    %cst_95 = arith.constant dense<0.000000e+00> : vector<256x4xf32>
    %85 = tpu.matmul %82, %84, %cst_95 {dimension_numbers = #tpu.dot_dimension_numbers<[1], [0], [0], [1], [0, 0, 1, 1], [], []>} : vector<256x4xbf16>, vector<4x4xbf16>, vector<256x4xf32> -> vector<256x4xf32>
    %86 = arith.addf %79, %85 : vector<256x4xf32>
    %cst_96 = arith.constant 0.000000e+00 : f32
    %87 = arith.subf %cst_96, %3 : f32
    %88 = vector.broadcast %87 : f32 to vector<256x4xf32>
    %89 = arith.maximumf %86, %88 : vector<256x4xf32>
    %90 = vector.broadcast %3 : f32 to vector<256x4xf32>
    %91 = arith.minimumf %89, %90 : vector<256x4xf32>
    %cst_97 = arith.constant 0.000000e+00 : f32
    %92 = vector.broadcast %cst_97 : f32 to vector<256x4xf32>
    %93 = arith.cmpf oge, %91, %92 : vector<256x4xf32>
    %cst_98 = arith.constant 0.00999999977 : f32
    %94 = vector.broadcast %cst_98 : f32 to vector<256x4xf32>
    %95 = arith.mulf %94, %91 : vector<256x4xf32>
    %96 = arith.select %93, %91, %95 : vector<256x4xi1>, vector<256x4xf32>
    %97 = vector.shape_cast %96 : vector<256x4xf32> to vector<16x16x4xf32>
    %c1_99 = arith.constant 1 : index
    %c1_100 = arith.constant 1 : index
    %c0_101 = arith.constant 0 : index
    %98 = vector.load %arg7[%c1_99, %c1_100, %c0_101] : memref<18x24x4xf32, #tpu.memory_space<vmem>>, vector<16x16x4xf32>
    tpu.vector_store %arg7[%c1_99, %c1_100, %c0_101], %97 {strides = array<i32>} : memref<18x24x4xf32, #tpu.memory_space<vmem>>, vector<16x16x4xf32>,
    %cst_102 = arith.constant 0.000000e+00 : f32
    %99 = vector.broadcast %cst_102 : f32 to vector<256x4xf32>
    %c0_103 = arith.constant 0 : index
    %c0_104 = arith.constant 0 : index
    %c0_105 = arith.constant 0 : index
    %100 = vector.load %arg7[%c0_103, %c0_104, %c0_105] : memref<18x24x4xf32, #tpu.memory_space<vmem>>, vector<16x16x4xf32>
    %101 = vector.shape_cast %100 : vector<16x16x4xf32> to vector<256x4xf32>
    %102 = arith.truncf %101 : vector<256x4xf32> to vector<256x4xbf16>
    %c0_106 = arith.constant 0 : index
    %c0_107 = arith.constant 0 : index
    %c0_108 = arith.constant 0 : index
    %c0_109 = arith.constant 0 : index
    %103 = vector.load %arg5[%c0_106, %c0_107, %c0_108, %c0_109] : memref<3x3x4x4xbf16, #tpu.memory_space<vmem>>, vector<1x1x4x4xbf16>
    %104 = vector.shape_cast %103 : vector<1x1x4x4xbf16> to vector<4x4xbf16>
    %cst_110 = arith.constant dense<0.000000e+00> : vector<256x4xf32>
    %105 = tpu.matmul %102, %104, %cst_110 {dimension_numbers = #tpu.dot_dimension_numbers<[1], [0], [0], [1], [0, 0, 1, 1], [], []>} : vector<256x4xbf16>, vector<4x4xbf16>, vector<256x4xf32> -> vector<256x4xf32>
    %106 = arith.addf %99, %105 : vector<256x4xf32>
    %c0_111 = arith.constant 0 : index
    %c1_112 = arith.constant 1 : index
    %c0_113 = arith.constant 0 : index
    %107 = vector.load %arg7[%c0_111, %c1_112, %c0_113] : memref<18x24x4xf32, #tpu.memory_space<vmem>>, vector<16x16x4xf32>
    %108 = vector.shape_cast %107 : vector<16x16x4xf32> to vector<256x4xf32>
    %109 = arith.truncf %108 : vector<256x4xf32> to vector<256x4xbf16>
    %c0_114 = arith.constant 0 : index
    %c1_115 = arith.constant 1 : index
    %c0_116 = arith.constant 0 : index
    %c0_117 = arith.constant 0 : index
    %110 = vector.load %arg5[%c0_114, %c1_115, %c0_116, %c0_117] : memref<3x3x4x4xbf16, #tpu.memory_space<vmem>>, vector<1x1x4x4xbf16>
    %111 = vector.shape_cast %110 : vector<1x1x4x4xbf16> to vector<4x4xbf16>
    %cst_118 = arith.constant dense<0.000000e+00> : vector<256x4xf32>
    %112 = tpu.matmul %109, %111, %cst_118 {dimension_numbers = #tpu.dot_dimension_numbers<[1], [0], [0], [1], [0, 0, 1, 1], [], []>} : vector<256x4xbf16>, vector<4x4xbf16>, vector<256x4xf32> -> vector<256x4xf32>
    %113 = arith.addf %106, %112 : vector<256x4xf32>
    %c0_119 = arith.constant 0 : index
    %c2_120 = arith.constant 2 : index
    %c0_121 = arith.constant 0 : index
    %114 = vector.load %arg7[%c0_119, %c2_120, %c0_121] : memref<18x24x4xf32, #tpu.memory_space<vmem>>, vector<16x16x4xf32>
    %115 = vector.shape_cast %114 : vector<16x16x4xf32> to vector<256x4xf32>
    %116 = arith.truncf %115 : vector<256x4xf32> to vector<256x4xbf16>
    %c0_122 = arith.constant 0 : index
    %c2_123 = arith.constant 2 : index
    %c0_124 = arith.constant 0 : index
    %c0_125 = arith.constant 0 : index
    %117 = vector.load %arg5[%c0_122, %c2_123, %c0_124, %c0_125] : memref<3x3x4x4xbf16, #tpu.memory_space<vmem>>, vector<1x1x4x4xbf16>
    %118 = vector.shape_cast %117 : vector<1x1x4x4xbf16> to vector<4x4xbf16>
    %cst_126 = arith.constant dense<0.000000e+00> : vector<256x4xf32>
    %119 = tpu.matmul %116, %118, %cst_126 {dimension_numbers = #tpu.dot_dimension_numbers<[1], [0], [0], [1], [0, 0, 1, 1], [], []>} : vector<256x4xbf16>, vector<4x4xbf16>, vector<256x4xf32> -> vector<256x4xf32>
    %120 = arith.addf %113, %119 : vector<256x4xf32>
    %c1_127 = arith.constant 1 : index
    %c0_128 = arith.constant 0 : index
    %c0_129 = arith.constant 0 : index
    %121 = vector.load %arg7[%c1_127, %c0_128, %c0_129] : memref<18x24x4xf32, #tpu.memory_space<vmem>>, vector<16x16x4xf32>
    %122 = vector.shape_cast %121 : vector<16x16x4xf32> to vector<256x4xf32>
    %123 = arith.truncf %122 : vector<256x4xf32> to vector<256x4xbf16>
    %c1_130 = arith.constant 1 : index
    %c0_131 = arith.constant 0 : index
    %c0_132 = arith.constant 0 : index
    %c0_133 = arith.constant 0 : index
    %124 = vector.load %arg5[%c1_130, %c0_131, %c0_132, %c0_133] : memref<3x3x4x4xbf16, #tpu.memory_space<vmem>>, vector<1x1x4x4xbf16>
    %125 = vector.shape_cast %124 : vector<1x1x4x4xbf16> to vector<4x4xbf16>
    %cst_134 = arith.constant dense<0.000000e+00> : vector<256x4xf32>
    %126 = tpu.matmul %123, %125, %cst_134 {dimension_numbers = #tpu.dot_dimension_numbers<[1], [0], [0], [1], [0, 0, 1, 1], [], []>} : vector<256x4xbf16>, vector<4x4xbf16>, vector<256x4xf32> -> vector<256x4xf32>
    %127 = arith.addf %120, %126 : vector<256x4xf32>
    %c1_135 = arith.constant 1 : index
    %c1_136 = arith.constant 1 : index
    %c0_137 = arith.constant 0 : index
    %128 = vector.load %arg7[%c1_135, %c1_136, %c0_137] : memref<18x24x4xf32, #tpu.memory_space<vmem>>, vector<16x16x4xf32>
    %129 = vector.shape_cast %128 : vector<16x16x4xf32> to vector<256x4xf32>
    %130 = arith.truncf %129 : vector<256x4xf32> to vector<256x4xbf16>
    %c1_138 = arith.constant 1 : index
    %c1_139 = arith.constant 1 : index
    %c0_140 = arith.constant 0 : index
    %c0_141 = arith.constant 0 : index
    %131 = vector.load %arg5[%c1_138, %c1_139, %c0_140, %c0_141] : memref<3x3x4x4xbf16, #tpu.memory_space<vmem>>, vector<1x1x4x4xbf16>
    %132 = vector.shape_cast %131 : vector<1x1x4x4xbf16> to vector<4x4xbf16>
    %cst_142 = arith.constant dense<0.000000e+00> : vector<256x4xf32>
    %133 = tpu.matmul %130, %132, %cst_142 {dimension_numbers = #tpu.dot_dimension_numbers<[1], [0], [0], [1], [0, 0, 1, 1], [], []>} : vector<256x4xbf16>, vector<4x4xbf16>, vector<256x4xf32> -> vector<256x4xf32>
    %134 = arith.addf %127, %133 : vector<256x4xf32>
    %c1_143 = arith.constant 1 : index
    %c2_144 = arith.constant 2 : index
    %c0_145 = arith.constant 0 : index
    %135 = vector.load %arg7[%c1_143, %c2_144, %c0_145] : memref<18x24x4xf32, #tpu.memory_space<vmem>>, vector<16x16x4xf32>
    %136 = vector.shape_cast %135 : vector<16x16x4xf32> to vector<256x4xf32>
    %137 = arith.truncf %136 : vector<256x4xf32> to vector<256x4xbf16>
    %c1_146 = arith.constant 1 : index
    %c2_147 = arith.constant 2 : index
    %c0_148 = arith.constant 0 : index
    %c0_149 = arith.constant 0 : index
    %138 = vector.load %arg5[%c1_146, %c2_147, %c0_148, %c0_149] : memref<3x3x4x4xbf16, #tpu.memory_space<vmem>>, vector<1x1x4x4xbf16>
    %139 = vector.shape_cast %138 : vector<1x1x4x4xbf16> to vector<4x4xbf16>
    %cst_150 = arith.constant dense<0.000000e+00> : vector<256x4xf32>
    %140 = tpu.matmul %137, %139, %cst_150 {dimension_numbers = #tpu.dot_dimension_numbers<[1], [0], [0], [1], [0, 0, 1, 1], [], []>} : vector<256x4xbf16>, vector<4x4xbf16>, vector<256x4xf32> -> vector<256x4xf32>
    %141 = arith.addf %134, %140 : vector<256x4xf32>
    %c2_151 = arith.constant 2 : index
    %c0_152 = arith.constant 0 : index
    %c0_153 = arith.constant 0 : index
    %142 = vector.load %arg7[%c2_151, %c0_152, %c0_153] : memref<18x24x4xf32, #tpu.memory_space<vmem>>, vector<16x16x4xf32>
    %143 = vector.shape_cast %142 : vector<16x16x4xf32> to vector<256x4xf32>
    %144 = arith.truncf %143 : vector<256x4xf32> to vector<256x4xbf16>
    %c2_154 = arith.constant 2 : index
    %c0_155 = arith.constant 0 : index
    %c0_156 = arith.constant 0 : index
    %c0_157 = arith.constant 0 : index
    %145 = vector.load %arg5[%c2_154, %c0_155, %c0_156, %c0_157] : memref<3x3x4x4xbf16, #tpu.memory_space<vmem>>, vector<1x1x4x4xbf16>
    %146 = vector.shape_cast %145 : vector<1x1x4x4xbf16> to vector<4x4xbf16>
    %cst_158 = arith.constant dense<0.000000e+00> : vector<256x4xf32>
    %147 = tpu.matmul %144, %146, %cst_158 {dimension_numbers = #tpu.dot_dimension_numbers<[1], [0], [0], [1], [0, 0, 1, 1], [], []>} : vector<256x4xbf16>, vector<4x4xbf16>, vector<256x4xf32> -> vector<256x4xf32>
    %148 = arith.addf %141, %147 : vector<256x4xf32>
    %c2_159 = arith.constant 2 : index
    %c1_160 = arith.constant 1 : index
    %c0_161 = arith.constant 0 : index
    %149 = vector.load %arg7[%c2_159, %c1_160, %c0_161] : memref<18x24x4xf32, #tpu.memory_space<vmem>>, vector<16x16x4xf32>
    %150 = vector.shape_cast %149 : vector<16x16x4xf32> to vector<256x4xf32>
    %151 = arith.truncf %150 : vector<256x4xf32> to vector<256x4xbf16>
    %c2_162 = arith.constant 2 : index
    %c1_163 = arith.constant 1 : index
    %c0_164 = arith.constant 0 : index
    %c0_165 = arith.constant 0 : index
    %152 = vector.load %arg5[%c2_162, %c1_163, %c0_164, %c0_165] : memref<3x3x4x4xbf16, #tpu.memory_space<vmem>>, vector<1x1x4x4xbf16>
    %153 = vector.shape_cast %152 : vector<1x1x4x4xbf16> to vector<4x4xbf16>
    %cst_166 = arith.constant dense<0.000000e+00> : vector<256x4xf32>
    %154 = tpu.matmul %151, %153, %cst_166 {dimension_numbers = #tpu.dot_dimension_numbers<[1], [0], [0], [1], [0, 0, 1, 1], [], []>} : vector<256x4xbf16>, vector<4x4xbf16>, vector<256x4xf32> -> vector<256x4xf32>
    %155 = arith.addf %148, %154 : vector<256x4xf32>
    %c2_167 = arith.constant 2 : index
    %c2_168 = arith.constant 2 : index
    %c0_169 = arith.constant 0 : index
    %156 = vector.load %arg7[%c2_167, %c2_168, %c0_169] : memref<18x24x4xf32, #tpu.memory_space<vmem>>, vector<16x16x4xf32>
    %157 = vector.shape_cast %156 : vector<16x16x4xf32> to vector<256x4xf32>
    %158 = arith.truncf %157 : vector<256x4xf32> to vector<256x4xbf16>
    %c2_170 = arith.constant 2 : index
    %c2_171 = arith.constant 2 : index
    %c0_172 = arith.constant 0 : index
    %c0_173 = arith.constant 0 : index
    %159 = vector.load %arg5[%c2_170, %c2_171, %c0_172, %c0_173] : memref<3x3x4x4xbf16, #tpu.memory_space<vmem>>, vector<1x1x4x4xbf16>
    %160 = vector.shape_cast %159 : vector<1x1x4x4xbf16> to vector<4x4xbf16>
    %cst_174 = arith.constant dense<0.000000e+00> : vector<256x4xf32>
    %161 = tpu.matmul %158, %160, %cst_174 {dimension_numbers = #tpu.dot_dimension_numbers<[1], [0], [0], [1], [0, 0, 1, 1], [], []>} : vector<256x4xbf16>, vector<4x4xbf16>, vector<256x4xf32> -> vector<256x4xf32>
    %162 = arith.addf %155, %161 : vector<256x4xf32>
    %c0_175 = arith.constant 0 : index
    %c0_176 = arith.constant 0 : index
    %c0_177 = arith.constant 0 : index
    %c0_178 = arith.constant 0 : index
    %163 = vector.load %arg3[%c0_175, %c0_176, %c0_177, %c0_178] : memref<1x16x16x4xf32, #tpu.memory_space<vmem>>, vector<1x16x16x4xf32>
    %164 = vector.shape_cast %163 : vector<1x16x16x4xf32> to vector<16x16x4xf32>
    %165 = vector.shape_cast %162 : vector<256x4xf32> to vector<16x16x4xf32>
    %166 = arith.addf %165, %164 : vector<16x16x4xf32>
    %c0_179 = arith.constant 0 : index
    %c0_180 = arith.constant 0 : index
    %c0_181 = arith.constant 0 : index
    %c0_182 = arith.constant 0 : index
    %167 = vector.load %arg6[%c0_179, %c0_180, %c0_181, %c0_182] : memref<1x16x16x4xf32, #tpu.memory_space<vmem>>, vector<1x16x16x4xf32>
    %168 = vector.shape_cast %167 : vector<1x16x16x4xf32> to vector<16x16x4xf32>
    %169 = vector.shape_cast %166 : vector<16x16x4xf32> to vector<1x16x16x4xf32>
    tpu.vector_store %arg6[%c0_179, %c0_180, %c0_181, %c0_182], %169 {strides = array<i32>} : memref<1x16x16x4xf32, #tpu.memory_space<vmem>>, vector<1x16x16x4xf32>,
    return
  }
  func.func @transform_0(%arg0: i32) -> i32 {
    %c0_i32 = arith.constant 0 : i32
    %c0_i32_0 = arith.constant 0 : i32
    return %c0_i32 : i32
  }
  func.func @transform_1(%arg0: i32) -> i32 {
    %c0_i32 = arith.constant 0 : i32
    %c0_i32_0 = arith.constant 0 : i32
    return %c0_i32 : i32
  }
  func.func @transform_2(%arg0: i32) -> (i32, i32, i32, i32) {
    %c0_i32 = arith.constant 0 : i32
    %c0_i32_0 = arith.constant 0 : i32
    %c0_i32_1 = arith.constant 0 : i32
    %c0_i32_2 = arith.constant 0 : i32
    return %arg0, %c0_i32, %c0_i32_0, %c0_i32_1 : i32, i32, i32, i32
  }
  func.func @transform_3(%arg0: i32) -> (i32, i32, i32, i32) {
    %c0_i32 = arith.constant 0 : i32
    %c0_i32_0 = arith.constant 0 : i32
    %c0_i32_1 = arith.constant 0 : i32
    %c0_i32_2 = arith.constant 0 : i32
    %c0_i32_3 = arith.constant 0 : i32
    return %c0_i32, %c0_i32_0, %c0_i32_1, %c0_i32_2 : i32, i32, i32, i32
  }
  func.func @transform_4(%arg0: i32) -> (i32, i32, i32, i32) {
    %c0_i32 = arith.constant 0 : i32
    %c0_i32_0 = arith.constant 0 : i32
    %c0_i32_1 = arith.constant 0 : i32
    %c0_i32_2 = arith.constant 0 : i32
    %c0_i32_3 = arith.constant 0 : i32
    return %c0_i32, %c0_i32_0, %c0_i32_1, %c0_i32_2 : i32, i32, i32, i32
  }
  func.func @transform_5(%arg0: i32) -> (i32, i32, i32, i32) {
    %c0_i32 = arith.constant 0 : i32
    %c0_i32_0 = arith.constant 0 : i32
    %c0_i32_1 = arith.constant 0 : i32
    %c0_i32_2 = arith.constant 0 : i32
    return %arg0, %c0_i32, %c0_i32_0, %c0_i32_1 : i32, i32, i32, i32
  }
}

</mosaic_0001>

<llo_original>
// kernel: tpu_custom_call.1
$region0: #{tpu_custom_call.1}
  #allocation0 [shape = 'u32[]', space=smem, size = 0x4, offset = 0x4, fixed_abs, tag = 'smem constant byte address 0x4 - core index']
  #allocation1 [shape = 'u32[144,128]{1,0:T(1,128)}', space=vmem, size = 0x12000, scoped, tag = 'internal scratch']
  #allocation2 [shape = 'f32[18,24,4]{2,1,0:T(8,128)}', space=vmem, size = 0x36000, scoped, tag = 'scratch operand']
  #allocation3 [shape = 'f32[1]{0:T(128)S(6)}', space=smem, size = 0x200, scoped, tag = 'scoped memory for tpu_custom_call.1']
  #allocation4 [shape = 'f32[1]{0:T(128)S(6)}', space=smem, size = 0x200, scoped, tag = 'scoped memory for tpu_custom_call.1']
  %s0 = inlined_call_operand.<no memory space> [shape: f32[1], index: 0, kind: input, shape index: {}]
  %s1 = inlined_call_operand.<no memory space> [shape: f32[1], index: 1, kind: input, shape index: {}]
  %s2 = inlined_call_operand.vmem [shape: f32[2,16,16,4], index: 2, kind: input, shape index: {}]
  %s3 = inlined_call_operand.vmem [shape: bf16[3,3,4,4], index: 3, kind: input, shape index: {}]
  %s4 = inlined_call_operand.vmem [shape: bf16[3,3,4,4], index: 4, kind: input, shape index: {}]
  %s5 = inlined_call_operand.vmem [shape: f32[2,16,16,4], index: 5, kind: output, shape index: {}]
  %s6 = sld [smem:[#allocation0]]
  $region53: #{tpu_custom_call.1} parent=0
    _
  %s8 = ssub.s32 1, %s6
  %s9 = scalar_select 0, %s8, %s6
  %10 = sst [smem:[#allocation3]] %s0
  %11 = sst [smem:[#allocation4]] %s1
  loop: start=0, step=1, limit=4
  $region2: #{tpu_custom_call.1} parent=0 // loop_pre_header
    _
  $region3: #{tpu_custom_call.1} parent=0 // loop_header
    %s13 = sphi 0, %s17
    %p14 = scmp.ge.s32.totalorder %s13, 4
    %s21 = sphi 0, %s21
    %s23 = sphi 0, %s21
    %s24 = sphi 0, %s23
    %s38 = sphi 0, %s24
    %s42 = sphi 0, %s42
    %s44 = sphi 0, %s42
    %s45 = sphi 0, %s44
    %s59 = sphi 0, %s45
    %s65 = sphi 0, %s67
    %s68 = sphi 0, %s65
    %s69 = sphi 0, %s68
    %s85 = sphi 0, %s69
    %s89 = sphi 0, %s89
    %s91 = sphi 0, %s89
    %s92 = sphi 0, %s91
    %s106 = sphi 0, %s92
    %s110 = sphi 0, %s110
    %s112 = sphi 0, %s110
    %s113 = sphi 0, %s112
    %s127 = sphi 0, %s113
    %s133 = sphi 0, %s135
    %s136 = sphi 0, %s133
    %s137 = sphi 0, %s136
    %s153 = sphi 0, %s137
  $region4: #{tpu_custom_call.1} parent=0 // loop_header_branch
    %16 = sbr.rel (%p14) target = $region8
  $region5: #{tpu_custom_call.1} parent=0 // loop_body
    %s18 = ssub.s32 %s13, 1
    %s19 = ssub.s32 %s13, 2
    %s20 = sadd.s32 %s13, 1
    %s22 = sadd.s32 %s21, 1
    %p25 = scmp.eq.s32.totalorder %s13, 1
    %p26 = scmp.ne.s32.totalorder %s21, %s23
    %p27 = scmp.eq.s32.totalorder %s13, 0
    %p28 = por %p26, %p27
    %p29 = scmp.ne.s32.totalorder %s21, %s23
    %p30 = scmp.eq.s32.totalorder %s18, 1
    %p31 = por %p29, %p30
    %p32 = scmp.ne.s32.totalorder %s23, %s24
    %p33 = scmp.eq.s32.totalorder %s18, 0
    %p34 = por %p32, %p33
    %p35 = scmp.ne.s32.totalorder %s23, %s24
    %p36 = scmp.eq.s32.totalorder %s19, 1
    %p37 = por %p35, %p36
    %p39 = scmp.ne.s32.totalorder %s24, %s38
    %p40 = scmp.eq.s32.totalorder %s19, 0
    %p41 = por %p39, %p40
    %s43 = sadd.s32 %s42, 1
    %p46 = scmp.eq.s32.totalorder %s13, 1
    %p47 = scmp.ne.s32.totalorder %s42, %s44
    %p48 = scmp.eq.s32.totalorder %s13, 0
    %p49 = por %p47, %p48
    %p50 = scmp.ne.s32.totalorder %s42, %s44
    %p51 = scmp.eq.s32.totalorder %s18, 1
    %p52 = por %p50, %p51
    %p53 = scmp.ne.s32.totalorder %s44, %s45
    %p54 = scmp.eq.s32.totalorder %s18, 0
    %p55 = por %p53, %p54
    %p56 = scmp.ne.s32.totalorder %s44, %s45
    %p57 = scmp.eq.s32.totalorder %s19, 1
    %p58 = por %p56, %p57
    %p60 = scmp.ne.s32.totalorder %s45, %s59
    %p61 = scmp.eq.s32.totalorder %s19, 0
    %p62 = por %p60, %p61
    %s63 = ssub.s32 %s13, %s20
    %p64 = scmp.eq.s32.totalorder %s63, 0
    %s66 = sadd.s32 %s65, 1
    %s67 = scalar_select %p64, %s65, %s66
    %p70 = pneg %p64
    %p71 = scmp.eq.s32.totalorder %s13, 1
    %p72 = por %p70, %p71
    %p73 = scmp.ne.s32.totalorder %s65, %s68
    %p74 = scmp.eq.s32.totalorder %s13, 0
    %p75 = por %p73, %p74
    %p76 = scmp.ne.s32.totalorder %s65, %s68
    %p77 = scmp.eq.s32.totalorder %s18, 1
    %p78 = por %p76, %p77
    %p79 = scmp.ne.s32.totalorder %s68, %s69
    %p80 = scmp.eq.s32.totalorder %s18, 0
    %p81 = por %p79, %p80
    %p82 = scmp.ne.s32.totalorder %s68, %s69
    %p83 = scmp.eq.s32.totalorder %s19, 1
    %p84 = por %p82, %p83
    %p86 = scmp.ne.s32.totalorder %s69, %s85
    %p87 = scmp.eq.s32.totalorder %s19, 0
    %p88 = por %p86, %p87
    %s90 = sadd.s32 %s89, 1
    %p93 = scmp.eq.s32.totalorder %s13, 1
    %p94 = scmp.ne.s32.totalorder %s89, %s91
    %p95 = scmp.eq.s32.totalorder %s13, 0
    %p96 = por %p94, %p95
    %p97 = scmp.ne.s32.totalorder %s89, %s91
    %p98 = scmp.eq.s32.totalorder %s18, 1
    %p99 = por %p97, %p98
    %p100 = scmp.ne.s32.totalorder %s91, %s92
    %p101 = scmp.eq.s32.totalorder %s18, 0
    %p102 = por %p100, %p101
    %p103 = scmp.ne.s32.totalorder %s91, %s92
    %p104 = scmp.eq.s32.totalorder %s19, 1
    %p105 = por %p103, %p104
    %p107 = scmp.ne.s32.totalorder %s92, %s106
    %p108 = scmp.eq.s32.totalorder %s19, 0
    %p109 = por %p107, %p108
    %s111 = sadd.s32 %s110, 1
    %p114 = scmp.eq.s32.totalorder %s13, 1
    %p115 = scmp.ne.s32.totalorder %s110, %s112
    %p116 = scmp.eq.s32.totalorder %s13, 0
    %p117 = por %p115, %p116
    %p118 = scmp.ne.s32.totalorder %s110, %s112
    %p119 = scmp.eq.s32.totalorder %s18, 1
    %p120 = por %p118, %p119
    %p121 = scmp.ne.s32.totalorder %s112, %s113
    %p122 = scmp.eq.s32.totalorder %s18, 0
    %p123 = por %p121, %p122
    %p124 = scmp.ne.s32.totalorder %s112, %s113
    %p125 = scmp.eq.s32.totalorder %s19, 1
    %p126 = por %p124, %p125
    %p128 = scmp.ne.s32.totalorder %s113, %s127
    %p129 = scmp.eq.s32.totalorder %s19, 0
    %p130 = por %p128, %p129
    %s131 = ssub.s32 %s13, %s20
    %p132 = scmp.eq.s32.totalorder %s131, 0
    %s134 = sadd.s32 %s133, 1
    %s135 = scalar_select %p132, %s133, %s134
    %p138 = pneg %p132
    %p139 = scmp.eq.s32.totalorder %s13, 1
    %p140 = por %p138, %p139
    %p141 = scmp.ne.s32.totalorder %s133, %s136
    %p142 = scmp.eq.s32.totalorder %s13, 0
    %p143 = por %p141, %p142
    %p144 = scmp.ne.s32.totalorder %s133, %s136
    %p145 = scmp.eq.s32.totalorder %s18, 1
    %p146 = por %p144, %p145
    %p147 = scmp.ne.s32.totalorder %s136, %s137
    %p148 = scmp.eq.s32.totalorder %s18, 0
    %p149 = por %p147, %p148
    %p150 = scmp.ne.s32.totalorder %s136, %s137
    %p151 = scmp.eq.s32.totalorder %s19, 1
    %p152 = por %p150, %p151
    %p154 = scmp.ne.s32.totalorder %s137, %s153
    %p155 = scmp.eq.s32.totalorder %s19, 0
    %p156 = por %p154, %p155
    %p157 = scmp.le.s32.totalorder 1, %s13
    %p158 = scmp.lt.s32.totalorder %s13, 3
    %p159 = pnand %p157, %p158
    %p160 = pneg %p159
    // Predicated region
    $region9: #{tpu_custom_call.1} parent=5 // pred_check
      _
    $region10: #{tpu_custom_call.1} parent=5 // pred_check_branch
      %162 = sbr.rel (%p159) target = $region12
    $region11: #{tpu_custom_call.1} parent=5 // pred_region
      %s163 = ssub.s32 %s13, 1
      // Predicated region
      $region13: #{tpu_custom_call.1} parent=11 // pred_check
        %p164 = pneg %p34
      $region14: #{tpu_custom_call.1} parent=11 // pred_check_branch
        %166 = sbr.rel (%p164) target = $region16
      $region15: #{tpu_custom_call.1} parent=11 // pred_region
        _
      $region16: #{tpu_custom_call.1} parent=11 // pred_fallthru
        _
      // Predicated region
      $region17: #{tpu_custom_call.1} parent=11 // pred_check
        %p167 = pneg %p55
      $region18: #{tpu_custom_call.1} parent=11 // pred_check_branch
        %169 = sbr.rel (%p167) target = $region20
      $region19: #{tpu_custom_call.1} parent=11 // pred_region
        _
      $region20: #{tpu_custom_call.1} parent=11 // pred_fallthru
        _
      // Predicated region
      $region21: #{tpu_custom_call.1} parent=11 // pred_check
        %p170 = pneg %p102
      $region22: #{tpu_custom_call.1} parent=11 // pred_check_branch
        %172 = sbr.rel (%p170) target = $region24
      $region23: #{tpu_custom_call.1} parent=11 // pred_region
        _
      $region24: #{tpu_custom_call.1} parent=11 // pred_fallthru
        _
      // Predicated region
      $region25: #{tpu_custom_call.1} parent=11 // pred_check
        %p173 = pneg %p123
      $region26: #{tpu_custom_call.1} parent=11 // pred_check_branch
        %175 = sbr.rel (%p173) target = $region28
      $region27: #{tpu_custom_call.1} parent=11 // pred_region
        _
      $region28: #{tpu_custom_call.1} parent=11 // pred_fallthru
        _
    $region12: #{tpu_custom_call.1} parent=5 // pred_fallthru
      _
    %p176 = scmp.lt.s32.totalorder %s13, 2
    // Predicated region
    $region29: #{tpu_custom_call.1} parent=5 // pred_check
      %p177 = pneg %p176
    $region30: #{tpu_custom_call.1} parent=5 // pred_check_branch
      %179 = sbr.rel (%p177) target = $region32
    $region31: #{tpu_custom_call.1} parent=5 // pred_region
      // Predicated region
      $region33: #{tpu_custom_call.1} parent=31 // pred_check
        %p180 = pneg %p75
      $region34: #{tpu_custom_call.1} parent=31 // pred_check_branch
        %182 = sbr.rel (%p180) target = $region36
      $region35: #{tpu_custom_call.1} parent=31 // pred_region
        %p183 = scmp.lt.s32.totalorder %s13, 1
        %s184 = scalar_select %p183, %s13, 1
        %s185 = smul.addr %s184, 32
        %s186 = smul.addr %s185, 8
        %s187 = scalar_lea.vmem %s2, %s186
      $region36: #{tpu_custom_call.1} parent=31 // pred_fallthru
        _
    $region32: #{tpu_custom_call.1} parent=5 // pred_fallthru
      _
    %p188 = scmp.le.s32.totalorder 1, %s13
    %p189 = scmp.lt.s32.totalorder %s13, 3
    %p190 = pnand %p188, %p189
    %p191 = pneg %p190
    // Predicated region
    $region37: #{tpu_custom_call.1} parent=5 // pred_check
      _
    $region38: #{tpu_custom_call.1} parent=5 // pred_check_branch
      %193 = sbr.rel (%p190) target = $region40
    $region39: #{tpu_custom_call.1} parent=5 // pred_region
      %s194 = ssub.s32 %s13, 1
      %p195 = pneg %p34
      %p196 = pneg %p31
      %p197 = pneg %p55
      %p198 = pneg %p52
      %p199 = scmp.lt.s32.totalorder %s18, 1
      %s200 = scalar_select %p199, %s18, 1
      %s201 = smul.addr %s200, 32
      %s202 = smul.addr %s201, 8
      %s203 = scalar_lea.vmem %s2, %s202
      %p204 = pneg %p81
      %p205 = pneg %p78
      %p206 = pneg %p102
      %p207 = pneg %p99
      %p208 = pneg %p123
      %p209 = pneg %p120
      %p210 = pneg %p149
      %p211 = pneg %p146
      %p212 = scmp.lt.s32.totalorder %s18, 1
      %s213 = scalar_select %p212, %s18, 1
      %s214 = smul.addr %s213, 32
      %s215 = smul.addr %s214, 8
      %s216 = scalar_lea.vmem %s5, %s215
      %p217 = scmp.lt.s32.totalorder %s18, 1
      %s218 = scalar_select %p217, %s18, 1
      %s219 = smul.addr %s218, 32
      %s220 = smul.addr %s219, 8
      %s221 = scalar_lea.vmem %s2, %s220
      %p222 = scmp.lt.s32.totalorder %s18, 1
      %s223 = scalar_select %p222, %s18, 1
      %s224 = smul.addr %s223, 32
      %s225 = smul.addr %s224, 8
      %s226 = scalar_lea.vmem %s5, %s225
      %s228 = sld [smem:[#allocation3]]
      %s229 = smax.f32 %s228, 0.0
      %s230 = sld [smem:[#allocation4]]
      %s231 = smax.f32 %s230, 0.0
      %vm232 = vcmask 31744
      %233 = vst.msk [vmem:[#allocation2] sm:$0xff] %vm232, 0.0
      %234 = vst.msk [vmem:[#allocation2 + $0x8] sm:$0xff] %vm232, 0.0
      %235 = vst.msk [vmem:[#allocation2 + $0x10] sm:$0xff] %vm232, 0.0
      %s236 = scalar_lea.vmem [#allocation2], 408
      %237 = vst.msk [vmem:[%s236] sm:$0xff] %vm232, 0.0
      %238 = vst.msk [vmem:[%s236 + $0x8] sm:$0xff] %vm232, 0.0
      %239 = vst.msk [vmem:[%s236 + $0x10] sm:$0xff] %vm232, 0.0
      %s240 = scalar_lea.vmem [#allocation2], 24
      %vm241 = vcmask 24576
      %242 = vst.msk [vmem:[%s240] sm:$0x1] %vm241, 0.0
      %243 = vst.msk [vmem:[%s240 + $0x18] sm:$0x1] %vm241, 0.0
      %244 = vst.msk [vmem:[%s240 + $0x30] sm:$0x1] %vm241, 0.0
      %245 = vst.msk [vmem:[%s240 + $0x48] sm:$0x1] %vm241, 0.0
      %246 = vst.msk [vmem:[%s240 + $0x60] sm:$0x1] %vm241, 0.0
      %247 = vst.msk [vmem:[%s240 + $0x78] sm:$0x1] %vm241, 0.0
      %248 = vst.msk [vmem:[%s240 + $0x90] sm:$0x1] %vm241, 0.0
      %249 = vst.msk [vmem:[%s240 + $0xa8] sm:$0x1] %vm241, 0.0
      %250 = vst.msk [vmem:[%s240 + $0xc0] sm:$0x1] %vm241, 0.0
      %251 = vst.msk [vmem:[%s240 + $0xd8] sm:$0x1] %vm241, 0.0
      %252 = vst.msk [vmem:[%s240 + $0xf0] sm:$0x1] %vm241, 0.0
      %253 = vst.msk [vmem:[%s240 + $0x108] sm:$0x1] %vm241, 0.0
      %254 = vst.msk [vmem:[%s240 + $0x120] sm:$0x1] %vm241, 0.0
      %255 = vst.msk [vmem:[%s240 + $0x138] sm:$0x1] %vm241, 0.0
      %256 = vst.msk [vmem:[%s240 + $0x150] sm:$0x1] %vm241, 0.0
      %257 = vst.msk [vmem:[%s240 + $0x168] sm:$0x1] %vm241, 0.0
      %258 = vst.msk [vmem:[%s240 + $0x11] sm:$0x1] %vm241, 0.0
      %259 = vst.msk [vmem:[%s240 + $0x29] sm:$0x1] %vm241, 0.0
      %260 = vst.msk [vmem:[%s240 + $0x41] sm:$0x1] %vm241, 0.0
      %261 = vst.msk [vmem:[%s240 + $0x59] sm:$0x1] %vm241, 0.0
      %262 = vst.msk [vmem:[%s240 + $0x71] sm:$0x1] %vm241, 0.0
      %263 = vst.msk [vmem:[%s240 + $0x89] sm:$0x1] %vm241, 0.0
      %264 = vst.msk [vmem:[%s240 + $0xa1] sm:$0x1] %vm241, 0.0
      %265 = vst.msk [vmem:[%s240 + $0xb9] sm:$0x1] %vm241, 0.0
      %266 = vst.msk [vmem:[%s240 + $0xd1] sm:$0x1] %vm241, 0.0
      %267 = vst.msk [vmem:[%s240 + $0xe9] sm:$0x1] %vm241, 0.0
      %268 = vst.msk [vmem:[%s240 + $0x101] sm:$0x1] %vm241, 0.0
      %269 = vst.msk [vmem:[%s240 + $0x119] sm:$0x1] %vm241, 0.0
      %270 = vst.msk [vmem:[%s240 + $0x131] sm:$0x1] %vm241, 0.0
      %271 = vst.msk [vmem:[%s240 + $0x149] sm:$0x1] %vm241, 0.0
      %272 = vst.msk [vmem:[%s240 + $0x161] sm:$0x1] %vm241, 0.0
      %273 = vst.msk [vmem:[%s240 + $0x179] sm:$0x1] %vm241, 0.0
      %v274 = vld [vmem:[%s221] sm:$0xff]
      %v275 = vld [vmem:[%s221 + $0x8] sm:$0xff]
      %v276 = vld [vmem:[%s221 + $0x10] sm:$0xff]
      %v277 = vld [vmem:[%s221 + $0x18] sm:$0xff]
      %v278 = vld [vmem:[%s221 + $0x20] sm:$0xff]
      %v279 = vld [vmem:[%s221 + $0x28] sm:$0xff]
      %v280 = vld [vmem:[%s221 + $0x30] sm:$0xff]
      %v281 = vld [vmem:[%s221 + $0x38] sm:$0xff]
      %v282 = vld [vmem:[%s221 + $0x40] sm:$0xff]
      %v283 = vld [vmem:[%s221 + $0x48] sm:$0xff]
      %v284 = vld [vmem:[%s221 + $0x50] sm:$0xff]
      %v285 = vld [vmem:[%s221 + $0x58] sm:$0xff]
      %v286 = vld [vmem:[%s221 + $0x60] sm:$0xff]
      %v287 = vld [vmem:[%s221 + $0x68] sm:$0xff]
      %v288 = vld [vmem:[%s221 + $0x70] sm:$0xff]
      %v289 = vld [vmem:[%s221 + $0x78] sm:$0xff]
      %v290 = vld [vmem:[%s221 + $0x80] sm:$0xff]
      %v291 = vld [vmem:[%s221 + $0x88] sm:$0xff]
      %v292 = vld [vmem:[%s221 + $0x90] sm:$0xff]
      %v293 = vld [vmem:[%s221 + $0x98] sm:$0xff]
      %v294 = vld [vmem:[%s221 + $0xa0] sm:$0xff]
      %v295 = vld [vmem:[%s221 + $0xa8] sm:$0xff]
      %v296 = vld [vmem:[%s221 + $0xb0] sm:$0xff]
      %v297 = vld [vmem:[%s221 + $0xb8] sm:$0xff]
      %v298 = vld [vmem:[%s221 + $0xc0] sm:$0xff]
      %v299 = vld [vmem:[%s221 + $0xc8] sm:$0xff]
      %v300 = vld [vmem:[%s221 + $0xd0] sm:$0xff]
      %v301 = vld [vmem:[%s221 + $0xd8] sm:$0xff]
      %v302 = vld [vmem:[%s221 + $0xe0] sm:$0xff]
      %v303 = vld [vmem:[%s221 + $0xe8] sm:$0xff]
      %v304 = vld [vmem:[%s221 + $0xf0] sm:$0xff]
      %v305 = vld [vmem:[%s221 + $0xf8] sm:$0xff]
      %s306 = ssub.f32 0.0, %s229
      %v307 = vstv %s306
      %v308 = vmax.f32 %v274, %v307
      %v309 = vmax.f32 %v275, %v307
      %v310 = vmax.f32 %v276, %v307
      %v311 = vmax.f32 %v277, %v307
      %v312 = vmax.f32 %v278, %v307
      %v313 = vmax.f32 %v279, %v307
      %v314 = vmax.f32 %v280, %v307
      %v315 = vmax.f32 %v281, %v307
      %v316 = vmax.f32 %v282, %v307
      %v317 = vmax.f32 %v283, %v307
      %v318 = vmax.f32 %v284, %v307
      %v319 = vmax.f32 %v285, %v307
      %v320 = vmax.f32 %v286, %v307
      %v321 = vmax.f32 %v287, %v307
      %v322 = vmax.f32 %v288, %v307
      %v323 = vmax.f32 %v289, %v307
      %v324 = vmax.f32 %v290, %v307
      %v325 = vmax.f32 %v291, %v307
      %v326 = vmax.f32 %v292, %v307
      %v327 = vmax.f32 %v293, %v307
      %v328 = vmax.f32 %v294, %v307
      %v329 = vmax.f32 %v295, %v307
      %v330 = vmax.f32 %v296, %v307
      %v331 = vmax.f32 %v297, %v307
      %v332 = vmax.f32 %v298, %v307
      %v333 = vmax.f32 %v299, %v307
      %v334 = vmax.f32 %v300, %v307
      %v335 = vmax.f32 %v301, %v307
      %v336 = vmax.f32 %v302, %v307
      %v337 = vmax.f32 %v303, %v307
      %v338 = vmax.f32 %v304, %v307
      %v339 = vmax.f32 %v305, %v307
      %v340 = vstv %s229
      %v341 = vmin.f32 %v308, %v340
      %v342 = vmin.f32 %v309, %v340
      %v343 = vmin.f32 %v310, %v340
      %v344 = vmin.f32 %v311, %v340
      %v345 = vmin.f32 %v312, %v340
      %v346 = vmin.f32 %v313, %v340
      %v347 = vmin.f32 %v314, %v340
      %v348 = vmin.f32 %v315, %v340
      %v349 = vmin.f32 %v316, %v340
      %v350 = vmin.f32 %v317, %v340
      %v351 = vmin.f32 %v318, %v340
      %v352 = vmin.f32 %v319, %v340
      %v353 = vmin.f32 %v320, %v340
      %v354 = vmin.f32 %v321, %v340
      %v355 = vmin.f32 %v322, %v340
      %v356 = vmin.f32 %v323, %v340
      %v357 = vmin.f32 %v324, %v340
      %v358 = vmin.f32 %v325, %v340
      %v359 = vmin.f32 %v326, %v340
      %v360 = vmin.f32 %v327, %v340
      %v361 = vmin.f32 %v328, %v340
      %v362 = vmin.f32 %v329, %v340
      %v363 = vmin.f32 %v330, %v340
      %v364 = vmin.f32 %v331, %v340
      %v365 = vmin.f32 %v332, %v340
      %v366 = vmin.f32 %v333, %v340
      %v367 = vmin.f32 %v334, %v340
      %v368 = vmin.f32 %v335, %v340
      %v369 = vmin.f32 %v336, %v340
      %v370 = vmin.f32 %v337, %v340
      %v371 = vmin.f32 %v338, %v340
      %v372 = vmin.f32 %v339, %v340
      %vm373 = vcmp.ge.f32.partialorder %v341, 0.0
      %vm374 = vcmp.ge.f32.partialorder %v342, 0.0
      %vm375 = vcmp.ge.f32.partialorder %v343, 0.0
      %vm376 = vcmp.ge.f32.partialorder %v344, 0.0
      %vm377 = vcmp.ge.f32.partialorder %v345, 0.0
      %vm378 = vcmp.ge.f32.partialorder %v346, 0.0
      %vm379 = vcmp.ge.f32.partialorder %v347, 0.0
      %vm380 = vcmp.ge.f32.partialorder %v348, 0.0
      %vm381 = vcmp.ge.f32.partialorder %v349, 0.0
      %vm382 = vcmp.ge.f32.partialorder %v350, 0.0
      %vm383 = vcmp.ge.f32.partialorder %v351, 0.0
      %vm384 = vcmp.ge.f32.partialorder %v352, 0.0
      %vm385 = vcmp.ge.f32.partialorder %v353, 0.0
      %vm386 = vcmp.ge.f32.partialorder %v354, 0.0
      %vm387 = vcmp.ge.f32.partialorder %v355, 0.0
      %vm388 = vcmp.ge.f32.partialorder %v356, 0.0
      %vm389 = vcmp.ge.f32.partialorder %v357, 0.0
      %vm390 = vcmp.ge.f32.partialorder %v358, 0.0
      %vm391 = vcmp.ge.f32.partialorder %v359, 0.0
      %vm392 = vcmp.ge.f32.partialorder %v360, 0.0
      %vm393 = vcmp.ge.f32.partialorder %v361, 0.0
      %vm394 = vcmp.ge.f32.partialorder %v362, 0.0
      %vm395 = vcmp.ge.f32.partialorder %v363, 0.0
      %vm396 = vcmp.ge.f32.partialorder %v364, 0.0
      %vm397 = vcmp.ge.f32.partialorder %v365, 0.0
      %vm398 = vcmp.ge.f32.partialorder %v366, 0.0
      %vm399 = vcmp.ge.f32.partialorder %v367, 0.0
      %vm400 = vcmp.ge.f32.partialorder %v368, 0.0
      %vm401 = vcmp.ge.f32.partialorder %v369, 0.0
      %vm402 = vcmp.ge.f32.partialorder %v370, 0.0
      %vm403 = vcmp.ge.f32.partialorder %v371, 0.0
      %vm404 = vcmp.ge.f32.partialorder %v372, 0.0
      %v405 = vmul.f32 %v341, 0.01
      %v406 = vmul.f32 %v342, 0.01
      %v407 = vmul.f32 %v343, 0.01
      %v408 = vmul.f32 %v344, 0.01
      %v409 = vmul.f32 %v345, 0.01
      %v410 = vmul.f32 %v346, 0.01
      %v411 = vmul.f32 %v347, 0.01
      %v412 = vmul.f32 %v348, 0.01
      %v413 = vmul.f32 %v349, 0.01
      %v414 = vmul.f32 %v350, 0.01
      %v415 = vmul.f32 %v351, 0.01
      %v416 = vmul.f32 %v352, 0.01
      %v417 = vmul.f32 %v353, 0.01
      %v418 = vmul.f32 %v354, 0.01
      %v419 = vmul.f32 %v355, 0.01
      %v420 = vmul.f32 %v356, 0.01
      %v421 = vmul.f32 %v357, 0.01
      %v422 = vmul.f32 %v358, 0.01
      %v423 = vmul.f32 %v359, 0.01
      %v424 = vmul.f32 %v360, 0.01
      %v425 = vmul.f32 %v361, 0.01
      %v426 = vmul.f32 %v362, 0.01
      %v427 = vmul.f32 %v363, 0.01
      %v428 = vmul.f32 %v364, 0.01
      %v429 = vmul.f32 %v365, 0.01
      %v430 = vmul.f32 %v366, 0.01
      %v431 = vmul.f32 %v367, 0.01
      %v432 = vmul.f32 %v368, 0.01
      %v433 = vmul.f32 %v369, 0.01
      %v434 = vmul.f32 %v370, 0.01
      %v435 = vmul.f32 %v371, 0.01
      %v436 = vmul.f32 %v372, 0.01
      %v437 = vsel %vm373, %v341, %v405
      %v438 = vsel %vm374, %v342, %v406
      %v439 = vsel %vm375, %v343, %v407
      %v440 = vsel %vm376, %v344, %v408
      %v441 = vsel %vm377, %v345, %v409
      %v442 = vsel %vm378, %v346, %v410
      %v443 = vsel %vm379, %v347, %v411
      %v444 = vsel %vm380, %v348, %v412
      %v445 = vsel %vm381, %v349, %v413
      %v446 = vsel %vm382, %v350, %v414
      %v447 = vsel %vm383, %v351, %v415
      %v448 = vsel %vm384, %v352, %v416
      %v449 = vsel %vm385, %v353, %v417
      %v450 = vsel %vm386, %v354, %v418
      %v451 = vsel %vm387, %v355, %v419
      %v452 = vsel %vm388, %v356, %v420
      %v453 = vsel %vm389, %v357, %v421
      %v454 = vsel %vm390, %v358, %v422
      %v455 = vsel %vm391, %v359, %v423
      %v456 = vsel %vm392, %v360, %v424
      %v457 = vsel %vm393, %v361, %v425
      %v458 = vsel %vm394, %v362, %v426
      %v459 = vsel %vm395, %v363, %v427
      %v460 = vsel %vm396, %v364, %v428
      %v461 = vsel %vm397, %v365, %v429
      %v462 = vsel %vm398, %v366, %v430
      %v463 = vsel %vm399, %v367, %v431
      %v464 = vsel %vm400, %v368, %v432
      %v465 = vsel %vm401, %v369, %v433
      %v466 = vsel %vm402, %v370, %v434
      %v467 = vsel %vm403, %v371, %v435
      %v468 = vsel %vm404, %v372, %v436
      %469 = vst.msk [vmem:[%s240 + $0x1] sm:$0xff] %vm232, %v437
      %470 = vst.msk [vmem:[%s240 + $0x9] sm:$0xff] %vm232, %v438
      %471 = vst.msk [vmem:[%s240 + $0x19] sm:$0xff] %vm232, %v439
      %472 = vst.msk [vmem:[%s240 + $0x21] sm:$0xff] %vm232, %v440
      %473 = vst.msk [vmem:[%s240 + $0x31] sm:$0xff] %vm232, %v441
      %474 = vst.msk [vmem:[%s240 + $0x39] sm:$0xff] %vm232, %v442
      %475 = vst.msk [vmem:[%s240 + $0x49] sm:$0xff] %vm232, %v443
      %476 = vst.msk [vmem:[%s240 + $0x51] sm:$0xff] %vm232, %v444
      %477 = vst.msk [vmem:[%s240 + $0x61] sm:$0xff] %vm232, %v445
      %478 = vst.msk [vmem:[%s240 + $0x69] sm:$0xff] %vm232, %v446
      %479 = vst.msk [vmem:[%s240 + $0x79] sm:$0xff] %vm232, %v447
      %480 = vst.msk [vmem:[%s240 + $0x81] sm:$0xff] %vm232, %v448
      %481 = vst.msk [vmem:[%s240 + $0x91] sm:$0xff] %vm232, %v449
      %482 = vst.msk [vmem:[%s240 + $0x99] sm:$0xff] %vm232, %v450
      %483 = vst.msk [vmem:[%s240 + $0xa9] sm:$0xff] %vm232, %v451
      %484 = vst.msk [vmem:[%s240 + $0xb1] sm:$0xff] %vm232, %v452
      %485 = vst.msk [vmem:[%s240 + $0xc1] sm:$0xff] %vm232, %v453
      %486 = vst.msk [vmem:[%s240 + $0xc9] sm:$0xff] %vm232, %v454
      %487 = vst.msk [vmem:[%s240 + $0xd9] sm:$0xff] %vm232, %v455
      %488 = vst.msk [vmem:[%s240 + $0xe1] sm:$0xff] %vm232, %v456
      %489 = vst.msk [vmem:[%s240 + $0xf1] sm:$0xff] %vm232, %v457
      %490 = vst.msk [vmem:[%s240 + $0xf9] sm:$0xff] %vm232, %v458
      %491 = vst.msk [vmem:[%s240 + $0x109] sm:$0xff] %vm232, %v459
      %492 = vst.msk [vmem:[%s240 + $0x111] sm:$0xff] %vm232, %v460
      %493 = vst.msk [vmem:[%s240 + $0x121] sm:$0xff] %vm232, %v461
      %494 = vst.msk [vmem:[%s240 + $0x129] sm:$0xff] %vm232, %v462
      %495 = vst.msk [vmem:[%s240 + $0x139] sm:$0xff] %vm232, %v463
      %496 = vst.msk [vmem:[%s240 + $0x141] sm:$0xff] %vm232, %v464
      %497 = vst.msk [vmem:[%s240 + $0x151] sm:$0xff] %vm232, %v465
      %498 = vst.msk [vmem:[%s240 + $0x159] sm:$0xff] %vm232, %v466
      %499 = vst.msk [vmem:[%s240 + $0x169] sm:$0xff] %vm232, %v467
      %500 = vst.msk [vmem:[%s240 + $0x171] sm:$0xff] %vm232, %v468
      %v501 = vld [vmem:[#allocation2] sm:$0xff]
      %v502 = vld [vmem:[#allocation2 + $0x8] sm:$0xff]
      %v503 = vld [vmem:[#allocation2 + $0x18] sm:$0xff]
      %v504 = vld [vmem:[#allocation2 + $0x20] sm:$0xff]
      %v505 = vld [vmem:[#allocation2 + $0x30] sm:$0xff]
      %v506 = vld [vmem:[#allocation2 + $0x38] sm:$0xff]
      %v507 = vld [vmem:[#allocation2 + $0x48] sm:$0xff]
      %v508 = vld [vmem:[#allocation2 + $0x50] sm:$0xff]
      %v509 = vld [vmem:[#allocation2 + $0x60] sm:$0xff]
      %v510 = vld [vmem:[#allocation2 + $0x68] sm:$0xff]
      %v511 = vld [vmem:[#allocation2 + $0x78] sm:$0xff]
      %v512 = vld [vmem:[#allocation2 + $0x80] sm:$0xff]
      %v513 = vld [vmem:[#allocation2 + $0x90] sm:$0xff]
      %v514 = vld [vmem:[#allocation2 + $0x98] sm:$0xff]
      %v515 = vld [vmem:[#allocation2 + $0xa8] sm:$0xff]
      %v516 = vld [vmem:[#allocation2 + $0xb0] sm:$0xff]
      %v517 = vld [vmem:[#allocation2 + $0xc0] sm:$0xff]
      %v518 = vld [vmem:[#allocation2 + $0xc8] sm:$0xff]
      %v519 = vld [vmem:[#allocation2 + $0xd8] sm:$0xff]
      %v520 = vld [vmem:[#allocation2 + $0xe0] sm:$0xff]
      %v521 = vld [vmem:[#allocation2 + $0xf0] sm:$0xff]
      %v522 = vld [vmem:[#allocation2 + $0xf8] sm:$0xff]
      %v523 = vld [vmem:[#allocation2 + $0x108] sm:$0xff]
      %v524 = vld [vmem:[#allocation2 + $0x110] sm:$0xff]
      %v525 = vld [vmem:[#allocation2 + $0x120] sm:$0xff]
      %v526 = vld [vmem:[#allocation2 + $0x128] sm:$0xff]
      %v527 = vld [vmem:[#allocation2 + $0x138] sm:$0xff]
      %v528 = vld [vmem:[#allocation2 + $0x140] sm:$0xff]
      %v529 = vld [vmem:[#allocation2 + $0x150] sm:$0xff]
      %v530 = vld [vmem:[#allocation2 + $0x158] sm:$0xff]
      %v531 = vld [vmem:[#allocation2 + $0x168] sm:$0xff]
      %v532 = vld [vmem:[#allocation2 + $0x170] sm:$0xff]
      %v533 = vpack.c.bf16 %v502, %v501
      %v534 = vpack.c.bf16 %v504, %v503
      %v535 = vpack.c.bf16 %v506, %v505
      %v536 = vpack.c.bf16 %v508, %v507
      %v537 = vpack.c.bf16 %v510, %v509
      %v538 = vpack.c.bf16 %v512, %v511
      %v539 = vpack.c.bf16 %v514, %v513
      %v540 = vpack.c.bf16 %v516, %v515
      %v541 = vpack.c.bf16 %v518, %v517
      %v542 = vpack.c.bf16 %v520, %v519
      %v543 = vpack.c.bf16 %v522, %v521
      %v544 = vpack.c.bf16 %v524, %v523
      %v545 = vpack.c.bf16 %v526, %v525
      %v546 = vpack.c.bf16 %v528, %v527
      %v547 = vpack.c.bf16 %v530, %v529
      %v548 = vpack.c.bf16 %v532, %v531
      %v549 = vld [vmem:[%s3] sm:$0x3]
      %v550 = vld [vmem:[#allocation2 + $0x1] sm:$0xff]
      %v551 = vld [vmem:[#allocation2 + $0x9] sm:$0xff]
      %v552 = vld [vmem:[#allocation2 + $0x19] sm:$0xff]
      %v553 = vld [vmem:[#allocation2 + $0x21] sm:$0xff]
      %v554 = vld [vmem:[#allocation2 + $0x31] sm:$0xff]
      %v555 = vld [vmem:[#allocation2 + $0x39] sm:$0xff]
      %v556 = vld [vmem:[#allocation2 + $0x49] sm:$0xff]
      %v557 = vld [vmem:[#allocation2 + $0x51] sm:$0xff]
      %v558 = vld [vmem:[#allocation2 + $0x61] sm:$0xff]
      %v559 = vld [vmem:[#allocation2 + $0x69] sm:$0xff]
      %v560 = vld [vmem:[#allocation2 + $0x79] sm:$0xff]
      %v561 = vld [vmem:[#allocation2 + $0x81] sm:$0xff]
      %v562 = vld [vmem:[#allocation2 + $0x91] sm:$0xff]
      %v563 = vld [vmem:[#allocation2 + $0x99] sm:$0xff]
      %v564 = vld [vmem:[#allocation2 + $0xa9] sm:$0xff]
      %v565 = vld [vmem:[#allocation2 + $0xb1] sm:$0xff]
      %v566 = vld [vmem:[#allocation2 + $0xc1] sm:$0xff]
      %v567 = vld [vmem:[#allocation2 + $0xc9] sm:$0xff]
      %v568 = vld [vmem:[#allocation2 + $0xd9] sm:$0xff]
      %v569 = vld [vmem:[#allocation2 + $0xe1] sm:$0xff]
      %v570 = vld [vmem:[#allocation2 + $0xf1] sm:$0xff]
      %v571 = vld [vmem:[#allocation2 + $0xf9] sm:$0xff]
      %v572 = vld [vmem:[#allocation2 + $0x109] sm:$0xff]
      %v573 = vld [vmem:[#allocation2 + $0x111] sm:$0xff]
      %v574 = vld [vmem:[#allocation2 + $0x121] sm:$0xff]
      %v575 = vld [vmem:[#allocation2 + $0x129] sm:$0xff]
      %v576 = vld [vmem:[#allocation2 + $0x139] sm:$0xff]
      %v577 = vld [vmem:[#allocation2 + $0x141] sm:$0xff]
      %v578 = vld [vmem:[#allocation2 + $0x151] sm:$0xff]
      %v579 = vld [vmem:[#allocation2 + $0x159] sm:$0xff]
      %v580 = vld [vmem:[#allocation2 + $0x169] sm:$0xff]
      %v581 = vld [vmem:[#allocation2 + $0x171] sm:$0xff]
      %v582 = vpack.c.bf16 %v551, %v550
      %v583 = vpack.c.bf16 %v553, %v552
      %v584 = vpack.c.bf16 %v555, %v554
      %v585 = vpack.c.bf16 %v557, %v556
      %v586 = vpack.c.bf16 %v559, %v558
      %v587 = vpack.c.bf16 %v561, %v560
      %v588 = vpack.c.bf16 %v563, %v562
      %v589 = vpack.c.bf16 %v565, %v564
      %v590 = vpack.c.bf16 %v567, %v566
      %v591 = vpack.c.bf16 %v569, %v568
      %v592 = vpack.c.bf16 %v571, %v570
      %v593 = vpack.c.bf16 %v573, %v572
      %v594 = vpack.c.bf16 %v575, %v574
      %v595 = vpack.c.bf16 %v577, %v576
      %v596 = vpack.c.bf16 %v579, %v578
      %v597 = vpack.c.bf16 %v581, %v580
      %s598 = scalar_lea.vmem %s3, 2
      %v599 = vld [vmem:[%s598] sm:$0x3]
      %v601 = vsel %vm232, %v582, 0
      %v604 = vsel %vm232, %v583, 0
      %v607 = vsel %vm232, %v584, 0
      %v610 = vsel %vm232, %v585, 0
      %v613 = vsel %vm232, %v586, 0
      %v616 = vsel %vm232, %v587, 0
      %v619 = vsel %vm232, %v588, 0
      %v622 = vsel %vm232, %v589, 0
      %v625 = vsel %vm232, %v590, 0
      %v628 = vsel %vm232, %v591, 0
      %v631 = vsel %vm232, %v592, 0
      %v634 = vsel %vm232, %v593, 0
      %v637 = vsel %vm232, %v594, 0
      %v640 = vsel %vm232, %v595, 0
      %v643 = vsel %vm232, %v596, 0
      %v646 = vsel %vm232, %v597, 0
      %vm648 = vcmask 1041408
      %v650 = vsel %vm648, %v599, 0
      %652 = vmatprep.subr.bf16.mxu0 0
      %653 = vmatpush1.bf16.msra.mxu0 %v650
      %654 = vmatprep.subr.bf16.mxu0 0
      %655 = vmatpush1.bf16.msra.mxu0 0
      %656 = vmatprep.subr.bf16.mxu0 0
      %657 = vmatpush1.bf16.msra.mxu0 0
      %658 = vmatprep.subr.bf16.mxu0 0
      %659 = vmatpush1.bf16.msra.mxu0 0
      %660 = vmatprep.subr.bf16.mxu0 0
      %661 = vmatpush1.bf16.msra.mxu0 0
      %662 = vmatprep.subr.bf16.mxu0 0
      %663 = vmatpush1.bf16.msra.mxu0 0
      %664 = vmatprep.subr.bf16.mxu0 0
      %665 = vmatpush1.bf16.msra.mxu0 0
      %666 = vmatprep.subr.bf16.mxu0 0
      %667 = vmatpush1.bf16.msra.mxu0 0
      %668 = vmatprep.subr.bf16.mxu0 0
      %669 = vmatpush1.bf16.msra.mxu0 0
      %670 = vmatprep.subr.bf16.mxu0 0
      %671 = vmatpush1.bf16.msra.mxu0 0
      %672 = vmatprep.subr.bf16.mxu0 0
      %673 = vmatpush1.bf16.msra.mxu0 0
      %674 = vmatprep.subr.bf16.mxu0 0
      %675 = vmatpush1.bf16.msra.mxu0 0
      %676 = vmatprep.subr.bf16.mxu0 0
      %677 = vmatpush1.bf16.msra.mxu0 0
      %678 = vmatprep.subr.bf16.mxu0 0
      %679 = vmatpush1.bf16.msra.mxu0 0
      %680 = vmatprep.subr.bf16.mxu0 0
      %681 = vmatpush1.bf16.msra.mxu0 0
      %682 = vmatprep.subr.bf16.mxu0 0
      %683 = vmatpush1.bf16.msra.mxu0 0
      %684 = vmatprep.mubr.bf16.mxu0 0
      %685 = vmatmul.mubr.bf16.gmra.mrb[0].mxu0 %v601
      %v686 = vpop.f32.mrb[0].mxu0
      %v687 = vadd.f32 0.0, %v686
      %v688 = vpop.f32.mrb[0].mxu0
      %v689 = vpop.f32.mrb[0].mxu0
      %v690 = vadd.f32 0.0, %v689
      %v691 = vpop.f32.mrb[0].mxu0
      %692 = vmatprep.mubr.bf16.mxu0 0
      %693 = vmatmul.mubr.bf16.gmra.mrb[0].mxu0 %v604
      %v694 = vpop.f32.mrb[0].mxu0
      %v695 = vadd.f32 0.0, %v694
      %v696 = vpop.f32.mrb[0].mxu0
      %v697 = vpop.f32.mrb[0].mxu0
      %v698 = vadd.f32 0.0, %v697
      %v699 = vpop.f32.mrb[0].mxu0
      %700 = vmatprep.mubr.bf16.mxu0 0
      %701 = vmatmul.mubr.bf16.gmra.mrb[0].mxu0 %v607
      %v702 = vpop.f32.mrb[0].mxu0
      %v703 = vadd.f32 0.0, %v702
      %v704 = vpop.f32.mrb[0].mxu0
      %v705 = vpop.f32.mrb[0].mxu0
      %v706 = vadd.f32 0.0, %v705
      %v707 = vpop.f32.mrb[0].mxu0
      %708 = vmatprep.mubr.bf16.mxu0 0
      %709 = vmatmul.mubr.bf16.gmra.mrb[0].mxu0 %v610
      %v710 = vpop.f32.mrb[0].mxu0
      %v711 = vadd.f32 0.0, %v710
      %v712 = vpop.f32.mrb[0].mxu0
      %v713 = vpop.f32.mrb[0].mxu0
      %v714 = vadd.f32 0.0, %v713
      %v715 = vpop.f32.mrb[0].mxu0
      %716 = vmatprep.mubr.bf16.mxu0 0
      %717 = vmatmul.mubr.bf16.gmra.mrb[0].mxu0 %v613
      %v718 = vpop.f32.mrb[0].mxu0
      %v719 = vadd.f32 0.0, %v718
      %v720 = vpop.f32.mrb[0].mxu0
      %v721 = vpop.f32.mrb[0].mxu0
      %v722 = vadd.f32 0.0, %v721
      %v723 = vpop.f32.mrb[0].mxu0
      %724 = vmatprep.mubr.bf16.mxu0 0
      %725 = vmatmul.mubr.bf16.gmra.mrb[0].mxu0 %v616
      %v726 = vpop.f32.mrb[0].mxu0
      %v727 = vadd.f32 0.0, %v726
      %v728 = vpop.f32.mrb[0].mxu0
      %v729 = vpop.f32.mrb[0].mxu0
      %v730 = vadd.f32 0.0, %v729
      %v731 = vpop.f32.mrb[0].mxu0
      %732 = vmatprep.mubr.bf16.mxu0 0
      %733 = vmatmul.mubr.bf16.gmra.mrb[0].mxu0 %v619
      %v734 = vpop.f32.mrb[0].mxu0
      %v735 = vadd.f32 0.0, %v734
      %v736 = vpop.f32.mrb[0].mxu0
      %v737 = vpop.f32.mrb[0].mxu0
      %v738 = vadd.f32 0.0, %v737
      %v739 = vpop.f32.mrb[0].mxu0
      %740 = vmatprep.mubr.bf16.mxu0 0
      %741 = vmatmul.mubr.bf16.gmra.mrb[0].mxu0 %v622
      %v742 = vpop.f32.mrb[0].mxu0
      %v743 = vadd.f32 0.0, %v742
      %v744 = vpop.f32.mrb[0].mxu0
      %v745 = vpop.f32.mrb[0].mxu0
      %v746 = vadd.f32 0.0, %v745
      %v747 = vpop.f32.mrb[0].mxu0
      %748 = vmatprep.mubr.bf16.mxu0 0
      %749 = vmatmul.mubr.bf16.gmra.mrb[0].mxu0 %v625
      %v750 = vpop.f32.mrb[0].mxu0
      %v751 = vadd.f32 0.0, %v750
      %v752 = vpop.f32.mrb[0].mxu0
      %v753 = vpop.f32.mrb[0].mxu0
      %v754 = vadd.f32 0.0, %v753
      %v755 = vpop.f32.mrb[0].mxu0
      %756 = vmatprep.mubr.bf16.mxu0 0
      %757 = vmatmul.mubr.bf16.gmra.mrb[0].mxu0 %v628
      %v758 = vpop.f32.mrb[0].mxu0
      %v759 = vadd.f32 0.0, %v758
      %v760 = vpop.f32.mrb[0].mxu0
      %v761 = vpop.f32.mrb[0].mxu0
      %v762 = vadd.f32 0.0, %v761
      %v763 = vpop.f32.mrb[0].mxu0
      %764 = vmatprep.mubr.bf16.mxu0 0
      %765 = vmatmul.mubr.bf16.gmra.mrb[0].mxu0 %v631
      %v766 = vpop.f32.mrb[0].mxu0
      %v767 = vadd.f32 0.0, %v766
      %v768 = vpop.f32.mrb[0].mxu0
      %v769 = vpop.f32.mrb[0].mxu0
      %v770 = vadd.f32 0.0, %v769
      %v771 = vpop.f32.mrb[0].mxu0
      %772 = vmatprep.mubr.bf16.mxu0 0
      %773 = vmatmul.mubr.bf16.gmra.mrb[0].mxu0 %v634
      %v774 = vpop.f32.mrb[0].mxu0
      %v775 = vadd.f32 0.0, %v774
      %v776 = vpop.f32.mrb[0].mxu0
      %v777 = vpop.f32.mrb[0].mxu0
      %v778 = vadd.f32 0.0, %v777
      %v779 = vpop.f32.mrb[0].mxu0
      %780 = vmatprep.mubr.bf16.mxu0 0
      %781 = vmatmul.mubr.bf16.gmra.mrb[0].mxu0 %v637
      %v782 = vpop.f32.mrb[0].mxu0
      %v783 = vadd.f32 0.0, %v782
      %v784 = vpop.f32.mrb[0].mxu0
      %v785 = vpop.f32.mrb[0].mxu0
      %v786 = vadd.f32 0.0, %v785
      %v787 = vpop.f32.mrb[0].mxu0
      %788 = vmatprep.mubr.bf16.mxu0 0
      %789 = vmatmul.mubr.bf16.gmra.mrb[0].mxu0 %v640
      %v790 = vpop.f32.mrb[0].mxu0
      %v791 = vadd.f32 0.0, %v790
      %v792 = vpop.f32.mrb[0].mxu0
      %v793 = vpop.f32.mrb[0].mxu0
      %v794 = vadd.f32 0.0, %v793
      %v795 = vpop.f32.mrb[0].mxu0
      %796 = vmatprep.mubr.bf16.mxu0 0
      %797 = vmatmul.mubr.bf16.gmra.mrb[0].mxu0 %v643
      %v798 = vpop.f32.mrb[0].mxu0
      %v799 = vadd.f32 0.0, %v798
      %v800 = vpop.f32.mrb[0].mxu0
      %v801 = vpop.f32.mrb[0].mxu0
      %v802 = vadd.f32 0.0, %v801
      %v803 = vpop.f32.mrb[0].mxu0
      %804 = vmatprep.mubr.bf16.mxu0 0
      %805 = vmatmul.mubr.bf16.gmra.mrb[0].mxu0 %v646
      %v806 = vpop.f32.mrb[0].mxu0
      %v807 = vadd.f32 0.0, %v806
      %v808 = vpop.f32.mrb[0].mxu0
      %v809 = vpop.f32.mrb[0].mxu0
      %v810 = vadd.f32 0.0, %v809
      %v811 = vpop.f32.mrb[0].mxu0
      %812 = vdwg.mxu0
      %v814 = vsel %vm232, %v533, 0
      %v817 = vsel %vm232, %v534, 0
      %v820 = vsel %vm232, %v535, 0
      %v823 = vsel %vm232, %v536, 0
      %v826 = vsel %vm232, %v537, 0
      %v829 = vsel %vm232, %v538, 0
      %v832 = vsel %vm232, %v539, 0
      %v835 = vsel %vm232, %v540, 0
      %v838 = vsel %vm232, %v541, 0
      %v841 = vsel %vm232, %v542, 0
      %v844 = vsel %vm232, %v543, 0
      %v847 = vsel %vm232, %v544, 0
      %v850 = vsel %vm232, %v545, 0
      %v853 = vsel %vm232, %v546, 0
      %v856 = vsel %vm232, %v547, 0
      %v859 = vsel %vm232, %v548, 0
      %v862 = vsel %vm648, %v549, 0
      %864 = vmatprep.subr.bf16.mxu0 0
      %865 = vmatpush1.bf16.msra.mxu0 %v862
      %866 = vmatprep.subr.bf16.mxu0 0
      %867 = vmatpush1.bf16.msra.mxu0 0
      %868 = vmatprep.subr.bf16.mxu0 0
      %869 = vmatpush1.bf16.msra.mxu0 0
      %870 = vmatprep.subr.bf16.mxu0 0
      %871 = vmatpush1.bf16.msra.mxu0 0
      %872 = vmatprep.subr.bf16.mxu0 0
      %873 = vmatpush1.bf16.msra.mxu0 0
      %874 = vmatprep.subr.bf16.mxu0 0
      %875 = vmatpush1.bf16.msra.mxu0 0
      %876 = vmatprep.subr.bf16.mxu0 0
      %877 = vmatpush1.bf16.msra.mxu0 0
      %878 = vmatprep.subr.bf16.mxu0 0
      %879 = vmatpush1.bf16.msra.mxu0 0
      %880 = vmatprep.subr.bf16.mxu0 0
      %881 = vmatpush1.bf16.msra.mxu0 0
      %882 = vmatprep.subr.bf16.mxu0 0
      %883 = vmatpush1.bf16.msra.mxu0 0
      %884 = vmatprep.subr.bf16.mxu0 0
      %885 = vmatpush1.bf16.msra.mxu0 0
      %886 = vmatprep.subr.bf16.mxu0 0
      %887 = vmatpush1.bf16.msra.mxu0 0
      %888 = vmatprep.subr.bf16.mxu0 0
      %889 = vmatpush1.bf16.msra.mxu0 0
      %890 = vmatprep.subr.bf16.mxu0 0
      %891 = vmatpush1.bf16.msra.mxu0 0
      %892 = vmatprep.subr.bf16.mxu0 0
      %893 = vmatpush1.bf16.msra.mxu0 0
      %894 = vmatprep.subr.bf16.mxu0 0
      %895 = vmatpush1.bf16.msra.mxu0 0
      %896 = vmatprep.mubr.bf16.mxu0 0
      %897 = vmatmul.mubr.bf16.gmra.mrb[0].mxu0 %v814
      %v898 = vpop.f32.mrb[0].mxu0
      %v899 = vadd.f32 %v687, %v898
      %v900 = vpop.f32.mrb[0].mxu0
      %v901 = vpop.f32.mrb[0].mxu0
      %v902 = vadd.f32 %v690, %v901
      %v903 = vpop.f32.mrb[0].mxu0
      %904 = vmatprep.mubr.bf16.mxu0 0
      %905 = vmatmul.mubr.bf16.gmra.mrb[0].mxu0 %v817
      %v906 = vpop.f32.mrb[0].mxu0
      %v907 = vadd.f32 %v695, %v906
      %v908 = vpop.f32.mrb[0].mxu0
      %v909 = vpop.f32.mrb[0].mxu0
      %v910 = vadd.f32 %v698, %v909
      %v911 = vpop.f32.mrb[0].mxu0
      %912 = vmatprep.mubr.bf16.mxu0 0
      %913 = vmatmul.mubr.bf16.gmra.mrb[0].mxu0 %v820
      %v914 = vpop.f32.mrb[0].mxu0
      %v915 = vadd.f32 %v703, %v914
      %v916 = vpop.f32.mrb[0].mxu0
      %v917 = vpop.f32.mrb[0].mxu0
      %v918 = vadd.f32 %v706, %v917
      %v919 = vpop.f32.mrb[0].mxu0
      %920 = vmatprep.mubr.bf16.mxu0 0
      %921 = vmatmul.mubr.bf16.gmra.mrb[0].mxu0 %v823
      %v922 = vpop.f32.mrb[0].mxu0
      %v923 = vadd.f32 %v711, %v922
      %v924 = vpop.f32.mrb[0].mxu0
      %v925 = vpop.f32.mrb[0].mxu0
      %v926 = vadd.f32 %v714, %v925
      %v927 = vpop.f32.mrb[0].mxu0
      %928 = vmatprep.mubr.bf16.mxu0 0
      %929 = vmatmul.mubr.bf16.gmra.mrb[0].mxu0 %v826
      %v930 = vpop.f32.mrb[0].mxu0
      %v931 = vadd.f32 %v719, %v930
      %v932 = vpop.f32.mrb[0].mxu0
      %v933 = vpop.f32.mrb[0].mxu0
      %v934 = vadd.f32 %v722, %v933
      %v935 = vpop.f32.mrb[0].mxu0
      %936 = vmatprep.mubr.bf16.mxu0 0
      %937 = vmatmul.mubr.bf16.gmra.mrb[0].mxu0 %v829
      %v938 = vpop.f32.mrb[0].mxu0
      %v939 = vadd.f32 %v727, %v938
      %v940 = vpop.f32.mrb[0].mxu0
      %v941 = vpop.f32.mrb[0].mxu0
      %v942 = vadd.f32 %v730, %v941
      %v943 = vpop.f32.mrb[0].mxu0
      %944 = vmatprep.mubr.bf16.mxu0 0
      %945 = vmatmul.mubr.bf16.gmra.mrb[0].mxu0 %v832
      %v946 = vpop.f32.mrb[0].mxu0
      %v947 = vadd.f32 %v735, %v946
      %v948 = vpop.f32.mrb[0].mxu0
      %v949 = vpop.f32.mrb[0].mxu0
      %v950 = vadd.f32 %v738, %v949
      %v951 = vpop.f32.mrb[0].mxu0
      %952 = vmatprep.mubr.bf16.mxu0 0
      %953 = vmatmul.mubr.bf16.gmra.mrb[0].mxu0 %v835
      %v954 = vpop.f32.mrb[0].mxu0
      %v955 = vadd.f32 %v743, %v954
      %v956 = vpop.f32.mrb[0].mxu0
      %v957 = vpop.f32.mrb[0].mxu0
      %v958 = vadd.f32 %v746, %v957
      %v959 = vpop.f32.mrb[0].mxu0
      %960 = vmatprep.mubr.bf16.mxu0 0
      %961 = vmatmul.mubr.bf16.gmra.mrb[0].mxu0 %v838
      %v962 = vpop.f32.mrb[0].mxu0
      %v963 = vadd.f32 %v751, %v962
      %v964 = vpop.f32.mrb[0].mxu0
      %v965 = vpop.f32.mrb[0].mxu0
      %v966 = vadd.f32 %v754, %v965
      %v967 = vpop.f32.mrb[0].mxu0
      %968 = vmatprep.mubr.bf16.mxu0 0
      %969 = vmatmul.mubr.bf16.gmra.mrb[0].mxu0 %v841
      %v970 = vpop.f32.mrb[0].mxu0
      %v971 = vadd.f32 %v759, %v970
      %v972 = vpop.f32.mrb[0].mxu0
      %v973 = vpop.f32.mrb[0].mxu0
      %v974 = vadd.f32 %v762, %v973
      %v975 = vpop.f32.mrb[0].mxu0
      %976 = vmatprep.mubr.bf16.mxu0 0
      %977 = vmatmul.mubr.bf16.gmra.mrb[0].mxu0 %v844
      %v978 = vpop.f32.mrb[0].mxu0
      %v979 = vadd.f32 %v767, %v978
      %v980 = vpop.f32.mrb[0].mxu0
      %v981 = vpop.f32.mrb[0].mxu0
      %v982 = vadd.f32 %v770, %v981
      %v983 = vpop.f32.mrb[0].mxu0
      %984 = vmatprep.mubr.bf16.mxu0 0
      %985 = vmatmul.mubr.bf16.gmra.mrb[0].mxu0 %v847
      %v986 = vpop.f32.mrb[0].mxu0
      %v987 = vadd.f32 %v775, %v986
      %v988 = vpop.f32.mrb[0].mxu0
      %v989 = vpop.f32.mrb[0].mxu0
      %v990 = vadd.f32 %v778, %v989
      %v991 = vpop.f32.mrb[0].mxu0
      %992 = vmatprep.mubr.bf16.mxu0 0
      %993 = vmatmul.mubr.bf16.gmra.mrb[0].mxu0 %v850
      %v994 = vpop.f32.mrb[0].mxu0
      %v995 = vadd.f32 %v783, %v994
      %v996 = vpop.f32.mrb[0].mxu0
      %v997 = vpop.f32.mrb[0].mxu0
      %v998 = vadd.f32 %v786, %v997
      %v999 = vpop.f32.mrb[0].mxu0
      %1000 = vmatprep.mubr.bf16.mxu0 0
      %1001 = vmatmul.mubr.bf16.gmra.mrb[0].mxu0 %v853
      %v1002 = vpop.f32.mrb[0].mxu0
      %v1003 = vadd.f32 %v791, %v1002
      %v1004 = vpop.f32.mrb[0].mxu0
      %v1005 = vpop.f32.mrb[0].mxu0
      %v1006 = vadd.f32 %v794, %v1005
      %v1007 = vpop.f32.mrb[0].mxu0
      %1008 = vmatprep.mubr.bf16.mxu0 0
      %1009 = vmatmul.mubr.bf16.gmra.mrb[0].mxu0 %v856
      %v1010 = vpop.f32.mrb[0].mxu0
      %v1011 = vadd.f32 %v799, %v1010
      %v1012 = vpop.f32.mrb[0].mxu0
      %v1013 = vpop.f32.mrb[0].mxu0
      %v1014 = vadd.f32 %v802, %v1013
      %v1015 = vpop.f32.mrb[0].mxu0
      %1016 = vmatprep.mubr.bf16.mxu0 0
      %1017 = vmatmul.mubr.bf16.gmra.mrb[0].mxu0 %v859
      %v1018 = vpop.f32.mrb[0].mxu0
      %v1019 = vadd.f32 %v807, %v1018
      %v1020 = vpop.f32.mrb[0].mxu0
      %v1021 = vpop.f32.mrb[0].mxu0
      %v1022 = vadd.f32 %v810, %v1021
      %v1023 = vpop.f32.mrb[0].mxu0
      %1024 = vdwg.mxu0
      %v1025 = vld [vmem:[#allocation2 + $0x2] sm:$0xff]
      %v1026 = vld [vmem:[#allocation2 + $0xa] sm:$0xff]
      %v1027 = vld [vmem:[#allocation2 + $0x1a] sm:$0xff]
      %v1028 = vld [vmem:[#allocation2 + $0x22] sm:$0xff]
      %v1029 = vld [vmem:[#allocation2 + $0x32] sm:$0xff]
      %v1030 = vld [vmem:[#allocation2 + $0x3a] sm:$0xff]
      %v1031 = vld [vmem:[#allocation2 + $0x4a] sm:$0xff]
      %v1032 = vld [vmem:[#allocation2 + $0x52] sm:$0xff]
      %v1033 = vld [vmem:[#allocation2 + $0x62] sm:$0xff]
      %v1034 = vld [vmem:[#allocation2 + $0x6a] sm:$0xff]
      %v1035 = vld [vmem:[#allocation2 + $0x7a] sm:$0xff]
      %v1036 = vld [vmem:[#allocation2 + $0x82] sm:$0xff]
      %v1037 = vld [vmem:[#allocation2 + $0x92] sm:$0xff]
      %v1038 = vld [vmem:[#allocation2 + $0x9a] sm:$0xff]
      %v1039 = vld [vmem:[#allocation2 + $0xaa] sm:$0xff]
      %v1040 = vld [vmem:[#allocation2 + $0xb2] sm:$0xff]
      %v1041 = vld [vmem:[#allocation2 + $0xc2] sm:$0xff]
      %v1042 = vld [vmem:[#allocation2 + $0xca] sm:$0xff]
      %v1043 = vld [vmem:[#allocation2 + $0xda] sm:$0xff]
      %v1044 = vld [vmem:[#allocation2 + $0xe2] sm:$0xff]
      %v1045 = vld [vmem:[#allocation2 + $0xf2] sm:$0xff]
      %v1046 = vld [vmem:[#allocation2 + $0xfa] sm:$0xff]
      %v1047 = vld [vmem:[#allocation2 + $0x10a] sm:$0xff]
      %v1048 = vld [vmem:[#allocation2 + $0x112] sm:$0xff]
      %v1049 = vld [vmem:[#allocation2 + $0x122] sm:$0xff]
      %v1050 = vld [vmem:[#allocation2 + $0x12a] sm:$0xff]
      %v1051 = vld [vmem:[#allocation2 + $0x13a] sm:$0xff]
      %v1052 = vld [vmem:[#allocation2 + $0x142] sm:$0xff]
      %v1053 = vld [vmem:[#allocation2 + $0x152] sm:$0xff]
      %v1054 = vld [vmem:[#allocation2 + $0x15a] sm:$0xff]
      %v1055 = vld [vmem:[#allocation2 + $0x16a] sm:$0xff]
      %v1056 = vld [vmem:[#allocation2 + $0x172] sm:$0xff]
      %v1057 = vpack.c.bf16 %v1026, %v1025
      %v1058 = vpack.c.bf16 %v1028, %v1027
      %v1059 = vpack.c.bf16 %v1030, %v1029
      %v1060 = vpack.c.bf16 %v1032, %v1031
      %v1061 = vpack.c.bf16 %v1034, %v1033
      %v1062 = vpack.c.bf16 %v1036, %v1035
      %v1063 = vpack.c.bf16 %v1038, %v1037
      %v1064 = vpack.c.bf16 %v1040, %v1039
      %v1065 = vpack.c.bf16 %v1042, %v1041
      %v1066 = vpack.c.bf16 %v1044, %v1043
      %v1067 = vpack.c.bf16 %v1046, %v1045
      %v1068 = vpack.c.bf16 %v1048, %v1047
      %v1069 = vpack.c.bf16 %v1050, %v1049
      %v1070 = vpack.c.bf16 %v1052, %v1051
      %v1071 = vpack.c.bf16 %v1054, %v1053
      %v1072 = vpack.c.bf16 %v1056, %v1055
      %s1073 = scalar_lea.vmem %s3, 4
      %v1074 = vld [vmem:[%s1073] sm:$0x3]
      %v1076 = vsel %vm232, %v1057, 0
      %v1079 = vsel %vm232, %v1058, 0
      %v1082 = vsel %vm232, %v1059, 0
      %v1085 = vsel %vm232, %v1060, 0
      %v1088 = vsel %vm232, %v1061, 0
      %v1091 = vsel %vm232, %v1062, 0
      %v1094 = vsel %vm232, %v1063, 0
      %v1097 = vsel %vm232, %v1064, 0
      %v1100 = vsel %vm232, %v1065, 0
      %v1103 = vsel %vm232, %v1066, 0
      %v1106 = vsel %vm232, %v1067, 0
      %v1109 = vsel %vm232, %v1068, 0
      %v1112 = vsel %vm232, %v1069, 0
      %v1115 = vsel %vm232, %v1070, 0
      %v1118 = vsel %vm232, %v1071, 0
      %v1121 = vsel %vm232, %v1072, 0
      %v1124 = vsel %vm648, %v1074, 0
      %1126 = vmatprep.subr.bf16.mxu0 0
      %1127 = vmatpush1.bf16.msra.mxu0 %v1124
      %1128 = vmatprep.subr.bf16.mxu0 0
      %1129 = vmatpush1.bf16.msra.mxu0 0
      %1130 = vmatprep.subr.bf16.mxu0 0
      %1131 = vmatpush1.bf16.msra.mxu0 0
      %1132 = vmatprep.subr.bf16.mxu0 0
      %1133 = vmatpush1.bf16.msra.mxu0 0
      %1134 = vmatprep.subr.bf16.mxu0 0
      %1135 = vmatpush1.bf16.msra.mxu0 0
      %1136 = vmatprep.subr.bf16.mxu0 0
      %1137 = vmatpush1.bf16.msra.mxu0 0
      %1138 = vmatprep.subr.bf16.mxu0 0
      %1139 = vmatpush1.bf16.msra.mxu0 0
      %1140 = vmatprep.subr.bf16.mxu0 0
      %1141 = vmatpush1.bf16.msra.mxu0 0
      %1142 = vmatprep.subr.bf16.mxu0 0
      %1143 = vmatpush1.bf16.msra.mxu0 0
      %1144 = vmatprep.subr.bf16.mxu0 0
      %1145 = vmatpush1.bf16.msra.mxu0 0
      %1146 = vmatprep.subr.bf16.mxu0 0
      %1147 = vmatpush1.bf16.msra.mxu0 0
      %1148 = vmatprep.subr.bf16.mxu0 0
      %1149 = vmatpush1.bf16.msra.mxu0 0
      %1150 = vmatprep.subr.bf16.mxu0 0
      %1151 = vmatpush1.bf16.msra.mxu0 0
      %1152 = vmatprep.subr.bf16.mxu0 0
      %1153 = vmatpush1.bf16.msra.mxu0 0
      %1154 = vmatprep.subr.bf16.mxu0 0
      %1155 = vmatpush1.bf16.msra.mxu0 0
      %1156 = vmatprep.subr.bf16.mxu0 0
      %1157 = vmatpush1.bf16.msra.mxu0 0
      %1158 = vmatprep.mubr.bf16.mxu0 0
      %1159 = vmatmul.mubr.bf16.gmra.mrb[0].mxu0 %v1076
      %v1160 = vpop.f32.mrb[0].mxu0
      %v1161 = vadd.f32 0.0, %v1160
      %v1162 = vpop.f32.mrb[0].mxu0
      %v1163 = vpop.f32.mrb[0].mxu0
      %v1164 = vadd.f32 0.0, %v1163
      %v1165 = vpop.f32.mrb[0].mxu0
      %1166 = vmatprep.mubr.bf16.mxu0 0
      %1167 = vmatmul.mubr.bf16.gmra.mrb[0].mxu0 %v1079
      %v1168 = vpop.f32.mrb[0].mxu0
      %v1169 = vadd.f32 0.0, %v1168
      %v1170 = vpop.f32.mrb[0].mxu0
      %v1171 = vpop.f32.mrb[0].mxu0
      %v1172 = vadd.f32 0.0, %v1171
      %v1173 = vpop.f32.mrb[0].mxu0
      %1174 = vmatprep.mubr.bf16.mxu0 0
      %1175 = vmatmul.mubr.bf16.gmra.mrb[0].mxu0 %v1082
      %v1176 = vpop.f32.mrb[0].mxu0
      %v1177 = vadd.f32 0.0, %v1176
      %v1178 = vpop.f32.mrb[0].mxu0
      %v1179 = vpop.f32.mrb[0].mxu0
      %v1180 = vadd.f32 0.0, %v1179
      %v1181 = vpop.f32.mrb[0].mxu0
      %1182 = vmatprep.mubr.bf16.mxu0 0
      %1183 = vmatmul.mubr.bf16.gmra.mrb[0].mxu0 %v1085
      %v1184 = vpop.f32.mrb[0].mxu0
      %v1185 = vadd.f32 0.0, %v1184
      %v1186 = vpop.f32.mrb[0].mxu0
      %v1187 = vpop.f32.mrb[0].mxu0
      %v1188 = vadd.f32 0.0, %v1187
      %v1189 = vpop.f32.mrb[0].mxu0
      %1190 = vmatprep.mubr.bf16.mxu0 0
      %1191 = vmatmul.mubr.bf16.gmra.mrb[0].mxu0 %v1088
      %v1192 = vpop.f32.mrb[0].mxu0
      %v1193 = vadd.f32 0.0, %v1192
      %v1194 = vpop.f32.mrb[0].mxu0
      %v1195 = vpop.f32.mrb[0].mxu0
      %v1196 = vadd.f32 0.0, %v1195
      %v1197 = vpop.f32.mrb[0].mxu0
      %1198 = vmatprep.mubr.bf16.mxu0 0
      %1199 = vmatmul.mubr.bf16.gmra.mrb[0].mxu0 %v1091
      %v1200 = vpop.f32.mrb[0].mxu0
      %v1201 = vadd.f32 0.0, %v1200
      %v1202 = vpop.f32.mrb[0].mxu0
      %v1203 = vpop.f32.mrb[0].mxu0
      %v1204 = vadd.f32 0.0, %v1203
      %v1205 = vpop.f32.mrb[0].mxu0
      %1206 = vmatprep.mubr.bf16.mxu0 0
      %1207 = vmatmul.mubr.bf16.gmra.mrb[0].mxu0 %v1094
      %v1208 = vpop.f32.mrb[0].mxu0
      %v1209 = vadd.f32 0.0, %v1208
      %v1210 = vpop.f32.mrb[0].mxu0
      %v1211 = vpop.f32.mrb[0].mxu0
      %v1212 = vadd.f32 0.0, %v1211
      %v1213 = vpop.f32.mrb[0].mxu0
      %1214 = vmatprep.mubr.bf16.mxu0 0
      %1215 = vmatmul.mubr.bf16.gmra.mrb[0].mxu0 %v1097
      %v1216 = vpop.f32.mrb[0].mxu0
      %v1217 = vadd.f32 0.0, %v1216
      %v1218 = vpop.f32.mrb[0].mxu0
      %v1219 = vpop.f32.mrb[0].mxu0
      %v1220 = vadd.f32 0.0, %v1219
      %v1221 = vpop.f32.mrb[0].mxu0
      %1222 = vmatprep.mubr.bf16.mxu0 0
      %1223 = vmatmul.mubr.bf16.gmra.mrb[0].mxu0 %v1100
      %v1224 = vpop.f32.mrb[0].mxu0
      %v1225 = vadd.f32 0.0, %v1224
      %v1226 = vpop.f32.mrb[0].mxu0
      %v1227 = vpop.f32.mrb[0].mxu0
      %v1228 = vadd.f32 0.0, %v1227
      %v1229 = vpop.f32.mrb[0].mxu0
      %1230 = vmatprep.mubr.bf16.mxu0 0
      %1231 = vmatmul.mubr.bf16.gmra.mrb[0].mxu0 %v1103
      %v1232 = vpop.f32.mrb[0].mxu0
      %v1233 = vadd.f32 0.0, %v1232
      %v1234 = vpop.f32.mrb[0].mxu0
      %v1235 = vpop.f32.mrb[0].mxu0
      %v1236 = vadd.f32 0.0, %v1235
      %v1237 = vpop.f32.mrb[0].mxu0
      %1238 = vmatprep.mubr.bf16.mxu0 0
      %1239 = vmatmul.mubr.bf16.gmra.mrb[0].mxu0 %v1106
      %v1240 = vpop.f32.mrb[0].mxu0
      %v1241 = vadd.f32 0.0, %v1240
      %v1242 = vpop.f32.mrb[0].mxu0
      %v1243 = vpop.f32.mrb[0].mxu0
      %v1244 = vadd.f32 0.0, %v1243
      %v1245 = vpop.f32.mrb[0].mxu0
      %1246 = vmatprep.mubr.bf16.mxu0 0
      %1247 = vmatmul.mubr.bf16.gmra.mrb[0].mxu0 %v1109
      %v1248 = vpop.f32.mrb[0].mxu0
      %v1249 = vadd.f32 0.0, %v1248
      %v1250 = vpop.f32.mrb[0].mxu0
      %v1251 = vpop.f32.mrb[0].mxu0
      %v1252 = vadd.f32 0.0, %v1251
      %v1253 = vpop.f32.mrb[0].mxu0
      %1254 = vmatprep.mubr.bf16.mxu0 0
      %1255 = vmatmul.mubr.bf16.gmra.mrb[0].mxu0 %v1112
      %v1256 = vpop.f32.mrb[0].mxu0
      %v1257 = vadd.f32 0.0, %v1256
      %v1258 = vpop.f32.mrb[0].mxu0
      %v1259 = vpop.f32.mrb[0].mxu0
      %v1260 = vadd.f32 0.0, %v1259
      %v1261 = vpop.f32.mrb[0].mxu0
      %1262 = vmatprep.mubr.bf16.mxu0 0
      %1263 = vmatmul.mubr.bf16.gmra.mrb[0].mxu0 %v1115
      %v1264 = vpop.f32.mrb[0].mxu0
      %v1265 = vadd.f32 0.0, %v1264
      %v1266 = vpop.f32.mrb[0].mxu0
      %v1267 = vpop.f32.mrb[0].mxu0
      %v1268 = vadd.f32 0.0, %v1267
      %v1269 = vpop.f32.mrb[0].mxu0
      %1270 = vmatprep.mubr.bf16.mxu0 0
      %1271 = vmatmul.mubr.bf16.gmra.mrb[0].mxu0 %v1118
      %v1272 = vpop.f32.mrb[0].mxu0
      %v1273 = vadd.f32 0.0, %v1272
      %v1274 = vpop.f32.mrb[0].mxu0
      %v1275 = vpop.f32.mrb[0].mxu0
      %v1276 = vadd.f32 0.0, %v1275
      %v1277 = vpop.f32.mrb[0].mxu0
      %1278 = vmatprep.mubr.bf16.mxu0 0
      %1279 = vmatmul.mubr.bf16.gmra.mrb[0].mxu0 %v1121
      %v1280 = vpop.f32.mrb[0].mxu0
      %v1281 = vadd.f32 0.0, %v1280
      %v1282 = vpop.f32.mrb[0].mxu0
      %v1283 = vpop.f32.mrb[0].mxu0
      %v1284 = vadd.f32 0.0, %v1283
      %v1285 = vpop.f32.mrb[0].mxu0
      %1286 = vdwg.mxu0
      %v1287 = vadd.f32 %v899, %v1161
      %v1288 = vadd.f32 %v902, %v1164
      %v1289 = vadd.f32 %v907, %v1169
      %v1290 = vadd.f32 %v910, %v1172
      %v1291 = vadd.f32 %v915, %v1177
      %v1292 = vadd.f32 %v918, %v1180
      %v1293 = vadd.f32 %v923, %v1185
      %v1294 = vadd.f32 %v926, %v1188
      %v1295 = vadd.f32 %v931, %v1193
      %v1296 = vadd.f32 %v934, %v1196
      %v1297 = vadd.f32 %v939, %v1201
      %v1298 = vadd.f32 %v942, %v1204
      %v1299 = vadd.f32 %v947, %v1209
      %v1300 = vadd.f32 %v950, %v1212
      %v1301 = vadd.f32 %v955, %v1217
      %v1302 = vadd.f32 %v958, %v1220
      %v1303 = vadd.f32 %v963, %v1225
      %v1304 = vadd.f32 %v966, %v1228
      %v1305 = vadd.f32 %v971, %v1233
      %v1306 = vadd.f32 %v974, %v1236
      %v1307 = vadd.f32 %v979, %v1241
      %v1308 = vadd.f32 %v982, %v1244
      %v1309 = vadd.f32 %v987, %v1249
      %v1310 = vadd.f32 %v990, %v1252
      %v1311 = vadd.f32 %v995, %v1257
      %v1312 = vadd.f32 %v998, %v1260
      %v1313 = vadd.f32 %v1003, %v1265
      %v1314 = vadd.f32 %v1006, %v1268
      %v1315 = vadd.f32 %v1011, %v1273
      %v1316 = vadd.f32 %v1014, %v1276
      %v1317 = vadd.f32 %v1019, %v1281
      %v1318 = vadd.f32 %v1022, %v1284
      %v1319 = vld [vmem:[%s240] sm:$0xff]
      %v1320 = vld [vmem:[%s240 + $0x8] sm:$0xff]
      %v1321 = vld [vmem:[%s240 + $0x18] sm:$0xff]
      %v1322 = vld [vmem:[%s240 + $0x20] sm:$0xff]
      %v1323 = vld [vmem:[%s240 + $0x30] sm:$0xff]
      %v1324 = vld [vmem:[%s240 + $0x38] sm:$0xff]
      %v1325 = vld [vmem:[%s240 + $0x48] sm:$0xff]
      %v1326 = vld [vmem:[%s240 + $0x50] sm:$0xff]
      %v1327 = vld [vmem:[%s240 + $0x60] sm:$0xff]
      %v1328 = vld [vmem:[%s240 + $0x68] sm:$0xff]
      %v1329 = vld [vmem:[%s240 + $0x78] sm:$0xff]
      %v1330 = vld [vmem:[%s240 + $0x80] sm:$0xff]
      %v1331 = vld [vmem:[%s240 + $0x90] sm:$0xff]
      %v1332 = vld [vmem:[%s240 + $0x98] sm:$0xff]
      %v1333 = vld [vmem:[%s240 + $0xa8] sm:$0xff]
      %v1334 = vld [vmem:[%s240 + $0xb0] sm:$0xff]
      %v1335 = vld [vmem:[%s240 + $0xc0] sm:$0xff]
      %v1336 = vld [vmem:[%s240 + $0xc8] sm:$0xff]
      %v1337 = vld [vmem:[%s240 + $0xd8] sm:$0xff]
      %v1338 = vld [vmem:[%s240 + $0xe0] sm:$0xff]
      %v1339 = vld [vmem:[%s240 + $0xf0] sm:$0xff]
      %v1340 = vld [vmem:[%s240 + $0xf8] sm:$0xff]
      %v1341 = vld [vmem:[%s240 + $0x108] sm:$0xff]
      %v1342 = vld [vmem:[%s240 + $0x110] sm:$0xff]
      %v1343 = vld [vmem:[%s240 + $0x120] sm:$0xff]
      %v1344 = vld [vmem:[%s240 + $0x128] sm:$0xff]
      %v1345 = vld [vmem:[%s240 + $0x138] sm:$0xff]
      %v1346 = vld [vmem:[%s240 + $0x140] sm:$0xff]
      %v1347 = vld [vmem:[%s240 + $0x150] sm:$0xff]
      %v1348 = vld [vmem:[%s240 + $0x158] sm:$0xff]
      %v1349 = vld [vmem:[%s240 + $0x168] sm:$0xff]
      %v1350 = vld [vmem:[%s240 + $0x170] sm:$0xff]
      %v1351 = vpack.c.bf16 %v1320, %v1319
      %v1352 = vpack.c.bf16 %v1322, %v1321
      %v1353 = vpack.c.bf16 %v1324, %v1323
      %v1354 = vpack.c.bf16 %v1326, %v1325
      %v1355 = vpack.c.bf16 %v1328, %v1327
      %v1356 = vpack.c.bf16 %v1330, %v1329
      %v1357 = vpack.c.bf16 %v1332, %v1331
      %v1358 = vpack.c.bf16 %v1334, %v1333
      %v1359 = vpack.c.bf16 %v1336, %v1335
      %v1360 = vpack.c.bf16 %v1338, %v1337
      %v1361 = vpack.c.bf16 %v1340, %v1339
      %v1362 = vpack.c.bf16 %v1342, %v1341
      %v1363 = vpack.c.bf16 %v1344, %v1343
      %v1364 = vpack.c.bf16 %v1346, %v1345
      %v1365 = vpack.c.bf16 %v1348, %v1347
      %v1366 = vpack.c.bf16 %v1350, %v1349
      %s1367 = scalar_lea.vmem %s3, 6
      %v1368 = vld [vmem:[%s1367] sm:$0x3]
      %v1370 = vsel %vm232, %v1351, 0
      %v1373 = vsel %vm232, %v1352, 0
      %v1376 = vsel %vm232, %v1353, 0
      %v1379 = vsel %vm232, %v1354, 0
      %v1382 = vsel %vm232, %v1355, 0
      %v1385 = vsel %vm232, %v1356, 0
      %v1388 = vsel %vm232, %v1357, 0
      %v1391 = vsel %vm232, %v1358, 0
      %v1394 = vsel %vm232, %v1359, 0
      %v1397 = vsel %vm232, %v1360, 0
      %v1400 = vsel %vm232, %v1361, 0
      %v1403 = vsel %vm232, %v1362, 0
      %v1406 = vsel %vm232, %v1363, 0
      %v1409 = vsel %vm232, %v1364, 0
      %v1412 = vsel %vm232, %v1365, 0
      %v1415 = vsel %vm232, %v1366, 0
      %v1418 = vsel %vm648, %v1368, 0
      %1420 = vmatprep.subr.bf16.mxu0 0
      %1421 = vmatpush1.bf16.msra.mxu0 %v1418
      %1422 = vmatprep.subr.bf16.mxu0 0
      %1423 = vmatpush1.bf16.msra.mxu0 0
      %1424 = vmatprep.subr.bf16.mxu0 0
      %1425 = vmatpush1.bf16.msra.mxu0 0
      %1426 = vmatprep.subr.bf16.mxu0 0
      %1427 = vmatpush1.bf16.msra.mxu0 0
      %1428 = vmatprep.subr.bf16.mxu0 0
      %1429 = vmatpush1.bf16.msra.mxu0 0
      %1430 = vmatprep.subr.bf16.mxu0 0
      %1431 = vmatpush1.bf16.msra.mxu0 0
      %1432 = vmatprep.subr.bf16.mxu0 0
      %1433 = vmatpush1.bf16.msra.mxu0 0
      %1434 = vmatprep.subr.bf16.mxu0 0
      %1435 = vmatpush1.bf16.msra.mxu0 0
      %1436 = vmatprep.subr.bf16.mxu0 0
      %1437 = vmatpush1.bf16.msra.mxu0 0
      %1438 = vmatprep.subr.bf16.mxu0 0
      %1439 = vmatpush1.bf16.msra.mxu0 0
      %1440 = vmatprep.subr.bf16.mxu0 0
      %1441 = vmatpush1.bf16.msra.mxu0 0
      %1442 = vmatprep.subr.bf16.mxu0 0
      %1443 = vmatpush1.bf16.msra.mxu0 0
      %1444 = vmatprep.subr.bf16.mxu0 0
      %1445 = vmatpush1.bf16.msra.mxu0 0
      %1446 = vmatprep.subr.bf16.mxu0 0
      %1447 = vmatpush1.bf16.msra.mxu0 0
      %1448 = vmatprep.subr.bf16.mxu0 0
      %1449 = vmatpush1.bf16.msra.mxu0 0
      %1450 = vmatprep.subr.bf16.mxu0 0
      %1451 = vmatpush1.bf16.msra.mxu0 0
      %1452 = vmatprep.mubr.bf16.mxu0 0
      %1453 = vmatmul.mubr.bf16.gmra.mrb[0].mxu0 %v1370
      %v1454 = vpop.f32.mrb[0].mxu0
      %v1455 = vadd.f32 0.0, %v1454
      %v1456 = vpop.f32.mrb[0].mxu0
      %v1457 = vpop.f32.mrb[0].mxu0
      %v1458 = vadd.f32 0.0, %v1457
      %v1459 = vpop.f32.mrb[0].mxu0
      %1460 = vmatprep.mubr.bf16.mxu0 0
      %1461 = vmatmul.mubr.bf16.gmra.mrb[0].mxu0 %v1373
      %v1462 = vpop.f32.mrb[0].mxu0
      %v1463 = vadd.f32 0.0, %v1462
      %v1464 = vpop.f32.mrb[0].mxu0
      %v1465 = vpop.f32.mrb[0].mxu0
      %v1466 = vadd.f32 0.0, %v1465
      %v1467 = vpop.f32.mrb[0].mxu0
      %1468 = vmatprep.mubr.bf16.mxu0 0
      %1469 = vmatmul.mubr.bf16.gmra.mrb[0].mxu0 %v1376
      %v1470 = vpop.f32.mrb[0].mxu0
      %v1471 = vadd.f32 0.0, %v1470
      %v1472 = vpop.f32.mrb[0].mxu0
      %v1473 = vpop.f32.mrb[0].mxu0
      %v1474 = vadd.f32 0.0, %v1473
      %v1475 = vpop.f32.mrb[0].mxu0
      %1476 = vmatprep.mubr.bf16.mxu0 0
      %1477 = vmatmul.mubr.bf16.gmra.mrb[0].mxu0 %v1379
      %v1478 = vpop.f32.mrb[0].mxu0
      %v1479 = vadd.f32 0.0, %v1478
      %v1480 = vpop.f32.mrb[0].mxu0
      %v1481 = vpop.f32.mrb[0].mxu0
      %v1482 = vadd.f32 0.0, %v1481
      %v1483 = vpop.f32.mrb[0].mxu0
      %1484 = vmatprep.mubr.bf16.mxu0 0
      %1485 = vmatmul.mubr.bf16.gmra.mrb[0].mxu0 %v1382
      %v1486 = vpop.f32.mrb[0].mxu0
      %v1487 = vadd.f32 0.0, %v1486
      %v1488 = vpop.f32.mrb[0].mxu0
      %v1489 = vpop.f32.mrb[0].mxu0
      %v1490 = vadd.f32 0.0, %v1489
      %v1491 = vpop.f32.mrb[0].mxu0
      %1492 = vmatprep.mubr.bf16.mxu0 0
      %1493 = vmatmul.mubr.bf16.gmra.mrb[0].mxu0 %v1385
      %v1494 = vpop.f32.mrb[0].mxu0
      %v1495 = vadd.f32 0.0, %v1494
      %v1496 = vpop.f32.mrb[0].mxu0
      %v1497 = vpop.f32.mrb[0].mxu0
      %v1498 = vadd.f32 0.0, %v1497
      %v1499 = vpop.f32.mrb[0].mxu0
      %1500 = vmatprep.mubr.bf16.mxu0 0
      %1501 = vmatmul.mubr.bf16.gmra.mrb[0].mxu0 %v1388
      %v1502 = vpop.f32.mrb[0].mxu0
      %v1503 = vadd.f32 0.0, %v1502
      %v1504 = vpop.f32.mrb[0].mxu0
      %v1505 = vpop.f32.mrb[0].mxu0
      %v1506 = vadd.f32 0.0, %v1505
      %v1507 = vpop.f32.mrb[0].mxu0
      %1508 = vmatprep.mubr.bf16.mxu0 0
      %1509 = vmatmul.mubr.bf16.gmra.mrb[0].mxu0 %v1391
      %v1510 = vpop.f32.mrb[0].mxu0
      %v1511 = vadd.f32 0.0, %v1510
      %v1512 = vpop.f32.mrb[0].mxu0
      %v1513 = vpop.f32.mrb[0].mxu0
      %v1514 = vadd.f32 0.0, %v1513
      %v1515 = vpop.f32.mrb[0].mxu0
      %1516 = vmatprep.mubr.bf16.mxu0 0
      %1517 = vmatmul.mubr.bf16.gmra.mrb[0].mxu0 %v1394
      %v1518 = vpop.f32.mrb[0].mxu0
      %v1519 = vadd.f32 0.0, %v1518
      %v1520 = vpop.f32.mrb[0].mxu0
      %v1521 = vpop.f32.mrb[0].mxu0
      %v1522 = vadd.f32 0.0, %v1521
      %v1523 = vpop.f32.mrb[0].mxu0
      %1524 = vmatprep.mubr.bf16.mxu0 0
      %1525 = vmatmul.mubr.bf16.gmra.mrb[0].mxu0 %v1397
      %v1526 = vpop.f32.mrb[0].mxu0
      %v1527 = vadd.f32 0.0, %v1526
      %v1528 = vpop.f32.mrb[0].mxu0
      %v1529 = vpop.f32.mrb[0].mxu0
      %v1530 = vadd.f32 0.0, %v1529
      %v1531 = vpop.f32.mrb[0].mxu0
      %1532 = vmatprep.mubr.bf16.mxu0 0
      %1533 = vmatmul.mubr.bf16.gmra.mrb[0].mxu0 %v1400
      %v1534 = vpop.f32.mrb[0].mxu0
      %v1535 = vadd.f32 0.0, %v1534
      %v1536 = vpop.f32.mrb[0].mxu0
      %v1537 = vpop.f32.mrb[0].mxu0
      %v1538 = vadd.f32 0.0, %v1537
      %v1539 = vpop.f32.mrb[0].mxu0
      %1540 = vmatprep.mubr.bf16.mxu0 0
      %1541 = vmatmul.mubr.bf16.gmra.mrb[0].mxu0 %v1403
      %v1542 = vpop.f32.mrb[0].mxu0
      %v1543 = vadd.f32 0.0, %v1542
      %v1544 = vpop.f32.mrb[0].mxu0
      %v1545 = vpop.f32.mrb[0].mxu0
      %v1546 = vadd.f32 0.0, %v1545
      %v1547 = vpop.f32.mrb[0].mxu0
      %1548 = vmatprep.mubr.bf16.mxu0 0
      %1549 = vmatmul.mubr.bf16.gmra.mrb[0].mxu0 %v1406
      %v1550 = vpop.f32.mrb[0].mxu0
      %v1551 = vadd.f32 0.0, %v1550
      %v1552 = vpop.f32.mrb[0].mxu0
      %v1553 = vpop.f32.mrb[0].mxu0
      %v1554 = vadd.f32 0.0, %v1553
      %v1555 = vpop.f32.mrb[0].mxu0
      %1556 = vmatprep.mubr.bf16.mxu0 0
      %1557 = vmatmul.mubr.bf16.gmra.mrb[0].mxu0 %v1409
      %v1558 = vpop.f32.mrb[0].mxu0
      %v1559 = vadd.f32 0.0, %v1558
      %v1560 = vpop.f32.mrb[0].mxu0
      %v1561 = vpop.f32.mrb[0].mxu0
      %v1562 = vadd.f32 0.0, %v1561
      %v1563 = vpop.f32.mrb[0].mxu0
      %1564 = vmatprep.mubr.bf16.mxu0 0
      %1565 = vmatmul.mubr.bf16.gmra.mrb[0].mxu0 %v1412
      %v1566 = vpop.f32.mrb[0].mxu0
      %v1567 = vadd.f32 0.0, %v1566
      %v1568 = vpop.f32.mrb[0].mxu0
      %v1569 = vpop.f32.mrb[0].mxu0
      %v1570 = vadd.f32 0.0, %v1569
      %v1571 = vpop.f32.mrb[0].mxu0
      %1572 = vmatprep.mubr.bf16.mxu0 0
      %1573 = vmatmul.mubr.bf16.gmra.mrb[0].mxu0 %v1415
      %v1574 = vpop.f32.mrb[0].mxu0
      %v1575 = vadd.f32 0.0, %v1574
      %v1576 = vpop.f32.mrb[0].mxu0
      %v1577 = vpop.f32.mrb[0].mxu0
      %v1578 = vadd.f32 0.0, %v1577
      %v1579 = vpop.f32.mrb[0].mxu0
      %1580 = vdwg.mxu0
      %v1581 = vadd.f32 %v1287, %v1455
      %v1582 = vadd.f32 %v1288, %v1458
      %v1583 = vadd.f32 %v1289, %v1463
      %v1584 = vadd.f32 %v1290, %v1466
      %v1585 = vadd.f32 %v1291, %v1471
      %v1586 = vadd.f32 %v1292, %v1474
      %v1587 = vadd.f32 %v1293, %v1479
      %v1588 = vadd.f32 %v1294, %v1482
      %v1589 = vadd.f32 %v1295, %v1487
      %v1590 = vadd.f32 %v1296, %v1490
      %v1591 = vadd.f32 %v1297, %v1495
      %v1592 = vadd.f32 %v1298, %v1498
      %v1593 = vadd.f32 %v1299, %v1503
      %v1594 = vadd.f32 %v1300, %v1506
      %v1595 = vadd.f32 %v1301, %v1511
      %v1596 = vadd.f32 %v1302, %v1514
      %v1597 = vadd.f32 %v1303, %v1519
      %v1598 = vadd.f32 %v1304, %v1522
      %v1599 = vadd.f32 %v1305, %v1527
      %v1600 = vadd.f32 %v1306, %v1530
      %v1601 = vadd.f32 %v1307, %v1535
      %v1602 = vadd.f32 %v1308, %v1538
      %v1603 = vadd.f32 %v1309, %v1543
      %v1604 = vadd.f32 %v1310, %v1546
      %v1605 = vadd.f32 %v1311, %v1551
      %v1606 = vadd.f32 %v1312, %v1554
      %v1607 = vadd.f32 %v1313, %v1559
      %v1608 = vadd.f32 %v1314, %v1562
      %v1609 = vadd.f32 %v1315, %v1567
      %v1610 = vadd.f32 %v1316, %v1570
      %v1611 = vadd.f32 %v1317, %v1575
      %v1612 = vadd.f32 %v1318, %v1578
      %v1613 = vld [vmem:[%s240 + $0x1] sm:$0xff]
      %v1614 = vld [vmem:[%s240 + $0x9] sm:$0xff]
      %v1615 = vld [vmem:[%s240 + $0x19] sm:$0xff]
      %v1616 = vld [vmem:[%s240 + $0x21] sm:$0xff]
      %v1617 = vld [vmem:[%s240 + $0x31] sm:$0xff]
      %v1618 = vld [vmem:[%s240 + $0x39] sm:$0xff]
      %v1619 = vld [vmem:[%s240 + $0x49] sm:$0xff]
      %v1620 = vld [vmem:[%s240 + $0x51] sm:$0xff]
      %v1621 = vld [vmem:[%s240 + $0x61] sm:$0xff]
      %v1622 = vld [vmem:[%s240 + $0x69] sm:$0xff]
      %v1623 = vld [vmem:[%s240 + $0x79] sm:$0xff]
      %v1624 = vld [vmem:[%s240 + $0x81] sm:$0xff]
      %v1625 = vld [vmem:[%s240 + $0x91] sm:$0xff]
      %v1626 = vld [vmem:[%s240 + $0x99] sm:$0xff]
      %v1627 = vld [vmem:[%s240 + $0xa9] sm:$0xff]
      %v1628 = vld [vmem:[%s240 + $0xb1] sm:$0xff]
      %v1629 = vld [vmem:[%s240 + $0xc1] sm:$0xff]
      %v1630 = vld [vmem:[%s240 + $0xc9] sm:$0xff]
      %v1631 = vld [vmem:[%s240 + $0xd9] sm:$0xff]
      %v1632 = vld [vmem:[%s240 + $0xe1] sm:$0xff]
      %v1633 = vld [vmem:[%s240 + $0xf1] sm:$0xff]
      %v1634 = vld [vmem:[%s240 + $0xf9] sm:$0xff]
      %v1635 = vld [vmem:[%s240 + $0x109] sm:$0xff]
      %v1636 = vld [vmem:[%s240 + $0x111] sm:$0xff]
      %v1637 = vld [vmem:[%s240 + $0x121] sm:$0xff]
      %v1638 = vld [vmem:[%s240 + $0x129] sm:$0xff]
      %v1639 = vld [vmem:[%s240 + $0x139] sm:$0xff]
      %v1640 = vld [vmem:[%s240 + $0x141] sm:$0xff]
      %v1641 = vld [vmem:[%s240 + $0x151] sm:$0xff]
      %v1642 = vld [vmem:[%s240 + $0x159] sm:$0xff]
      %v1643 = vld [vmem:[%s240 + $0x169] sm:$0xff]
      %v1644 = vld [vmem:[%s240 + $0x171] sm:$0xff]
      %v1645 = vpack.c.bf16 %v1614, %v1613
      %v1646 = vpack.c.bf16 %v1616, %v1615
      %v1647 = vpack.c.bf16 %v1618, %v1617
      %v1648 = vpack.c.bf16 %v1620, %v1619
      %v1649 = vpack.c.bf16 %v1622, %v1621
      %v1650 = vpack.c.bf16 %v1624, %v1623
      %v1651 = vpack.c.bf16 %v1626, %v1625
      %v1652 = vpack.c.bf16 %v1628, %v1627
      %v1653 = vpack.c.bf16 %v1630, %v1629
      %v1654 = vpack.c.bf16 %v1632, %v1631
      %v1655 = vpack.c.bf16 %v1634, %v1633
      %v1656 = vpack.c.bf16 %v1636, %v1635
      %v1657 = vpack.c.bf16 %v1638, %v1637
      %v1658 = vpack.c.bf16 %v1640, %v1639
      %v1659 = vpack.c.bf16 %v1642, %v1641
      %v1660 = vpack.c.bf16 %v1644, %v1643
      %s1661 = scalar_lea.vmem %s3, 8
      %v1662 = vld [vmem:[%s1661] sm:$0x3]
      %v1664 = vsel %vm232, %v1645, 0
      %v1667 = vsel %vm232, %v1646, 0
      %v1670 = vsel %vm232, %v1647, 0
      %v1673 = vsel %vm232, %v1648, 0
      %v1676 = vsel %vm232, %v1649, 0
      %v1679 = vsel %vm232, %v1650, 0
      %v1682 = vsel %vm232, %v1651, 0
      %v1685 = vsel %vm232, %v1652, 0
      %v1688 = vsel %vm232, %v1653, 0
      %v1691 = vsel %vm232, %v1654, 0
      %v1694 = vsel %vm232, %v1655, 0
      %v1697 = vsel %vm232, %v1656, 0
      %v1700 = vsel %vm232, %v1657, 0
      %v1703 = vsel %vm232, %v1658, 0
      %v1706 = vsel %vm232, %v1659, 0
      %v1709 = vsel %vm232, %v1660, 0
      %v1712 = vsel %vm648, %v1662, 0
      %1714 = vmatprep.subr.bf16.mxu0 0
      %1715 = vmatpush1.bf16.msra.mxu0 %v1712
      %1716 = vmatprep.subr.bf16.mxu0 0
      %1717 = vmatpush1.bf16.msra.mxu0 0
      %1718 = vmatprep.subr.bf16.mxu0 0
      %1719 = vmatpush1.bf16.msra.mxu0 0
      %1720 = vmatprep.subr.bf16.mxu0 0
      %1721 = vmatpush1.bf16.msra.mxu0 0
      %1722 = vmatprep.subr.bf16.mxu0 0
      %1723 = vmatpush1.bf16.msra.mxu0 0
      %1724 = vmatprep.subr.bf16.mxu0 0
      %1725 = vmatpush1.bf16.msra.mxu0 0
      %1726 = vmatprep.subr.bf16.mxu0 0
      %1727 = vmatpush1.bf16.msra.mxu0 0
      %1728 = vmatprep.subr.bf16.mxu0 0
      %1729 = vmatpush1.bf16.msra.mxu0 0
      %1730 = vmatprep.subr.bf16.mxu0 0
      %1731 = vmatpush1.bf16.msra.mxu0 0
      %1732 = vmatprep.subr.bf16.mxu0 0
      %1733 = vmatpush1.bf16.msra.mxu0 0
      %1734 = vmatprep.subr.bf16.mxu0 0
      %1735 = vmatpush1.bf16.msra.mxu0 0
      %1736 = vmatprep.subr.bf16.mxu0 0
      %1737 = vmatpush1.bf16.msra.mxu0 0
      %1738 = vmatprep.subr.bf16.mxu0 0
      %1739 = vmatpush1.bf16.msra.mxu0 0
      %1740 = vmatprep.subr.bf16.mxu0 0
      %1741 = vmatpush1.bf16.msra.mxu0 0
      %1742 = vmatprep.subr.bf16.mxu0 0
      %1743 = vmatpush1.bf16.msra.mxu0 0
      %1744 = vmatprep.subr.bf16.mxu0 0
      %1745 = vmatpush1.bf16.msra.mxu0 0
      %1746 = vmatprep.mubr.bf16.mxu0 0
      %1747 = vmatmul.mubr.bf16.gmra.mrb[0].mxu0 %v1664
      %v1748 = vpop.f32.mrb[0].mxu0
      %v1749 = vadd.f32 0.0, %v1748
      %v1750 = vpop.f32.mrb[0].mxu0
      %v1751 = vpop.f32.mrb[0].mxu0
      %v1752 = vadd.f32 0.0, %v1751
      %v1753 = vpop.f32.mrb[0].mxu0
      %1754 = vmatprep.mubr.bf16.mxu0 0
      %1755 = vmatmul.mubr.bf16.gmra.mrb[0].mxu0 %v1667
      %v1756 = vpop.f32.mrb[0].mxu0
      %v1757 = vadd.f32 0.0, %v1756
      %v1758 = vpop.f32.mrb[0].mxu0
      %v1759 = vpop.f32.mrb[0].mxu0
      %v1760 = vadd.f32 0.0, %v1759
      %v1761 = vpop.f32.mrb[0].mxu0
      %1762 = vmatprep.mubr.bf16.mxu0 0
      %1763 = vmatmul.mubr.bf16.gmra.mrb[0].mxu0 %v1670
      %v1764 = vpop.f32.mrb[0].mxu0
      %v1765 = vadd.f32 0.0, %v1764
      %v1766 = vpop.f32.mrb[0].mxu0
      %v1767 = vpop.f32.mrb[0].mxu0
      %v1768 = vadd.f32 0.0, %v1767
      %v1769 = vpop.f32.mrb[0].mxu0
      %1770 = vmatprep.mubr.bf16.mxu0 0
      %1771 = vmatmul.mubr.bf16.gmra.mrb[0].mxu0 %v1673
      %v1772 = vpop.f32.mrb[0].mxu0
      %v1773 = vadd.f32 0.0, %v1772
      %v1774 = vpop.f32.mrb[0].mxu0
      %v1775 = vpop.f32.mrb[0].mxu0
      %v1776 = vadd.f32 0.0, %v1775
      %v1777 = vpop.f32.mrb[0].mxu0
      %1778 = vmatprep.mubr.bf16.mxu0 0
      %1779 = vmatmul.mubr.bf16.gmra.mrb[0].mxu0 %v1676
      %v1780 = vpop.f32.mrb[0].mxu0
      %v1781 = vadd.f32 0.0, %v1780
      %v1782 = vpop.f32.mrb[0].mxu0
      %v1783 = vpop.f32.mrb[0].mxu0
      %v1784 = vadd.f32 0.0, %v1783
      %v1785 = vpop.f32.mrb[0].mxu0
      %1786 = vmatprep.mubr.bf16.mxu0 0
      %1787 = vmatmul.mubr.bf16.gmra.mrb[0].mxu0 %v1679
      %v1788 = vpop.f32.mrb[0].mxu0
      %v1789 = vadd.f32 0.0, %v1788
      %v1790 = vpop.f32.mrb[0].mxu0
      %v1791 = vpop.f32.mrb[0].mxu0
      %v1792 = vadd.f32 0.0, %v1791
      %v1793 = vpop.f32.mrb[0].mxu0
      %1794 = vmatprep.mubr.bf16.mxu0 0
      %1795 = vmatmul.mubr.bf16.gmra.mrb[0].mxu0 %v1682
      %v1796 = vpop.f32.mrb[0].mxu0
      %v1797 = vadd.f32 0.0, %v1796
      %v1798 = vpop.f32.mrb[0].mxu0
      %v1799 = vpop.f32.mrb[0].mxu0
      %v1800 = vadd.f32 0.0, %v1799
      %v1801 = vpop.f32.mrb[0].mxu0
      %1802 = vmatprep.mubr.bf16.mxu0 0
      %1803 = vmatmul.mubr.bf16.gmra.mrb[0].mxu0 %v1685
      %v1804 = vpop.f32.mrb[0].mxu0
      %v1805 = vadd.f32 0.0, %v1804
      %v1806 = vpop.f32.mrb[0].mxu0
      %v1807 = vpop.f32.mrb[0].mxu0
      %v1808 = vadd.f32 0.0, %v1807
      %v1809 = vpop.f32.mrb[0].mxu0
      %1810 = vmatprep.mubr.bf16.mxu0 0
      %1811 = vmatmul.mubr.bf16.gmra.mrb[0].mxu0 %v1688
      %v1812 = vpop.f32.mrb[0].mxu0
      %v1813 = vadd.f32 0.0, %v1812
      %v1814 = vpop.f32.mrb[0].mxu0
      %v1815 = vpop.f32.mrb[0].mxu0
      %v1816 = vadd.f32 0.0, %v1815
      %v1817 = vpop.f32.mrb[0].mxu0
      %1818 = vmatprep.mubr.bf16.mxu0 0
      %1819 = vmatmul.mubr.bf16.gmra.mrb[0].mxu0 %v1691
      %v1820 = vpop.f32.mrb[0].mxu0
      %v1821 = vadd.f32 0.0, %v1820
      %v1822 = vpop.f32.mrb[0].mxu0
      %v1823 = vpop.f32.mrb[0].mxu0
      %v1824 = vadd.f32 0.0, %v1823
      %v1825 = vpop.f32.mrb[0].mxu0
      %1826 = vmatprep.mubr.bf16.mxu0 0
      %1827 = vmatmul.mubr.bf16.gmra.mrb[0].mxu0 %v1694
      %v1828 = vpop.f32.mrb[0].mxu0
      %v1829 = vadd.f32 0.0, %v1828
      %v1830 = vpop.f32.mrb[0].mxu0
      %v1831 = vpop.f32.mrb[0].mxu0
      %v1832 = vadd.f32 0.0, %v1831
      %v1833 = vpop.f32.mrb[0].mxu0
      %1834 = vmatprep.mubr.bf16.mxu0 0
      %1835 = vmatmul.mubr.bf16.gmra.mrb[0].mxu0 %v1697
      %v1836 = vpop.f32.mrb[0].mxu0
      %v1837 = vadd.f32 0.0, %v1836
      %v1838 = vpop.f32.mrb[0].mxu0
      %v1839 = vpop.f32.mrb[0].mxu0
      %v1840 = vadd.f32 0.0, %v1839
      %v1841 = vpop.f32.mrb[0].mxu0
      %1842 = vmatprep.mubr.bf16.mxu0 0
      %1843 = vmatmul.mubr.bf16.gmra.mrb[0].mxu0 %v1700
      %v1844 = vpop.f32.mrb[0].mxu0
      %v1845 = vadd.f32 0.0, %v1844
      %v1846 = vpop.f32.mrb[0].mxu0
      %v1847 = vpop.f32.mrb[0].mxu0
      %v1848 = vadd.f32 0.0, %v1847
      %v1849 = vpop.f32.mrb[0].mxu0
      %1850 = vmatprep.mubr.bf16.mxu0 0
      %1851 = vmatmul.mubr.bf16.gmra.mrb[0].mxu0 %v1703
      %v1852 = vpop.f32.mrb[0].mxu0
      %v1853 = vadd.f32 0.0, %v1852
      %v1854 = vpop.f32.mrb[0].mxu0
      %v1855 = vpop.f32.mrb[0].mxu0
      %v1856 = vadd.f32 0.0, %v1855
      %v1857 = vpop.f32.mrb[0].mxu0
      %1858 = vmatprep.mubr.bf16.mxu0 0
      %1859 = vmatmul.mubr.bf16.gmra.mrb[0].mxu0 %v1706
      %v1860 = vpop.f32.mrb[0].mxu0
      %v1861 = vadd.f32 0.0, %v1860
      %v1862 = vpop.f32.mrb[0].mxu0
      %v1863 = vpop.f32.mrb[0].mxu0
      %v1864 = vadd.f32 0.0, %v1863
      %v1865 = vpop.f32.mrb[0].mxu0
      %1866 = vmatprep.mubr.bf16.mxu0 0
      %1867 = vmatmul.mubr.bf16.gmra.mrb[0].mxu0 %v1709
      %v1868 = vpop.f32.mrb[0].mxu0
      %v1869 = vadd.f32 0.0, %v1868
      %v1870 = vpop.f32.mrb[0].mxu0
      %v1871 = vpop.f32.mrb[0].mxu0
      %v1872 = vadd.f32 0.0, %v1871
      %v1873 = vpop.f32.mrb[0].mxu0
      %1874 = vdwg.mxu0
      %v1875 = vadd.f32 %v1581, %v1749
      %v1876 = vadd.f32 %v1582, %v1752
      %v1877 = vadd.f32 %v1583, %v1757
      %v1878 = vadd.f32 %v1584, %v1760
      %v1879 = vadd.f32 %v1585, %v1765
      %v1880 = vadd.f32 %v1586, %v1768
      %v1881 = vadd.f32 %v1587, %v1773
      %v1882 = vadd.f32 %v1588, %v1776
      %v1883 = vadd.f32 %v1589, %v1781
      %v1884 = vadd.f32 %v1590, %v1784
      %v1885 = vadd.f32 %v1591, %v1789
      %v1886 = vadd.f32 %v1592, %v1792
      %v1887 = vadd.f32 %v1593, %v1797
      %v1888 = vadd.f32 %v1594, %v1800
      %v1889 = vadd.f32 %v1595, %v1805
      %v1890 = vadd.f32 %v1596, %v1808
      %v1891 = vadd.f32 %v1597, %v1813
      %v1892 = vadd.f32 %v1598, %v1816
      %v1893 = vadd.f32 %v1599, %v1821
      %v1894 = vadd.f32 %v1600, %v1824
      %v1895 = vadd.f32 %v1601, %v1829
      %v1896 = vadd.f32 %v1602, %v1832
      %v1897 = vadd.f32 %v1603, %v1837
      %v1898 = vadd.f32 %v1604, %v1840
      %v1899 = vadd.f32 %v1605, %v1845
      %v1900 = vadd.f32 %v1606, %v1848
      %v1901 = vadd.f32 %v1607, %v1853
      %v1902 = vadd.f32 %v1608, %v1856
      %v1903 = vadd.f32 %v1609, %v1861
      %v1904 = vadd.f32 %v1610, %v1864
      %v1905 = vadd.f32 %v1611, %v1869
      %v1906 = vadd.f32 %v1612, %v1872
      %v1907 = vld [vmem:[%s240 + $0x2] sm:$0xff]
      %v1908 = vld [vmem:[%s240 + $0xa] sm:$0xff]
      %v1909 = vld [vmem:[%s240 + $0x1a] sm:$0xff]
      %v1910 = vld [vmem:[%s240 + $0x22] sm:$0xff]
      %v1911 = vld [vmem:[%s240 + $0x32] sm:$0xff]
      %v1912 = vld [vmem:[%s240 + $0x3a] sm:$0xff]
      %v1913 = vld [vmem:[%s240 + $0x4a] sm:$0xff]
      %v1914 = vld [vmem:[%s240 + $0x52] sm:$0xff]
      %v1915 = vld [vmem:[%s240 + $0x62] sm:$0xff]
      %v1916 = vld [vmem:[%s240 + $0x6a] sm:$0xff]
      %v1917 = vld [vmem:[%s240 + $0x7a] sm:$0xff]
      %v1918 = vld [vmem:[%s240 + $0x82] sm:$0xff]
      %v1919 = vld [vmem:[%s240 + $0x92] sm:$0xff]
      %v1920 = vld [vmem:[%s240 + $0x9a] sm:$0xff]
      %v1921 = vld [vmem:[%s240 + $0xaa] sm:$0xff]
      %v1922 = vld [vmem:[%s240 + $0xb2] sm:$0xff]
      %v1923 = vld [vmem:[%s240 + $0xc2] sm:$0xff]
      %v1924 = vld [vmem:[%s240 + $0xca] sm:$0xff]
      %v1925 = vld [vmem:[%s240 + $0xda] sm:$0xff]
      %v1926 = vld [vmem:[%s240 + $0xe2] sm:$0xff]
      %v1927 = vld [vmem:[%s240 + $0xf2] sm:$0xff]
      %v1928 = vld [vmem:[%s240 + $0xfa] sm:$0xff]
      %v1929 = vld [vmem:[%s240 + $0x10a] sm:$0xff]
      %v1930 = vld [vmem:[%s240 + $0x112] sm:$0xff]
      %v1931 = vld [vmem:[%s240 + $0x122] sm:$0xff]
      %v1932 = vld [vmem:[%s240 + $0x12a] sm:$0xff]
      %v1933 = vld [vmem:[%s240 + $0x13a] sm:$0xff]
      %v1934 = vld [vmem:[%s240 + $0x142] sm:$0xff]
      %v1935 = vld [vmem:[%s240 + $0x152] sm:$0xff]
      %v1936 = vld [vmem:[%s240 + $0x15a] sm:$0xff]
      %v1937 = vld [vmem:[%s240 + $0x16a] sm:$0xff]
      %v1938 = vld [vmem:[%s240 + $0x172] sm:$0xff]
      %v1939 = vpack.c.bf16 %v1908, %v1907
      %v1940 = vpack.c.bf16 %v1910, %v1909
      %v1941 = vpack.c.bf16 %v1912, %v1911
      %v1942 = vpack.c.bf16 %v1914, %v1913
      %v1943 = vpack.c.bf16 %v1916, %v1915
      %v1944 = vpack.c.bf16 %v1918, %v1917
      %v1945 = vpack.c.bf16 %v1920, %v1919
      %v1946 = vpack.c.bf16 %v1922, %v1921
      %v1947 = vpack.c.bf16 %v1924, %v1923
      %v1948 = vpack.c.bf16 %v1926, %v1925
      %v1949 = vpack.c.bf16 %v1928, %v1927
      %v1950 = vpack.c.bf16 %v1930, %v1929
      %v1951 = vpack.c.bf16 %v1932, %v1931
      %v1952 = vpack.c.bf16 %v1934, %v1933
      %v1953 = vpack.c.bf16 %v1936, %v1935
      %v1954 = vpack.c.bf16 %v1938, %v1937
      %s1955 = scalar_lea.vmem %s3, 10
      %v1956 = vld [vmem:[%s1955] sm:$0x3]
      %v1958 = vsel %vm232, %v1939, 0
      %v1961 = vsel %vm232, %v1940, 0
      %v1964 = vsel %vm232, %v1941, 0
      %v1967 = vsel %vm232, %v1942, 0
      %v1970 = vsel %vm232, %v1943, 0
      %v1973 = vsel %vm232, %v1944, 0
      %v1976 = vsel %vm232, %v1945, 0
      %v1979 = vsel %vm232, %v1946, 0
      %v1982 = vsel %vm232, %v1947, 0
      %v1985 = vsel %vm232, %v1948, 0
      %v1988 = vsel %vm232, %v1949, 0
      %v1991 = vsel %vm232, %v1950, 0
      %v1994 = vsel %vm232, %v1951, 0
      %v1997 = vsel %vm232, %v1952, 0
      %v2000 = vsel %vm232, %v1953, 0
      %v2003 = vsel %vm232, %v1954, 0
      %v2006 = vsel %vm648, %v1956, 0
      %2008 = vmatprep.subr.bf16.mxu0 0
      %2009 = vmatpush1.bf16.msra.mxu0 %v2006
      %2010 = vmatprep.subr.bf16.mxu0 0
      %2011 = vmatpush1.bf16.msra.mxu0 0
      %2012 = vmatprep.subr.bf16.mxu0 0
      %2013 = vmatpush1.bf16.msra.mxu0 0
      %2014 = vmatprep.subr.bf16.mxu0 0
      %2015 = vmatpush1.bf16.msra.mxu0 0
      %2016 = vmatprep.subr.bf16.mxu0 0
      %2017 = vmatpush1.bf16.msra.mxu0 0
      %2018 = vmatprep.subr.bf16.mxu0 0
      %2019 = vmatpush1.bf16.msra.mxu0 0
      %2020 = vmatprep.subr.bf16.mxu0 0
      %2021 = vmatpush1.bf16.msra.mxu0 0
      %2022 = vmatprep.subr.bf16.mxu0 0
      %2023 = vmatpush1.bf16.msra.mxu0 0
      %2024 = vmatprep.subr.bf16.mxu0 0
      %2025 = vmatpush1.bf16.msra.mxu0 0
      %2026 = vmatprep.subr.bf16.mxu0 0
      %2027 = vmatpush1.bf16.msra.mxu0 0
      %2028 = vmatprep.subr.bf16.mxu0 0
      %2029 = vmatpush1.bf16.msra.mxu0 0
      %2030 = vmatprep.subr.bf16.mxu0 0
      %2031 = vmatpush1.bf16.msra.mxu0 0
      %2032 = vmatprep.subr.bf16.mxu0 0
      %2033 = vmatpush1.bf16.msra.mxu0 0
      %2034 = vmatprep.subr.bf16.mxu0 0
      %2035 = vmatpush1.bf16.msra.mxu0 0
      %2036 = vmatprep.subr.bf16.mxu0 0
      %2037 = vmatpush1.bf16.msra.mxu0 0
      %2038 = vmatprep.subr.bf16.mxu0 0
      %2039 = vmatpush1.bf16.msra.mxu0 0
      %2040 = vmatprep.mubr.bf16.mxu0 0
      %2041 = vmatmul.mubr.bf16.gmra.mrb[0].mxu0 %v1958
      %v2042 = vpop.f32.mrb[0].mxu0
      %v2043 = vadd.f32 0.0, %v2042
      %v2044 = vpop.f32.mrb[0].mxu0
      %v2045 = vpop.f32.mrb[0].mxu0
      %v2046 = vadd.f32 0.0, %v2045
      %v2047 = vpop.f32.mrb[0].mxu0
      %2048 = vmatprep.mubr.bf16.mxu0 0
      %2049 = vmatmul.mubr.bf16.gmra.mrb[0].mxu0 %v1961
      %v2050 = vpop.f32.mrb[0].mxu0
      %v2051 = vadd.f32 0.0, %v2050
      %v2052 = vpop.f32.mrb[0].mxu0
      %v2053 = vpop.f32.mrb[0].mxu0
      %v2054 = vadd.f32 0.0, %v2053
      %v2055 = vpop.f32.mrb[0].mxu0
      %2056 = vmatprep.mubr.bf16.mxu0 0
      %2057 = vmatmul.mubr.bf16.gmra.mrb[0].mxu0 %v1964
      %v2058 = vpop.f32.mrb[0].mxu0
      %v2059 = vadd.f32 0.0, %v2058
      %v2060 = vpop.f32.mrb[0].mxu0
      %v2061 = vpop.f32.mrb[0].mxu0
      %v2062 = vadd.f32 0.0, %v2061
      %v2063 = vpop.f32.mrb[0].mxu0
      %2064 = vmatprep.mubr.bf16.mxu0 0
      %2065 = vmatmul.mubr.bf16.gmra.mrb[0].mxu0 %v1967
      %v2066 = vpop.f32.mrb[0].mxu0
      %v2067 = vadd.f32 0.0, %v2066
      %v2068 = vpop.f32.mrb[0].mxu0
      %v2069 = vpop.f32.mrb[0].mxu0
      %v2070 = vadd.f32 0.0, %v2069
      %v2071 = vpop.f32.mrb[0].mxu0
      %2072 = vmatprep.mubr.bf16.mxu0 0
      %2073 = vmatmul.mubr.bf16.gmra.mrb[0].mxu0 %v1970
      %v2074 = vpop.f32.mrb[0].mxu0
      %v2075 = vadd.f32 0.0, %v2074
      %v2076 = vpop.f32.mrb[0].mxu0
      %v2077 = vpop.f32.mrb[0].mxu0
      %v2078 = vadd.f32 0.0, %v2077
      %v2079 = vpop.f32.mrb[0].mxu0
      %2080 = vmatprep.mubr.bf16.mxu0 0
      %2081 = vmatmul.mubr.bf16.gmra.mrb[0].mxu0 %v1973
      %v2082 = vpop.f32.mrb[0].mxu0
      %v2083 = vadd.f32 0.0, %v2082
      %v2084 = vpop.f32.mrb[0].mxu0
      %v2085 = vpop.f32.mrb[0].mxu0
      %v2086 = vadd.f32 0.0, %v2085
      %v2087 = vpop.f32.mrb[0].mxu0
      %2088 = vmatprep.mubr.bf16.mxu0 0
      %2089 = vmatmul.mubr.bf16.gmra.mrb[0].mxu0 %v1976
      %v2090 = vpop.f32.mrb[0].mxu0
      %v2091 = vadd.f32 0.0, %v2090
      %v2092 = vpop.f32.mrb[0].mxu0
      %v2093 = vpop.f32.mrb[0].mxu0
      %v2094 = vadd.f32 0.0, %v2093
      %v2095 = vpop.f32.mrb[0].mxu0
      %2096 = vmatprep.mubr.bf16.mxu0 0
      %2097 = vmatmul.mubr.bf16.gmra.mrb[0].mxu0 %v1979
      %v2098 = vpop.f32.mrb[0].mxu0
      %v2099 = vadd.f32 0.0, %v2098
      %v2100 = vpop.f32.mrb[0].mxu0
      %v2101 = vpop.f32.mrb[0].mxu0
      %v2102 = vadd.f32 0.0, %v2101
      %v2103 = vpop.f32.mrb[0].mxu0
      %2104 = vmatprep.mubr.bf16.mxu0 0
      %2105 = vmatmul.mubr.bf16.gmra.mrb[0].mxu0 %v1982
      %v2106 = vpop.f32.mrb[0].mxu0
      %v2107 = vadd.f32 0.0, %v2106
      %v2108 = vpop.f32.mrb[0].mxu0
      %v2109 = vpop.f32.mrb[0].mxu0
      %v2110 = vadd.f32 0.0, %v2109
      %v2111 = vpop.f32.mrb[0].mxu0
      %2112 = vmatprep.mubr.bf16.mxu0 0
      %2113 = vmatmul.mubr.bf16.gmra.mrb[0].mxu0 %v1985
      %v2114 = vpop.f32.mrb[0].mxu0
      %v2115 = vadd.f32 0.0, %v2114
      %v2116 = vpop.f32.mrb[0].mxu0
      %v2117 = vpop.f32.mrb[0].mxu0
      %v2118 = vadd.f32 0.0, %v2117
      %v2119 = vpop.f32.mrb[0].mxu0
      %2120 = vmatprep.mubr.bf16.mxu0 0
      %2121 = vmatmul.mubr.bf16.gmra.mrb[0].mxu0 %v1988
      %v2122 = vpop.f32.mrb[0].mxu0
      %v2123 = vadd.f32 0.0, %v2122
      %v2124 = vpop.f32.mrb[0].mxu0
      %v2125 = vpop.f32.mrb[0].mxu0
      %v2126 = vadd.f32 0.0, %v2125
      %v2127 = vpop.f32.mrb[0].mxu0
      %2128 = vmatprep.mubr.bf16.mxu0 0
      %2129 = vmatmul.mubr.bf16.gmra.mrb[0].mxu0 %v1991
      %v2130 = vpop.f32.mrb[0].mxu0
      %v2131 = vadd.f32 0.0, %v2130
      %v2132 = vpop.f32.mrb[0].mxu0
      %v2133 = vpop.f32.mrb[0].mxu0
      %v2134 = vadd.f32 0.0, %v2133
      %v2135 = vpop.f32.mrb[0].mxu0
      %2136 = vmatprep.mubr.bf16.mxu0 0
      %2137 = vmatmul.mubr.bf16.gmra.mrb[0].mxu0 %v1994
      %v2138 = vpop.f32.mrb[0].mxu0
      %v2139 = vadd.f32 0.0, %v2138
      %v2140 = vpop.f32.mrb[0].mxu0
      %v2141 = vpop.f32.mrb[0].mxu0
      %v2142 = vadd.f32 0.0, %v2141
      %v2143 = vpop.f32.mrb[0].mxu0
      %2144 = vmatprep.mubr.bf16.mxu0 0
      %2145 = vmatmul.mubr.bf16.gmra.mrb[0].mxu0 %v1997
      %v2146 = vpop.f32.mrb[0].mxu0
      %v2147 = vadd.f32 0.0, %v2146
      %v2148 = vpop.f32.mrb[0].mxu0
      %v2149 = vpop.f32.mrb[0].mxu0
      %v2150 = vadd.f32 0.0, %v2149
      %v2151 = vpop.f32.mrb[0].mxu0
      %2152 = vmatprep.mubr.bf16.mxu0 0
      %2153 = vmatmul.mubr.bf16.gmra.mrb[0].mxu0 %v2000
      %v2154 = vpop.f32.mrb[0].mxu0
      %v2155 = vadd.f32 0.0, %v2154
      %v2156 = vpop.f32.mrb[0].mxu0
      %v2157 = vpop.f32.mrb[0].mxu0
      %v2158 = vadd.f32 0.0, %v2157
      %v2159 = vpop.f32.mrb[0].mxu0
      %2160 = vmatprep.mubr.bf16.mxu0 0
      %2161 = vmatmul.mubr.bf16.gmra.mrb[0].mxu0 %v2003
      %v2162 = vpop.f32.mrb[0].mxu0
      %v2163 = vadd.f32 0.0, %v2162
      %v2164 = vpop.f32.mrb[0].mxu0
      %v2165 = vpop.f32.mrb[0].mxu0
      %v2166 = vadd.f32 0.0, %v2165
      %v2167 = vpop.f32.mrb[0].mxu0
      %2168 = vdwg.mxu0
      %v2169 = vadd.f32 %v1875, %v2043
      %v2170 = vadd.f32 %v1876, %v2046
      %v2171 = vadd.f32 %v1877, %v2051
      %v2172 = vadd.f32 %v1878, %v2054
      %v2173 = vadd.f32 %v1879, %v2059
      %v2174 = vadd.f32 %v1880, %v2062
      %v2175 = vadd.f32 %v1881, %v2067
      %v2176 = vadd.f32 %v1882, %v2070
      %v2177 = vadd.f32 %v1883, %v2075
      %v2178 = vadd.f32 %v1884, %v2078
      %v2179 = vadd.f32 %v1885, %v2083
      %v2180 = vadd.f32 %v1886, %v2086
      %v2181 = vadd.f32 %v1887, %v2091
      %v2182 = vadd.f32 %v1888, %v2094
      %v2183 = vadd.f32 %v1889, %v2099
      %v2184 = vadd.f32 %v1890, %v2102
      %v2185 = vadd.f32 %v1891, %v2107
      %v2186 = vadd.f32 %v1892, %v2110
      %v2187 = vadd.f32 %v1893, %v2115
      %v2188 = vadd.f32 %v1894, %v2118
      %v2189 = vadd.f32 %v1895, %v2123
      %v2190 = vadd.f32 %v1896, %v2126
      %v2191 = vadd.f32 %v1897, %v2131
      %v2192 = vadd.f32 %v1898, %v2134
      %v2193 = vadd.f32 %v1899, %v2139
      %v2194 = vadd.f32 %v1900, %v2142
      %v2195 = vadd.f32 %v1901, %v2147
      %v2196 = vadd.f32 %v1902, %v2150
      %v2197 = vadd.f32 %v1903, %v2155
      %v2198 = vadd.f32 %v1904, %v2158
      %v2199 = vadd.f32 %v1905, %v2163
      %v2200 = vadd.f32 %v1906, %v2166
      %s2201 = scalar_lea.vmem [#allocation2], 48
      %v2202 = vld [vmem:[%s2201] sm:$0xff]
      %v2203 = vld [vmem:[%s2201 + $0x8] sm:$0xff]
      %v2204 = vld [vmem:[%s2201 + $0x18] sm:$0xff]
      %v2205 = vld [vmem:[%s2201 + $0x20] sm:$0xff]
      %v2206 = vld [vmem:[%s2201 + $0x30] sm:$0xff]
      %v2207 = vld [vmem:[%s2201 + $0x38] sm:$0xff]
      %v2208 = vld [vmem:[%s2201 + $0x48] sm:$0xff]
      %v2209 = vld [vmem:[%s2201 + $0x50] sm:$0xff]
      %v2210 = vld [vmem:[%s2201 + $0x60] sm:$0xff]
      %v2211 = vld [vmem:[%s2201 + $0x68] sm:$0xff]
      %v2212 = vld [vmem:[%s2201 + $0x78] sm:$0xff]
      %v2213 = vld [vmem:[%s2201 + $0x80] sm:$0xff]
      %v2214 = vld [vmem:[%s2201 + $0x90] sm:$0xff]
      %v2215 = vld [vmem:[%s2201 + $0x98] sm:$0xff]
      %v2216 = vld [vmem:[%s2201 + $0xa8] sm:$0xff]
      %v2217 = vld [vmem:[%s2201 + $0xb0] sm:$0xff]
      %v2218 = vld [vmem:[%s2201 + $0xc0] sm:$0xff]
      %v2219 = vld [vmem:[%s2201 + $0xc8] sm:$0xff]
      %v2220 = vld [vmem:[%s2201 + $0xd8] sm:$0xff]
      %v2221 = vld [vmem:[%s2201 + $0xe0] sm:$0xff]
      %v2222 = vld [vmem:[%s2201 + $0xf0] sm:$0xff]
      %v2223 = vld [vmem:[%s2201 + $0xf8] sm:$0xff]
      %v2224 = vld [vmem:[%s2201 + $0x108] sm:$0xff]
      %v2225 = vld [vmem:[%s2201 + $0x110] sm:$0xff]
      %v2226 = vld [vmem:[%s2201 + $0x120] sm:$0xff]
      %v2227 = vld [vmem:[%s2201 + $0x128] sm:$0xff]
      %v2228 = vld [vmem:[%s2201 + $0x138] sm:$0xff]
      %v2229 = vld [vmem:[%s2201 + $0x140] sm:$0xff]
      %v2230 = vld [vmem:[%s2201 + $0x150] sm:$0xff]
      %v2231 = vld [vmem:[%s2201 + $0x158] sm:$0xff]
      %v2232 = vld [vmem:[%s2201 + $0x168] sm:$0xff]
      %v2233 = vld [vmem:[%s2201 + $0x170] sm:$0xff]
      %v2234 = vpack.c.bf16 %v2203, %v2202
      %v2235 = vpack.c.bf16 %v2205, %v2204
      %v2236 = vpack.c.bf16 %v2207, %v2206
      %v2237 = vpack.c.bf16 %v2209, %v2208
      %v2238 = vpack.c.bf16 %v2211, %v2210
      %v2239 = vpack.c.bf16 %v2213, %v2212
      %v2240 = vpack.c.bf16 %v2215, %v2214
      %v2241 = vpack.c.bf16 %v2217, %v2216
      %v2242 = vpack.c.bf16 %v2219, %v2218
      %v2243 = vpack.c.bf16 %v2221, %v2220
      %v2244 = vpack.c.bf16 %v2223, %v2222
      %v2245 = vpack.c.bf16 %v2225, %v2224
      %v2246 = vpack.c.bf16 %v2227, %v2226
      %v2247 = vpack.c.bf16 %v2229, %v2228
      %v2248 = vpack.c.bf16 %v2231, %v2230
      %v2249 = vpack.c.bf16 %v2233, %v2232
      %s2250 = scalar_lea.vmem %s3, 12
      %v2251 = vld [vmem:[%s2250] sm:$0x3]
      %v2253 = vsel %vm232, %v2234, 0
      %v2256 = vsel %vm232, %v2235, 0
      %v2259 = vsel %vm232, %v2236, 0
      %v2262 = vsel %vm232, %v2237, 0
      %v2265 = vsel %vm232, %v2238, 0
      %v2268 = vsel %vm232, %v2239, 0
      %v2271 = vsel %vm232, %v2240, 0
      %v2274 = vsel %vm232, %v2241, 0
      %v2277 = vsel %vm232, %v2242, 0
      %v2280 = vsel %vm232, %v2243, 0
      %v2283 = vsel %vm232, %v2244, 0
      %v2286 = vsel %vm232, %v2245, 0
      %v2289 = vsel %vm232, %v2246, 0
      %v2292 = vsel %vm232, %v2247, 0
      %v2295 = vsel %vm232, %v2248, 0
      %v2298 = vsel %vm232, %v2249, 0
      %v2301 = vsel %vm648, %v2251, 0
      %2303 = vmatprep.subr.bf16.mxu0 0
      %2304 = vmatpush1.bf16.msra.mxu0 %v2301
      %2305 = vmatprep.subr.bf16.mxu0 0
      %2306 = vmatpush1.bf16.msra.mxu0 0
      %2307 = vmatprep.subr.bf16.mxu0 0
      %2308 = vmatpush1.bf16.msra.mxu0 0
      %2309 = vmatprep.subr.bf16.mxu0 0
      %2310 = vmatpush1.bf16.msra.mxu0 0
      %2311 = vmatprep.subr.bf16.mxu0 0
      %2312 = vmatpush1.bf16.msra.mxu0 0
      %2313 = vmatprep.subr.bf16.mxu0 0
      %2314 = vmatpush1.bf16.msra.mxu0 0
      %2315 = vmatprep.subr.bf16.mxu0 0
      %2316 = vmatpush1.bf16.msra.mxu0 0
      %2317 = vmatprep.subr.bf16.mxu0 0
      %2318 = vmatpush1.bf16.msra.mxu0 0
      %2319 = vmatprep.subr.bf16.mxu0 0
      %2320 = vmatpush1.bf16.msra.mxu0 0
      %2321 = vmatprep.subr.bf16.mxu0 0
      %2322 = vmatpush1.bf16.msra.mxu0 0
      %2323 = vmatprep.subr.bf16.mxu0 0
      %2324 = vmatpush1.bf16.msra.mxu0 0
      %2325 = vmatprep.subr.bf16.mxu0 0
      %2326 = vmatpush1.bf16.msra.mxu0 0
      %2327 = vmatprep.subr.bf16.mxu0 0
      %2328 = vmatpush1.bf16.msra.mxu0 0
      %2329 = vmatprep.subr.bf16.mxu0 0
      %2330 = vmatpush1.bf16.msra.mxu0 0
      %2331 = vmatprep.subr.bf16.mxu0 0
      %2332 = vmatpush1.bf16.msra.mxu0 0
      %2333 = vmatprep.subr.bf16.mxu0 0
      %2334 = vmatpush1.bf16.msra.mxu0 0
      %2335 = vmatprep.mubr.bf16.mxu0 0
      %2336 = vmatmul.mubr.bf16.gmra.mrb[0].mxu0 %v2253
      %v2337 = vpop.f32.mrb[0].mxu0
      %v2338 = vadd.f32 0.0, %v2337
      %v2339 = vpop.f32.mrb[0].mxu0
      %v2340 = vpop.f32.mrb[0].mxu0
      %v2341 = vadd.f32 0.0, %v2340
      %v2342 = vpop.f32.mrb[0].mxu0
      %2343 = vmatprep.mubr.bf16.mxu0 0
      %2344 = vmatmul.mubr.bf16.gmra.mrb[0].mxu0 %v2256
      %v2345 = vpop.f32.mrb[0].mxu0
      %v2346 = vadd.f32 0.0, %v2345
      %v2347 = vpop.f32.mrb[0].mxu0
      %v2348 = vpop.f32.mrb[0].mxu0
      %v2349 = vadd.f32 0.0, %v2348
      %v2350 = vpop.f32.mrb[0].mxu0
      %2351 = vmatprep.mubr.bf16.mxu0 0
      %2352 = vmatmul.mubr.bf16.gmra.mrb[0].mxu0 %v2259
      %v2353 = vpop.f32.mrb[0].mxu0
      %v2354 = vadd.f32 0.0, %v2353
      %v2355 = vpop.f32.mrb[0].mxu0
      %v2356 = vpop.f32.mrb[0].mxu0
      %v2357 = vadd.f32 0.0, %v2356
      %v2358 = vpop.f32.mrb[0].mxu0
      %2359 = vmatprep.mubr.bf16.mxu0 0
      %2360 = vmatmul.mubr.bf16.gmra.mrb[0].mxu0 %v2262
      %v2361 = vpop.f32.mrb[0].mxu0
      %v2362 = vadd.f32 0.0, %v2361
      %v2363 = vpop.f32.mrb[0].mxu0
      %v2364 = vpop.f32.mrb[0].mxu0
      %v2365 = vadd.f32 0.0, %v2364
      %v2366 = vpop.f32.mrb[0].mxu0
      %2367 = vmatprep.mubr.bf16.mxu0 0
      %2368 = vmatmul.mubr.bf16.gmra.mrb[0].mxu0 %v2265
      %v2369 = vpop.f32.mrb[0].mxu0
      %v2370 = vadd.f32 0.0, %v2369
      %v2371 = vpop.f32.mrb[0].mxu0
      %v2372 = vpop.f32.mrb[0].mxu0
      %v2373 = vadd.f32 0.0, %v2372
      %v2374 = vpop.f32.mrb[0].mxu0
      %2375 = vmatprep.mubr.bf16.mxu0 0
      %2376 = vmatmul.mubr.bf16.gmra.mrb[0].mxu0 %v2268
      %v2377 = vpop.f32.mrb[0].mxu0
      %v2378 = vadd.f32 0.0, %v2377
      %v2379 = vpop.f32.mrb[0].mxu0
      %v2380 = vpop.f32.mrb[0].mxu0
      %v2381 = vadd.f32 0.0, %v2380
      %v2382 = vpop.f32.mrb[0].mxu0
      %2383 = vmatprep.mubr.bf16.mxu0 0
      %2384 = vmatmul.mubr.bf16.gmra.mrb[0].mxu0 %v2271
      %v2385 = vpop.f32.mrb[0].mxu0
      %v2386 = vadd.f32 0.0, %v2385
      %v2387 = vpop.f32.mrb[0].mxu0
      %v2388 = vpop.f32.mrb[0].mxu0
      %v2389 = vadd.f32 0.0, %v2388
      %v2390 = vpop.f32.mrb[0].mxu0
      %2391 = vmatprep.mubr.bf16.mxu0 0
      %2392 = vmatmul.mubr.bf16.gmra.mrb[0].mxu0 %v2274
      %v2393 = vpop.f32.mrb[0].mxu0
      %v2394 = vadd.f32 0.0, %v2393
      %v2395 = vpop.f32.mrb[0].mxu0
      %v2396 = vpop.f32.mrb[0].mxu0
      %v2397 = vadd.f32 0.0, %v2396
      %v2398 = vpop.f32.mrb[0].mxu0
      %2399 = vmatprep.mubr.bf16.mxu0 0
      %2400 = vmatmul.mubr.bf16.gmra.mrb[0].mxu0 %v2277
      %v2401 = vpop.f32.mrb[0].mxu0
      %v2402 = vadd.f32 0.0, %v2401
      %v2403 = vpop.f32.mrb[0].mxu0
      %v2404 = vpop.f32.mrb[0].mxu0
      %v2405 = vadd.f32 0.0, %v2404
      %v2406 = vpop.f32.mrb[0].mxu0
      %2407 = vmatprep.mubr.bf16.mxu0 0
      %2408 = vmatmul.mubr.bf16.gmra.mrb[0].mxu0 %v2280
      %v2409 = vpop.f32.mrb[0].mxu0
      %v2410 = vadd.f32 0.0, %v2409
      %v2411 = vpop.f32.mrb[0].mxu0
      %v2412 = vpop.f32.mrb[0].mxu0
      %v2413 = vadd.f32 0.0, %v2412
      %v2414 = vpop.f32.mrb[0].mxu0
      %2415 = vmatprep.mubr.bf16.mxu0 0
      %2416 = vmatmul.mubr.bf16.gmra.mrb[0].mxu0 %v2283
      %v2417 = vpop.f32.mrb[0].mxu0
      %v2418 = vadd.f32 0.0, %v2417
      %v2419 = vpop.f32.mrb[0].mxu0
      %v2420 = vpop.f32.mrb[0].mxu0
      %v2421 = vadd.f32 0.0, %v2420
      %v2422 = vpop.f32.mrb[0].mxu0
      %2423 = vmatprep.mubr.bf16.mxu0 0
      %2424 = vmatmul.mubr.bf16.gmra.mrb[0].mxu0 %v2286
      %v2425 = vpop.f32.mrb[0].mxu0
      %v2426 = vadd.f32 0.0, %v2425
      %v2427 = vpop.f32.mrb[0].mxu0
      %v2428 = vpop.f32.mrb[0].mxu0
      %v2429 = vadd.f32 0.0, %v2428
      %v2430 = vpop.f32.mrb[0].mxu0
      %2431 = vmatprep.mubr.bf16.mxu0 0
      %2432 = vmatmul.mubr.bf16.gmra.mrb[0].mxu0 %v2289
      %v2433 = vpop.f32.mrb[0].mxu0
      %v2434 = vadd.f32 0.0, %v2433
      %v2435 = vpop.f32.mrb[0].mxu0
      %v2436 = vpop.f32.mrb[0].mxu0
      %v2437 = vadd.f32 0.0, %v2436
      %v2438 = vpop.f32.mrb[0].mxu0
      %2439 = vmatprep.mubr.bf16.mxu0 0
      %2440 = vmatmul.mubr.bf16.gmra.mrb[0].mxu0 %v2292
      %v2441 = vpop.f32.mrb[0].mxu0
      %v2442 = vadd.f32 0.0, %v2441
      %v2443 = vpop.f32.mrb[0].mxu0
      %v2444 = vpop.f32.mrb[0].mxu0
      %v2445 = vadd.f32 0.0, %v2444
      %v2446 = vpop.f32.mrb[0].mxu0
      %2447 = vmatprep.mubr.bf16.mxu0 0
      %2448 = vmatmul.mubr.bf16.gmra.mrb[0].mxu0 %v2295
      %v2449 = vpop.f32.mrb[0].mxu0
      %v2450 = vadd.f32 0.0, %v2449
      %v2451 = vpop.f32.mrb[0].mxu0
      %v2452 = vpop.f32.mrb[0].mxu0
      %v2453 = vadd.f32 0.0, %v2452
      %v2454 = vpop.f32.mrb[0].mxu0
      %2455 = vmatprep.mubr.bf16.mxu0 0
      %2456 = vmatmul.mubr.bf16.gmra.mrb[0].mxu0 %v2298
      %v2457 = vpop.f32.mrb[0].mxu0
      %v2458 = vadd.f32 0.0, %v2457
      %v2459 = vpop.f32.mrb[0].mxu0
      %v2460 = vpop.f32.mrb[0].mxu0
      %v2461 = vadd.f32 0.0, %v2460
      %v2462 = vpop.f32.mrb[0].mxu0
      %2463 = vdwg.mxu0
      %v2464 = vadd.f32 %v2169, %v2338
      %v2465 = vadd.f32 %v2170, %v2341
      %v2466 = vadd.f32 %v2171, %v2346
      %v2467 = vadd.f32 %v2172, %v2349
      %v2468 = vadd.f32 %v2173, %v2354
      %v2469 = vadd.f32 %v2174, %v2357
      %v2470 = vadd.f32 %v2175, %v2362
      %v2471 = vadd.f32 %v2176, %v2365
      %v2472 = vadd.f32 %v2177, %v2370
      %v2473 = vadd.f32 %v2178, %v2373
      %v2474 = vadd.f32 %v2179, %v2378
      %v2475 = vadd.f32 %v2180, %v2381
      %v2476 = vadd.f32 %v2181, %v2386
      %v2477 = vadd.f32 %v2182, %v2389
      %v2478 = vadd.f32 %v2183, %v2394
      %v2479 = vadd.f32 %v2184, %v2397
      %v2480 = vadd.f32 %v2185, %v2402
      %v2481 = vadd.f32 %v2186, %v2405
      %v2482 = vadd.f32 %v2187, %v2410
      %v2483 = vadd.f32 %v2188, %v2413
      %v2484 = vadd.f32 %v2189, %v2418
      %v2485 = vadd.f32 %v2190, %v2421
      %v2486 = vadd.f32 %v2191, %v2426
      %v2487 = vadd.f32 %v2192, %v2429
      %v2488 = vadd.f32 %v2193, %v2434
      %v2489 = vadd.f32 %v2194, %v2437
      %v2490 = vadd.f32 %v2195, %v2442
      %v2491 = vadd.f32 %v2196, %v2445
      %v2492 = vadd.f32 %v2197, %v2450
      %v2493 = vadd.f32 %v2198, %v2453
      %v2494 = vadd.f32 %v2199, %v2458
      %v2495 = vadd.f32 %v2200, %v2461
      %v2496 = vld [vmem:[%s2201 + $0x1] sm:$0xff]
      %v2497 = vld [vmem:[%s2201 + $0x9] sm:$0xff]
      %v2498 = vld [vmem:[%s2201 + $0x19] sm:$0xff]
      %v2499 = vld [vmem:[%s2201 + $0x21] sm:$0xff]
      %v2500 = vld [vmem:[%s2201 + $0x31] sm:$0xff]
      %v2501 = vld [vmem:[%s2201 + $0x39] sm:$0xff]
      %v2502 = vld [vmem:[%s2201 + $0x49] sm:$0xff]
      %v2503 = vld [vmem:[%s2201 + $0x51] sm:$0xff]
      %v2504 = vld [vmem:[%s2201 + $0x61] sm:$0xff]
      %v2505 = vld [vmem:[%s2201 + $0x69] sm:$0xff]
      %v2506 = vld [vmem:[%s2201 + $0x79] sm:$0xff]
      %v2507 = vld [vmem:[%s2201 + $0x81] sm:$0xff]
      %v2508 = vld [vmem:[%s2201 + $0x91] sm:$0xff]
      %v2509 = vld [vmem:[%s2201 + $0x99] sm:$0xff]
      %v2510 = vld [vmem:[%s2201 + $0xa9] sm:$0xff]
      %v2511 = vld [vmem:[%s2201 + $0xb1] sm:$0xff]
      %v2512 = vld [vmem:[%s2201 + $0xc1] sm:$0xff]
      %v2513 = vld [vmem:[%s2201 + $0xc9] sm:$0xff]
      %v2514 = vld [vmem:[%s2201 + $0xd9] sm:$0xff]
      %v2515 = vld [vmem:[%s2201 + $0xe1] sm:$0xff]
      %v2516 = vld [vmem:[%s2201 + $0xf1] sm:$0xff]
      %v2517 = vld [vmem:[%s2201 + $0xf9] sm:$0xff]
      %v2518 = vld [vmem:[%s2201 + $0x109] sm:$0xff]
      %v2519 = vld [vmem:[%s2201 + $0x111] sm:$0xff]
      %v2520 = vld [vmem:[%s2201 + $0x121] sm:$0xff]
      %v2521 = vld [vmem:[%s2201 + $0x129] sm:$0xff]
      %v2522 = vld [vmem:[%s2201 + $0x139] sm:$0xff]
      %v2523 = vld [vmem:[%s2201 + $0x141] sm:$0xff]
      %v2524 = vld [vmem:[%s2201 + $0x151] sm:$0xff]
      %v2525 = vld [vmem:[%s2201 + $0x159] sm:$0xff]
      %v2526 = vld [vmem:[%s2201 + $0x169] sm:$0xff]
      %v2527 = vld [vmem:[%s2201 + $0x171] sm:$0xff]
      %v2528 = vpack.c.bf16 %v2497, %v2496
      %v2529 = vpack.c.bf16 %v2499, %v2498
      %v2530 = vpack.c.bf16 %v2501, %v2500
      %v2531 = vpack.c.bf16 %v2503, %v2502
      %v2532 = vpack.c.bf16 %v2505, %v2504
      %v2533 = vpack.c.bf16 %v2507, %v2506
      %v2534 = vpack.c.bf16 %v2509, %v2508
      %v2535 = vpack.c.bf16 %v2511, %v2510
      %v2536 = vpack.c.bf16 %v2513, %v2512
      %v2537 = vpack.c.bf16 %v2515, %v2514
      %v2538 = vpack.c.bf16 %v2517, %v2516
      %v2539 = vpack.c.bf16 %v2519, %v2518
      %v2540 = vpack.c.bf16 %v2521, %v2520
      %v2541 = vpack.c.bf16 %v2523, %v2522
      %v2542 = vpack.c.bf16 %v2525, %v2524
      %v2543 = vpack.c.bf16 %v2527, %v2526
      %s2544 = scalar_lea.vmem %s3, 14
      %v2545 = vld [vmem:[%s2544] sm:$0x3]
      %v2547 = vsel %vm232, %v2528, 0
      %v2550 = vsel %vm232, %v2529, 0
      %v2553 = vsel %vm232, %v2530, 0
      %v2556 = vsel %vm232, %v2531, 0
      %v2559 = vsel %vm232, %v2532, 0
      %v2562 = vsel %vm232, %v2533, 0
      %v2565 = vsel %vm232, %v2534, 0
      %v2568 = vsel %vm232, %v2535, 0
      %v2571 = vsel %vm232, %v2536, 0
      %v2574 = vsel %vm232, %v2537, 0
      %v2577 = vsel %vm232, %v2538, 0
      %v2580 = vsel %vm232, %v2539, 0
      %v2583 = vsel %vm232, %v2540, 0
      %v2586 = vsel %vm232, %v2541, 0
      %v2589 = vsel %vm232, %v2542, 0
      %v2592 = vsel %vm232, %v2543, 0
      %v2595 = vsel %vm648, %v2545, 0
      %2597 = vmatprep.subr.bf16.mxu0 0
      %2598 = vmatpush1.bf16.msra.mxu0 %v2595
      %2599 = vmatprep.subr.bf16.mxu0 0
      %2600 = vmatpush1.bf16.msra.mxu0 0
      %2601 = vmatprep.subr.bf16.mxu0 0
      %2602 = vmatpush1.bf16.msra.mxu0 0
      %2603 = vmatprep.subr.bf16.mxu0 0
      %2604 = vmatpush1.bf16.msra.mxu0 0
      %2605 = vmatprep.subr.bf16.mxu0 0
      %2606 = vmatpush1.bf16.msra.mxu0 0
      %2607 = vmatprep.subr.bf16.mxu0 0
      %2608 = vmatpush1.bf16.msra.mxu0 0
      %2609 = vmatprep.subr.bf16.mxu0 0
      %2610 = vmatpush1.bf16.msra.mxu0 0
      %2611 = vmatprep.subr.bf16.mxu0 0
      %2612 = vmatpush1.bf16.msra.mxu0 0
      %2613 = vmatprep.subr.bf16.mxu0 0
      %2614 = vmatpush1.bf16.msra.mxu0 0
      %2615 = vmatprep.subr.bf16.mxu0 0
      %2616 = vmatpush1.bf16.msra.mxu0 0
      %2617 = vmatprep.subr.bf16.mxu0 0
      %2618 = vmatpush1.bf16.msra.mxu0 0
      %2619 = vmatprep.subr.bf16.mxu0 0
      %2620 = vmatpush1.bf16.msra.mxu0 0
      %2621 = vmatprep.subr.bf16.mxu0 0
      %2622 = vmatpush1.bf16.msra.mxu0 0
      %2623 = vmatprep.subr.bf16.mxu0 0
      %2624 = vmatpush1.bf16.msra.mxu0 0
      %2625 = vmatprep.subr.bf16.mxu0 0
      %2626 = vmatpush1.bf16.msra.mxu0 0
      %2627 = vmatprep.subr.bf16.mxu0 0
      %2628 = vmatpush1.bf16.msra.mxu0 0
      %2629 = vmatprep.mubr.bf16.mxu0 0
      %2630 = vmatmul.mubr.bf16.gmra.mrb[0].mxu0 %v2547
      %v2631 = vpop.f32.mrb[0].mxu0
      %v2632 = vadd.f32 0.0, %v2631
      %v2633 = vpop.f32.mrb[0].mxu0
      %v2634 = vpop.f32.mrb[0].mxu0
      %v2635 = vadd.f32 0.0, %v2634
      %v2636 = vpop.f32.mrb[0].mxu0
      %2637 = vmatprep.mubr.bf16.mxu0 0
      %2638 = vmatmul.mubr.bf16.gmra.mrb[0].mxu0 %v2550
      %v2639 = vpop.f32.mrb[0].mxu0
      %v2640 = vadd.f32 0.0, %v2639
      %v2641 = vpop.f32.mrb[0].mxu0
      %v2642 = vpop.f32.mrb[0].mxu0
      %v2643 = vadd.f32 0.0, %v2642
      %v2644 = vpop.f32.mrb[0].mxu0
      %2645 = vmatprep.mubr.bf16.mxu0 0
      %2646 = vmatmul.mubr.bf16.gmra.mrb[0].mxu0 %v2553
      %v2647 = vpop.f32.mrb[0].mxu0
      %v2648 = vadd.f32 0.0, %v2647
      %v2649 = vpop.f32.mrb[0].mxu0
      %v2650 = vpop.f32.mrb[0].mxu0
      %v2651 = vadd.f32 0.0, %v2650
      %v2652 = vpop.f32.mrb[0].mxu0
      %2653 = vmatprep.mubr.bf16.mxu0 0
      %2654 = vmatmul.mubr.bf16.gmra.mrb[0].mxu0 %v2556
      %v2655 = vpop.f32.mrb[0].mxu0
      %v2656 = vadd.f32 0.0, %v2655
      %v2657 = vpop.f32.mrb[0].mxu0
      %v2658 = vpop.f32.mrb[0].mxu0
      %v2659 = vadd.f32 0.0, %v2658
      %v2660 = vpop.f32.mrb[0].mxu0
      %2661 = vmatprep.mubr.bf16.mxu0 0
      %2662 = vmatmul.mubr.bf16.gmra.mrb[0].mxu0 %v2559
      %v2663 = vpop.f32.mrb[0].mxu0
      %v2664 = vadd.f32 0.0, %v2663
      %v2665 = vpop.f32.mrb[0].mxu0
      %v2666 = vpop.f32.mrb[0].mxu0
      %v2667 = vadd.f32 0.0, %v2666
      %v2668 = vpop.f32.mrb[0].mxu0
      %2669 = vmatprep.mubr.bf16.mxu0 0
      %2670 = vmatmul.mubr.bf16.gmra.mrb[0].mxu0 %v2562
      %v2671 = vpop.f32.mrb[0].mxu0
      %v2672 = vadd.f32 0.0, %v2671
      %v2673 = vpop.f32.mrb[0].mxu0
      %v2674 = vpop.f32.mrb[0].mxu0
      %v2675 = vadd.f32 0.0, %v2674
      %v2676 = vpop.f32.mrb[0].mxu0
      %2677 = vmatprep.mubr.bf16.mxu0 0
      %2678 = vmatmul.mubr.bf16.gmra.mrb[0].mxu0 %v2565
      %v2679 = vpop.f32.mrb[0].mxu0
      %v2680 = vadd.f32 0.0, %v2679
      %v2681 = vpop.f32.mrb[0].mxu0
      %v2682 = vpop.f32.mrb[0].mxu0
      %v2683 = vadd.f32 0.0, %v2682
      %v2684 = vpop.f32.mrb[0].mxu0
      %2685 = vmatprep.mubr.bf16.mxu0 0
      %2686 = vmatmul.mubr.bf16.gmra.mrb[0].mxu0 %v2568
      %v2687 = vpop.f32.mrb[0].mxu0
      %v2688 = vadd.f32 0.0, %v2687
      %v2689 = vpop.f32.mrb[0].mxu0
      %v2690 = vpop.f32.mrb[0].mxu0
      %v2691 = vadd.f32 0.0, %v2690
      %v2692 = vpop.f32.mrb[0].mxu0
      %2693 = vmatprep.mubr.bf16.mxu0 0
      %2694 = vmatmul.mubr.bf16.gmra.mrb[0].mxu0 %v2571
      %v2695 = vpop.f32.mrb[0].mxu0
      %v2696 = vadd.f32 0.0, %v2695
      %v2697 = vpop.f32.mrb[0].mxu0
      %v2698 = vpop.f32.mrb[0].mxu0
      %v2699 = vadd.f32 0.0, %v2698
      %v2700 = vpop.f32.mrb[0].mxu0
      %2701 = vmatprep.mubr.bf16.mxu0 0
      %2702 = vmatmul.mubr.bf16.gmra.mrb[0].mxu0 %v2574
      %v2703 = vpop.f32.mrb[0].mxu0
      %v2704 = vadd.f32 0.0, %v2703
      %v2705 = vpop.f32.mrb[0].mxu0
      %v2706 = vpop.f32.mrb[0].mxu0
      %v2707 = vadd.f32 0.0, %v2706
      %v2708 = vpop.f32.mrb[0].mxu0
      %2709 = vmatprep.mubr.bf16.mxu0 0
      %2710 = vmatmul.mubr.bf16.gmra.mrb[0].mxu0 %v2577
      %v2711 = vpop.f32.mrb[0].mxu0
      %v2712 = vadd.f32 0.0, %v2711
      %v2713 = vpop.f32.mrb[0].mxu0
      %v2714 = vpop.f32.mrb[0].mxu0
      %v2715 = vadd.f32 0.0, %v2714
      %v2716 = vpop.f32.mrb[0].mxu0
      %2717 = vmatprep.mubr.bf16.mxu0 0
      %2718 = vmatmul.mubr.bf16.gmra.mrb[0].mxu0 %v2580
      %v2719 = vpop.f32.mrb[0].mxu0
      %v2720 = vadd.f32 0.0, %v2719
      %v2721 = vpop.f32.mrb[0].mxu0
      %v2722 = vpop.f32.mrb[0].mxu0
      %v2723 = vadd.f32 0.0, %v2722
      %v2724 = vpop.f32.mrb[0].mxu0
      %2725 = vmatprep.mubr.bf16.mxu0 0
      %2726 = vmatmul.mubr.bf16.gmra.mrb[0].mxu0 %v2583
      %v2727 = vpop.f32.mrb[0].mxu0
      %v2728 = vadd.f32 0.0, %v2727
      %v2729 = vpop.f32.mrb[0].mxu0
      %v2730 = vpop.f32.mrb[0].mxu0
      %v2731 = vadd.f32 0.0, %v2730
      %v2732 = vpop.f32.mrb[0].mxu0
      %2733 = vmatprep.mubr.bf16.mxu0 0
      %2734 = vmatmul.mubr.bf16.gmra.mrb[0].mxu0 %v2586
      %v2735 = vpop.f32.mrb[0].mxu0
      %v2736 = vadd.f32 0.0, %v2735
      %v2737 = vpop.f32.mrb[0].mxu0
      %v2738 = vpop.f32.mrb[0].mxu0
      %v2739 = vadd.f32 0.0, %v2738
      %v2740 = vpop.f32.mrb[0].mxu0
      %2741 = vmatprep.mubr.bf16.mxu0 0
      %2742 = vmatmul.mubr.bf16.gmra.mrb[0].mxu0 %v2589
      %v2743 = vpop.f32.mrb[0].mxu0
      %v2744 = vadd.f32 0.0, %v2743
      %v2745 = vpop.f32.mrb[0].mxu0
      %v2746 = vpop.f32.mrb[0].mxu0
      %v2747 = vadd.f32 0.0, %v2746
      %v2748 = vpop.f32.mrb[0].mxu0
      %2749 = vmatprep.mubr.bf16.mxu0 0
      %2750 = vmatmul.mubr.bf16.gmra.mrb[0].mxu0 %v2592
      %v2751 = vpop.f32.mrb[0].mxu0
      %v2752 = vadd.f32 0.0, %v2751
      %v2753 = vpop.f32.mrb[0].mxu0
      %v2754 = vpop.f32.mrb[0].mxu0
      %v2755 = vadd.f32 0.0, %v2754
      %v2756 = vpop.f32.mrb[0].mxu0
      %2757 = vdwg.mxu0
      %v2758 = vadd.f32 %v2464, %v2632
      %v2759 = vadd.f32 %v2465, %v2635
      %v2760 = vadd.f32 %v2466, %v2640
      %v2761 = vadd.f32 %v2467, %v2643
      %v2762 = vadd.f32 %v2468, %v2648
      %v2763 = vadd.f32 %v2469, %v2651
      %v2764 = vadd.f32 %v2470, %v2656
      %v2765 = vadd.f32 %v2471, %v2659
      %v2766 = vadd.f32 %v2472, %v2664
      %v2767 = vadd.f32 %v2473, %v2667
      %v2768 = vadd.f32 %v2474, %v2672
      %v2769 = vadd.f32 %v2475, %v2675
      %v2770 = vadd.f32 %v2476, %v2680
      %v2771 = vadd.f32 %v2477, %v2683
      %v2772 = vadd.f32 %v2478, %v2688
      %v2773 = vadd.f32 %v2479, %v2691
      %v2774 = vadd.f32 %v2480, %v2696
      %v2775 = vadd.f32 %v2481, %v2699
      %v2776 = vadd.f32 %v2482, %v2704
      %v2777 = vadd.f32 %v2483, %v2707
      %v2778 = vadd.f32 %v2484, %v2712
      %v2779 = vadd.f32 %v2485, %v2715
      %v2780 = vadd.f32 %v2486, %v2720
      %v2781 = vadd.f32 %v2487, %v2723
      %v2782 = vadd.f32 %v2488, %v2728
      %v2783 = vadd.f32 %v2489, %v2731
      %v2784 = vadd.f32 %v2490, %v2736
      %v2785 = vadd.f32 %v2491, %v2739
      %v2786 = vadd.f32 %v2492, %v2744
      %v2787 = vadd.f32 %v2493, %v2747
      %v2788 = vadd.f32 %v2494, %v2752
      %v2789 = vadd.f32 %v2495, %v2755
      %v2790 = vld [vmem:[%s2201 + $0x2] sm:$0xff]
      %v2791 = vld [vmem:[%s2201 + $0xa] sm:$0xff]
      %v2792 = vld [vmem:[%s2201 + $0x1a] sm:$0xff]
      %v2793 = vld [vmem:[%s2201 + $0x22] sm:$0xff]
      %v2794 = vld [vmem:[%s2201 + $0x32] sm:$0xff]
      %v2795 = vld [vmem:[%s2201 + $0x3a] sm:$0xff]
      %v2796 = vld [vmem:[%s2201 + $0x4a] sm:$0xff]
      %v2797 = vld [vmem:[%s2201 + $0x52] sm:$0xff]
      %v2798 = vld [vmem:[%s2201 + $0x62] sm:$0xff]
      %v2799 = vld [vmem:[%s2201 + $0x6a] sm:$0xff]
      %v2800 = vld [vmem:[%s2201 + $0x7a] sm:$0xff]
      %v2801 = vld [vmem:[%s2201 + $0x82] sm:$0xff]
      %v2802 = vld [vmem:[%s2201 + $0x92] sm:$0xff]
      %v2803 = vld [vmem:[%s2201 + $0x9a] sm:$0xff]
      %v2804 = vld [vmem:[%s2201 + $0xaa] sm:$0xff]
      %v2805 = vld [vmem:[%s2201 + $0xb2] sm:$0xff]
      %v2806 = vld [vmem:[%s2201 + $0xc2] sm:$0xff]
      %v2807 = vld [vmem:[%s2201 + $0xca] sm:$0xff]
      %v2808 = vld [vmem:[%s2201 + $0xda] sm:$0xff]
      %v2809 = vld [vmem:[%s2201 + $0xe2] sm:$0xff]
      %v2810 = vld [vmem:[%s2201 + $0xf2] sm:$0xff]
      %v2811 = vld [vmem:[%s2201 + $0xfa] sm:$0xff]
      %v2812 = vld [vmem:[%s2201 + $0x10a] sm:$0xff]
      %v2813 = vld [vmem:[%s2201 + $0x112] sm:$0xff]
      %v2814 = vld [vmem:[%s2201 + $0x122] sm:$0xff]
      %v2815 = vld [vmem:[%s2201 + $0x12a] sm:$0xff]
      %v2816 = vld [vmem:[%s2201 + $0x13a] sm:$0xff]
      %v2817 = vld [vmem:[%s2201 + $0x142] sm:$0xff]
      %v2818 = vld [vmem:[%s2201 + $0x152] sm:$0xff]
      %v2819 = vld [vmem:[%s2201 + $0x15a] sm:$0xff]
      %v2820 = vld [vmem:[%s2201 + $0x16a] sm:$0xff]
      %v2821 = vld [vmem:[%s2201 + $0x172] sm:$0xff]
      %v2822 = vpack.c.bf16 %v2791, %v2790
      %v2823 = vpack.c.bf16 %v2793, %v2792
      %v2824 = vpack.c.bf16 %v2795, %v2794
      %v2825 = vpack.c.bf16 %v2797, %v2796
      %v2826 = vpack.c.bf16 %v2799, %v2798
      %v2827 = vpack.c.bf16 %v2801, %v2800
      %v2828 = vpack.c.bf16 %v2803, %v2802
      %v2829 = vpack.c.bf16 %v2805, %v2804
      %v2830 = vpack.c.bf16 %v2807, %v2806
      %v2831 = vpack.c.bf16 %v2809, %v2808
      %v2832 = vpack.c.bf16 %v2811, %v2810
      %v2833 = vpack.c.bf16 %v2813, %v2812
      %v2834 = vpack.c.bf16 %v2815, %v2814
      %v2835 = vpack.c.bf16 %v2817, %v2816
      %v2836 = vpack.c.bf16 %v2819, %v2818
      %v2837 = vpack.c.bf16 %v2821, %v2820
      %s2838 = scalar_lea.vmem %s3, 16
      %v2839 = vld [vmem:[%s2838] sm:$0x3]
      %v2841 = vsel %vm232, %v2822, 0
      %v2844 = vsel %vm232, %v2823, 0
      %v2847 = vsel %vm232, %v2824, 0
      %v2850 = vsel %vm232, %v2825, 0
      %v2853 = vsel %vm232, %v2826, 0
      %v2856 = vsel %vm232, %v2827, 0
      %v2859 = vsel %vm232, %v2828, 0
      %v2862 = vsel %vm232, %v2829, 0
      %v2865 = vsel %vm232, %v2830, 0
      %v2868 = vsel %vm232, %v2831, 0
      %v2871 = vsel %vm232, %v2832, 0
      %v2874 = vsel %vm232, %v2833, 0
      %v2877 = vsel %vm232, %v2834, 0
      %v2880 = vsel %vm232, %v2835, 0
      %v2883 = vsel %vm232, %v2836, 0
      %v2886 = vsel %vm232, %v2837, 0
      %v2889 = vsel %vm648, %v2839, 0
      %2891 = vmatprep.subr.bf16.mxu0 0
      %2892 = vmatpush1.bf16.msra.mxu0 %v2889
      %2893 = vmatprep.subr.bf16.mxu0 0
      %2894 = vmatpush1.bf16.msra.mxu0 0
      %2895 = vmatprep.subr.bf16.mxu0 0
      %2896 = vmatpush1.bf16.msra.mxu0 0
      %2897 = vmatprep.subr.bf16.mxu0 0
      %2898 = vmatpush1.bf16.msra.mxu0 0
      %2899 = vmatprep.subr.bf16.mxu0 0
      %2900 = vmatpush1.bf16.msra.mxu0 0
      %2901 = vmatprep.subr.bf16.mxu0 0
      %2902 = vmatpush1.bf16.msra.mxu0 0
      %2903 = vmatprep.subr.bf16.mxu0 0
      %2904 = vmatpush1.bf16.msra.mxu0 0
      %2905 = vmatprep.subr.bf16.mxu0 0
      %2906 = vmatpush1.bf16.msra.mxu0 0
      %2907 = vmatprep.subr.bf16.mxu0 0
      %2908 = vmatpush1.bf16.msra.mxu0 0
      %2909 = vmatprep.subr.bf16.mxu0 0
      %2910 = vmatpush1.bf16.msra.mxu0 0
      %2911 = vmatprep.subr.bf16.mxu0 0
      %2912 = vmatpush1.bf16.msra.mxu0 0
      %2913 = vmatprep.subr.bf16.mxu0 0
      %2914 = vmatpush1.bf16.msra.mxu0 0
      %2915 = vmatprep.subr.bf16.mxu0 0
      %2916 = vmatpush1.bf16.msra.mxu0 0
      %2917 = vmatprep.subr.bf16.mxu0 0
      %2918 = vmatpush1.bf16.msra.mxu0 0
      %2919 = vmatprep.subr.bf16.mxu0 0
      %2920 = vmatpush1.bf16.msra.mxu0 0
      %2921 = vmatprep.subr.bf16.mxu0 0
      %2922 = vmatpush1.bf16.msra.mxu0 0
      %2923 = vmatprep.mubr.bf16.mxu0 0
      %2924 = vmatmul.mubr.bf16.gmra.mrb[0].mxu0 %v2841
      %v2925 = vpop.f32.mrb[0].mxu0
      %v2926 = vadd.f32 0.0, %v2925
      %v2927 = vpop.f32.mrb[0].mxu0
      %v2928 = vpop.f32.mrb[0].mxu0
      %v2929 = vadd.f32 0.0, %v2928
      %v2930 = vpop.f32.mrb[0].mxu0
      %2931 = vmatprep.mubr.bf16.mxu0 0
      %2932 = vmatmul.mubr.bf16.gmra.mrb[0].mxu0 %v2844
      %v2933 = vpop.f32.mrb[0].mxu0
      %v2934 = vadd.f32 0.0, %v2933
      %v2935 = vpop.f32.mrb[0].mxu0
      %v2936 = vpop.f32.mrb[0].mxu0
      %v2937 = vadd.f32 0.0, %v2936
      %v2938 = vpop.f32.mrb[0].mxu0
      %2939 = vmatprep.mubr.bf16.mxu0 0
      %2940 = vmatmul.mubr.bf16.gmra.mrb[0].mxu0 %v2847
      %v2941 = vpop.f32.mrb[0].mxu0
      %v2942 = vadd.f32 0.0, %v2941
      %v2943 = vpop.f32.mrb[0].mxu0
      %v2944 = vpop.f32.mrb[0].mxu0
      %v2945 = vadd.f32 0.0, %v2944
      %v2946 = vpop.f32.mrb[0].mxu0
      %2947 = vmatprep.mubr.bf16.mxu0 0
      %2948 = vmatmul.mubr.bf16.gmra.mrb[0].mxu0 %v2850
      %v2949 = vpop.f32.mrb[0].mxu0
      %v2950 = vadd.f32 0.0, %v2949
      %v2951 = vpop.f32.mrb[0].mxu0
      %v2952 = vpop.f32.mrb[0].mxu0
      %v2953 = vadd.f32 0.0, %v2952
      %v2954 = vpop.f32.mrb[0].mxu0
      %2955 = vmatprep.mubr.bf16.mxu0 0
      %2956 = vmatmul.mubr.bf16.gmra.mrb[0].mxu0 %v2853
      %v2957 = vpop.f32.mrb[0].mxu0
      %v2958 = vadd.f32 0.0, %v2957
      %v2959 = vpop.f32.mrb[0].mxu0
      %v2960 = vpop.f32.mrb[0].mxu0
      %v2961 = vadd.f32 0.0, %v2960
      %v2962 = vpop.f32.mrb[0].mxu0
      %2963 = vmatprep.mubr.bf16.mxu0 0
      %2964 = vmatmul.mubr.bf16.gmra.mrb[0].mxu0 %v2856
      %v2965 = vpop.f32.mrb[0].mxu0
      %v2966 = vadd.f32 0.0, %v2965
      %v2967 = vpop.f32.mrb[0].mxu0
      %v2968 = vpop.f32.mrb[0].mxu0
      %v2969 = vadd.f32 0.0, %v2968
      %v2970 = vpop.f32.mrb[0].mxu0
      %2971 = vmatprep.mubr.bf16.mxu0 0
      %2972 = vmatmul.mubr.bf16.gmra.mrb[0].mxu0 %v2859
      %v2973 = vpop.f32.mrb[0].mxu0
      %v2974 = vadd.f32 0.0, %v2973
      %v2975 = vpop.f32.mrb[0].mxu0
      %v2976 = vpop.f32.mrb[0].mxu0
      %v2977 = vadd.f32 0.0, %v2976
      %v2978 = vpop.f32.mrb[0].mxu0
      %2979 = vmatprep.mubr.bf16.mxu0 0
      %2980 = vmatmul.mubr.bf16.gmra.mrb[0].mxu0 %v2862
      %v2981 = vpop.f32.mrb[0].mxu0
      %v2982 = vadd.f32 0.0, %v2981
      %v2983 = vpop.f32.mrb[0].mxu0
      %v2984 = vpop.f32.mrb[0].mxu0
      %v2985 = vadd.f32 0.0, %v2984
      %v2986 = vpop.f32.mrb[0].mxu0
      %2987 = vmatprep.mubr.bf16.mxu0 0
      %2988 = vmatmul.mubr.bf16.gmra.mrb[0].mxu0 %v2865
      %v2989 = vpop.f32.mrb[0].mxu0
      %v2990 = vadd.f32 0.0, %v2989
      %v2991 = vpop.f32.mrb[0].mxu0
      %v2992 = vpop.f32.mrb[0].mxu0
      %v2993 = vadd.f32 0.0, %v2992
      %v2994 = vpop.f32.mrb[0].mxu0
      %2995 = vmatprep.mubr.bf16.mxu0 0
      %2996 = vmatmul.mubr.bf16.gmra.mrb[0].mxu0 %v2868
      %v2997 = vpop.f32.mrb[0].mxu0
      %v2998 = vadd.f32 0.0, %v2997
      %v2999 = vpop.f32.mrb[0].mxu0
      %v3000 = vpop.f32.mrb[0].mxu0
      %v3001 = vadd.f32 0.0, %v3000
      %v3002 = vpop.f32.mrb[0].mxu0
      %3003 = vmatprep.mubr.bf16.mxu0 0
      %3004 = vmatmul.mubr.bf16.gmra.mrb[0].mxu0 %v2871
      %v3005 = vpop.f32.mrb[0].mxu0
      %v3006 = vadd.f32 0.0, %v3005
      %v3007 = vpop.f32.mrb[0].mxu0
      %v3008 = vpop.f32.mrb[0].mxu0
      %v3009 = vadd.f32 0.0, %v3008
      %v3010 = vpop.f32.mrb[0].mxu0
      %3011 = vmatprep.mubr.bf16.mxu0 0
      %3012 = vmatmul.mubr.bf16.gmra.mrb[0].mxu0 %v2874
      %v3013 = vpop.f32.mrb[0].mxu0
      %v3014 = vadd.f32 0.0, %v3013
      %v3015 = vpop.f32.mrb[0].mxu0
      %v3016 = vpop.f32.mrb[0].mxu0
      %v3017 = vadd.f32 0.0, %v3016
      %v3018 = vpop.f32.mrb[0].mxu0
      %3019 = vmatprep.mubr.bf16.mxu0 0
      %3020 = vmatmul.mubr.bf16.gmra.mrb[0].mxu0 %v2877
      %v3021 = vpop.f32.mrb[0].mxu0
      %v3022 = vadd.f32 0.0, %v3021
      %v3023 = vpop.f32.mrb[0].mxu0
      %v3024 = vpop.f32.mrb[0].mxu0
      %v3025 = vadd.f32 0.0, %v3024
      %v3026 = vpop.f32.mrb[0].mxu0
      %3027 = vmatprep.mubr.bf16.mxu0 0
      %3028 = vmatmul.mubr.bf16.gmra.mrb[0].mxu0 %v2880
      %v3029 = vpop.f32.mrb[0].mxu0
      %v3030 = vadd.f32 0.0, %v3029
      %v3031 = vpop.f32.mrb[0].mxu0
      %v3032 = vpop.f32.mrb[0].mxu0
      %v3033 = vadd.f32 0.0, %v3032
      %v3034 = vpop.f32.mrb[0].mxu0
      %3035 = vmatprep.mubr.bf16.mxu0 0
      %3036 = vmatmul.mubr.bf16.gmra.mrb[0].mxu0 %v2883
      %v3037 = vpop.f32.mrb[0].mxu0
      %v3038 = vadd.f32 0.0, %v3037
      %v3039 = vpop.f32.mrb[0].mxu0
      %v3040 = vpop.f32.mrb[0].mxu0
      %v3041 = vadd.f32 0.0, %v3040
      %v3042 = vpop.f32.mrb[0].mxu0
      %3043 = vmatprep.mubr.bf16.mxu0 0
      %3044 = vmatmul.mubr.bf16.gmra.mrb[0].mxu0 %v2886
      %v3045 = vpop.f32.mrb[0].mxu0
      %v3046 = vadd.f32 0.0, %v3045
      %v3047 = vpop.f32.mrb[0].mxu0
      %v3048 = vpop.f32.mrb[0].mxu0
      %v3049 = vadd.f32 0.0, %v3048
      %v3050 = vpop.f32.mrb[0].mxu0
      %3051 = vdwg.mxu0
      %v3052 = vadd.f32 %v2758, %v2926
      %v3053 = vadd.f32 %v2759, %v2929
      %v3054 = vadd.f32 %v2760, %v2934
      %v3055 = vadd.f32 %v2761, %v2937
      %v3056 = vadd.f32 %v2762, %v2942
      %v3057 = vadd.f32 %v2763, %v2945
      %v3058 = vadd.f32 %v2764, %v2950
      %v3059 = vadd.f32 %v2765, %v2953
      %v3060 = vadd.f32 %v2766, %v2958
      %v3061 = vadd.f32 %v2767, %v2961
      %v3062 = vadd.f32 %v2768, %v2966
      %v3063 = vadd.f32 %v2769, %v2969
      %v3064 = vadd.f32 %v2770, %v2974
      %v3065 = vadd.f32 %v2771, %v2977
      %v3066 = vadd.f32 %v2772, %v2982
      %v3067 = vadd.f32 %v2773, %v2985
      %v3068 = vadd.f32 %v2774, %v2990
      %v3069 = vadd.f32 %v2775, %v2993
      %v3070 = vadd.f32 %v2776, %v2998
      %v3071 = vadd.f32 %v2777, %v3001
      %v3072 = vadd.f32 %v2778, %v3006
      %v3073 = vadd.f32 %v2779, %v3009
      %v3074 = vadd.f32 %v2780, %v3014
      %v3075 = vadd.f32 %v2781, %v3017
      %v3076 = vadd.f32 %v2782, %v3022
      %v3077 = vadd.f32 %v2783, %v3025
      %v3078 = vadd.f32 %v2784, %v3030
      %v3079 = vadd.f32 %v2785, %v3033
      %v3080 = vadd.f32 %v2786, %v3038
      %v3081 = vadd.f32 %v2787, %v3041
      %v3082 = vadd.f32 %v2788, %v3046
      %v3083 = vadd.f32 %v2789, %v3049
      %s3084 = ssub.f32 0.0, %s231
      %v3085 = vstv %s3084
      %v3086 = vmax.f32 %v3052, %v3085
      %v3087 = vmax.f32 %v3053, %v3085
      %v3088 = vmax.f32 %v3054, %v3085
      %v3089 = vmax.f32 %v3055, %v3085
      %v3090 = vmax.f32 %v3056, %v3085
      %v3091 = vmax.f32 %v3057, %v3085
      %v3092 = vmax.f32 %v3058, %v3085
      %v3093 = vmax.f32 %v3059, %v3085
      %v3094 = vmax.f32 %v3060, %v3085
      %v3095 = vmax.f32 %v3061, %v3085
      %v3096 = vmax.f32 %v3062, %v3085
      %v3097 = vmax.f32 %v3063, %v3085
      %v3098 = vmax.f32 %v3064, %v3085
      %v3099 = vmax.f32 %v3065, %v3085
      %v3100 = vmax.f32 %v3066, %v3085
      %v3101 = vmax.f32 %v3067, %v3085
      %v3102 = vmax.f32 %v3068, %v3085
      %v3103 = vmax.f32 %v3069, %v3085
      %v3104 = vmax.f32 %v3070, %v3085
      %v3105 = vmax.f32 %v3071, %v3085
      %v3106 = vmax.f32 %v3072, %v3085
      %v3107 = vmax.f32 %v3073, %v3085
      %v3108 = vmax.f32 %v3074, %v3085
      %v3109 = vmax.f32 %v3075, %v3085
      %v3110 = vmax.f32 %v3076, %v3085
      %v3111 = vmax.f32 %v3077, %v3085
      %v3112 = vmax.f32 %v3078, %v3085
      %v3113 = vmax.f32 %v3079, %v3085
      %v3114 = vmax.f32 %v3080, %v3085
      %v3115 = vmax.f32 %v3081, %v3085
      %v3116 = vmax.f32 %v3082, %v3085
      %v3117 = vmax.f32 %v3083, %v3085
      %v3118 = vstv %s231
      %v3119 = vmin.f32 %v3086, %v3118
      %v3120 = vmin.f32 %v3087, %v3118
      %v3121 = vmin.f32 %v3088, %v3118
      %v3122 = vmin.f32 %v3089, %v3118
      %v3123 = vmin.f32 %v3090, %v3118
      %v3124 = vmin.f32 %v3091, %v3118
      %v3125 = vmin.f32 %v3092, %v3118
      %v3126 = vmin.f32 %v3093, %v3118
      %v3127 = vmin.f32 %v3094, %v3118
      %v3128 = vmin.f32 %v3095, %v3118
      %v3129 = vmin.f32 %v3096, %v3118
      %v3130 = vmin.f32 %v3097, %v3118
      %v3131 = vmin.f32 %v3098, %v3118
      %v3132 = vmin.f32 %v3099, %v3118
      %v3133 = vmin.f32 %v3100, %v3118
      %v3134 = vmin.f32 %v3101, %v3118
      %v3135 = vmin.f32 %v3102, %v3118
      %v3136 = vmin.f32 %v3103, %v3118
      %v3137 = vmin.f32 %v3104, %v3118
      %v3138 = vmin.f32 %v3105, %v3118
      %v3139 = vmin.f32 %v3106, %v3118
      %v3140 = vmin.f32 %v3107, %v3118
      %v3141 = vmin.f32 %v3108, %v3118
      %v3142 = vmin.f32 %v3109, %v3118
      %v3143 = vmin.f32 %v3110, %v3118
      %v3144 = vmin.f32 %v3111, %v3118
      %v3145 = vmin.f32 %v3112, %v3118
      %v3146 = vmin.f32 %v3113, %v3118
      %v3147 = vmin.f32 %v3114, %v3118
      %v3148 = vmin.f32 %v3115, %v3118
      %v3149 = vmin.f32 %v3116, %v3118
      %v3150 = vmin.f32 %v3117, %v3118
      %vm3151 = vcmp.ge.f32.partialorder %v3119, 0.0
      %vm3152 = vcmp.ge.f32.partialorder %v3120, 0.0
      %vm3153 = vcmp.ge.f32.partialorder %v3121, 0.0
      %vm3154 = vcmp.ge.f32.partialorder %v3122, 0.0
      %vm3155 = vcmp.ge.f32.partialorder %v3123, 0.0
      %vm3156 = vcmp.ge.f32.partialorder %v3124, 0.0
      %vm3157 = vcmp.ge.f32.partialorder %v3125, 0.0
      %vm3158 = vcmp.ge.f32.partialorder %v3126, 0.0
      %vm3159 = vcmp.ge.f32.partialorder %v3127, 0.0
      %vm3160 = vcmp.ge.f32.partialorder %v3128, 0.0
      %vm3161 = vcmp.ge.f32.partialorder %v3129, 0.0
      %vm3162 = vcmp.ge.f32.partialorder %v3130, 0.0
      %vm3163 = vcmp.ge.f32.partialorder %v3131, 0.0
      %vm3164 = vcmp.ge.f32.partialorder %v3132, 0.0
      %vm3165 = vcmp.ge.f32.partialorder %v3133, 0.0
      %vm3166 = vcmp.ge.f32.partialorder %v3134, 0.0
      %vm3167 = vcmp.ge.f32.partialorder %v3135, 0.0
      %vm3168 = vcmp.ge.f32.partialorder %v3136, 0.0
      %vm3169 = vcmp.ge.f32.partialorder %v3137, 0.0
      %vm3170 = vcmp.ge.f32.partialorder %v3138, 0.0
      %vm3171 = vcmp.ge.f32.partialorder %v3139, 0.0
      %vm3172 = vcmp.ge.f32.partialorder %v3140, 0.0
      %vm3173 = vcmp.ge.f32.partialorder %v3141, 0.0
      %vm3174 = vcmp.ge.f32.partialorder %v3142, 0.0
      %vm3175 = vcmp.ge.f32.partialorder %v3143, 0.0
      %vm3176 = vcmp.ge.f32.partialorder %v3144, 0.0
      %vm3177 = vcmp.ge.f32.partialorder %v3145, 0.0
      %vm3178 = vcmp.ge.f32.partialorder %v3146, 0.0
      %vm3179 = vcmp.ge.f32.partialorder %v3147, 0.0
      %vm3180 = vcmp.ge.f32.partialorder %v3148, 0.0
      %vm3181 = vcmp.ge.f32.partialorder %v3149, 0.0
      %vm3182 = vcmp.ge.f32.partialorder %v3150, 0.0
      %v3183 = vmul.f32 %v3119, 0.01
      %v3184 = vmul.f32 %v3120, 0.01
      %v3185 = vmul.f32 %v3121, 0.01
      %v3186 = vmul.f32 %v3122, 0.01
      %v3187 = vmul.f32 %v3123, 0.01
      %v3188 = vmul.f32 %v3124, 0.01
      %v3189 = vmul.f32 %v3125, 0.01
      %v3190 = vmul.f32 %v3126, 0.01
      %v3191 = vmul.f32 %v3127, 0.01
      %v3192 = vmul.f32 %v3128, 0.01
      %v3193 = vmul.f32 %v3129, 0.01
      %v3194 = vmul.f32 %v3130, 0.01
      %v3195 = vmul.f32 %v3131, 0.01
      %v3196 = vmul.f32 %v3132, 0.01
      %v3197 = vmul.f32 %v3133, 0.01
      %v3198 = vmul.f32 %v3134, 0.01
      %v3199 = vmul.f32 %v3135, 0.01
      %v3200 = vmul.f32 %v3136, 0.01
      %v3201 = vmul.f32 %v3137, 0.01
      %v3202 = vmul.f32 %v3138, 0.01
      %v3203 = vmul.f32 %v3139, 0.01
      %v3204 = vmul.f32 %v3140, 0.01
      %v3205 = vmul.f32 %v3141, 0.01
      %v3206 = vmul.f32 %v3142, 0.01
      %v3207 = vmul.f32 %v3143, 0.01
      %v3208 = vmul.f32 %v3144, 0.01
      %v3209 = vmul.f32 %v3145, 0.01
      %v3210 = vmul.f32 %v3146, 0.01
      %v3211 = vmul.f32 %v3147, 0.01
      %v3212 = vmul.f32 %v3148, 0.01
      %v3213 = vmul.f32 %v3149, 0.01
      %v3214 = vmul.f32 %v3150, 0.01
      %v3215 = vsel %vm3151, %v3119, %v3183
      %v3216 = vsel %vm3152, %v3120, %v3184
      %v3217 = vsel %vm3153, %v3121, %v3185
      %v3218 = vsel %vm3154, %v3122, %v3186
      %v3219 = vsel %vm3155, %v3123, %v3187
      %v3220 = vsel %vm3156, %v3124, %v3188
      %v3221 = vsel %vm3157, %v3125, %v3189
      %v3222 = vsel %vm3158, %v3126, %v3190
      %v3223 = vsel %vm3159, %v3127, %v3191
      %v3224 = vsel %vm3160, %v3128, %v3192
      %v3225 = vsel %vm3161, %v3129, %v3193
      %v3226 = vsel %vm3162, %v3130, %v3194
      %v3227 = vsel %vm3163, %v3131, %v3195
      %v3228 = vsel %vm3164, %v3132, %v3196
      %v3229 = vsel %vm3165, %v3133, %v3197
      %v3230 = vsel %vm3166, %v3134, %v3198
      %v3231 = vsel %vm3167, %v3135, %v3199
      %v3232 = vsel %vm3168, %v3136, %v3200
      %v3233 = vsel %vm3169, %v3137, %v3201
      %v3234 = vsel %vm3170, %v3138, %v3202
      %v3235 = vsel %vm3171, %v3139, %v3203
      %v3236 = vsel %vm3172, %v3140, %v3204
      %v3237 = vsel %vm3173, %v3141, %v3205
      %v3238 = vsel %vm3174, %v3142, %v3206
      %v3239 = vsel %vm3175, %v3143, %v3207
      %v3240 = vsel %vm3176, %v3144, %v3208
      %v3241 = vsel %vm3177, %v3145, %v3209
      %v3242 = vsel %vm3178, %v3146, %v3210
      %v3243 = vsel %vm3179, %v3147, %v3211
      %v3244 = vsel %vm3180, %v3148, %v3212
      %v3245 = vsel %vm3181, %v3149, %v3213
      %v3246 = vsel %vm3182, %v3150, %v3214
      %3247 = vst.msk [vmem:[%s240 + $0x1] sm:$0xff] %vm232, %v3215
      %3248 = vst.msk [vmem:[%s240 + $0x9] sm:$0xff] %vm232, %v3216
      %3249 = vst.msk [vmem:[%s240 + $0x19] sm:$0xff] %vm232, %v3217
      %3250 = vst.msk [vmem:[%s240 + $0x21] sm:$0xff] %vm232, %v3218
      %3251 = vst.msk [vmem:[%s240 + $0x31] sm:$0xff] %vm232, %v3219
      %3252 = vst.msk [vmem:[%s240 + $0x39] sm:$0xff] %vm232, %v3220
      %3253 = vst.msk [vmem:[%s240 + $0x49] sm:$0xff] %vm232, %v3221
      %3254 = vst.msk [vmem:[%s240 + $0x51] sm:$0xff] %vm232, %v3222
      %3255 = vst.msk [vmem:[%s240 + $0x61] sm:$0xff] %vm232, %v3223
      %3256 = vst.msk [vmem:[%s240 + $0x69] sm:$0xff] %vm232, %v3224
      %3257 = vst.msk [vmem:[%s240 + $0x79] sm:$0xff] %vm232, %v3225
      %3258 = vst.msk [vmem:[%s240 + $0x81] sm:$0xff] %vm232, %v3226
      %3259 = vst.msk [vmem:[%s240 + $0x91] sm:$0xff] %vm232, %v3227
      %3260 = vst.msk [vmem:[%s240 + $0x99] sm:$0xff] %vm232, %v3228
      %3261 = vst.msk [vmem:[%s240 + $0xa9] sm:$0xff] %vm232, %v3229
      %3262 = vst.msk [vmem:[%s240 + $0xb1] sm:$0xff] %vm232, %v3230
      %3263 = vst.msk [vmem:[%s240 + $0xc1] sm:$0xff] %vm232, %v3231
      %3264 = vst.msk [vmem:[%s240 + $0xc9] sm:$0xff] %vm232, %v3232
      %3265 = vst.msk [vmem:[%s240 + $0xd9] sm:$0xff] %vm232, %v3233
      %3266 = vst.msk [vmem:[%s240 + $0xe1] sm:$0xff] %vm232, %v3234
      %3267 = vst.msk [vmem:[%s240 + $0xf1] sm:$0xff] %vm232, %v3235
      %3268 = vst.msk [vmem:[%s240 + $0xf9] sm:$0xff] %vm232, %v3236
      %3269 = vst.msk [vmem:[%s240 + $0x109] sm:$0xff] %vm232, %v3237
      %3270 = vst.msk [vmem:[%s240 + $0x111] sm:$0xff] %vm232, %v3238
      %3271 = vst.msk [vmem:[%s240 + $0x121] sm:$0xff] %vm232, %v3239
      %3272 = vst.msk [vmem:[%s240 + $0x129] sm:$0xff] %vm232, %v3240
      %3273 = vst.msk [vmem:[%s240 + $0x139] sm:$0xff] %vm232, %v3241
      %3274 = vst.msk [vmem:[%s240 + $0x141] sm:$0xff] %vm232, %v3242
      %3275 = vst.msk [vmem:[%s240 + $0x151] sm:$0xff] %vm232, %v3243
      %3276 = vst.msk [vmem:[%s240 + $0x159] sm:$0xff] %vm232, %v3244
      %3277 = vst.msk [vmem:[%s240 + $0x169] sm:$0xff] %vm232, %v3245
      %3278 = vst.msk [vmem:[%s240 + $0x171] sm:$0xff] %vm232, %v3246
      %v3279 = vld [vmem:[#allocation2] sm:$0xff]
      %v3280 = vld [vmem:[#allocation2 + $0x8] sm:$0xff]
      %v3281 = vld [vmem:[#allocation2 + $0x18] sm:$0xff]
      %v3282 = vld [vmem:[#allocation2 + $0x20] sm:$0xff]
      %v3283 = vld [vmem:[#allocation2 + $0x30] sm:$0xff]
      %v3284 = vld [vmem:[#allocation2 + $0x38] sm:$0xff]
      %v3285 = vld [vmem:[#allocation2 + $0x48] sm:$0xff]
      %v3286 = vld [vmem:[#allocation2 + $0x50] sm:$0xff]
      %v3287 = vld [vmem:[#allocation2 + $0x60] sm:$0xff]
      %v3288 = vld [vmem:[#allocation2 + $0x68] sm:$0xff]
      %v3289 = vld [vmem:[#allocation2 + $0x78] sm:$0xff]
      %v3290 = vld [vmem:[#allocation2 + $0x80] sm:$0xff]
      %v3291 = vld [vmem:[#allocation2 + $0x90] sm:$0xff]
      %v3292 = vld [vmem:[#allocation2 + $0x98] sm:$0xff]
      %v3293 = vld [vmem:[#allocation2 + $0xa8] sm:$0xff]
      %v3294 = vld [vmem:[#allocation2 + $0xb0] sm:$0xff]
      %v3295 = vld [vmem:[#allocation2 + $0xc0] sm:$0xff]
      %v3296 = vld [vmem:[#allocation2 + $0xc8] sm:$0xff]
      %v3297 = vld [vmem:[#allocation2 + $0xd8] sm:$0xff]
      %v3298 = vld [vmem:[#allocation2 + $0xe0] sm:$0xff]
      %v3299 = vld [vmem:[#allocation2 + $0xf0] sm:$0xff]
      %v3300 = vld [vmem:[#allocation2 + $0xf8] sm:$0xff]
      %v3301 = vld [vmem:[#allocation2 + $0x108] sm:$0xff]
      %v3302 = vld [vmem:[#allocation2 + $0x110] sm:$0xff]
      %v3303 = vld [vmem:[#allocation2 + $0x120] sm:$0xff]
      %v3304 = vld [vmem:[#allocation2 + $0x128] sm:$0xff]
      %v3305 = vld [vmem:[#allocation2 + $0x138] sm:$0xff]
      %v3306 = vld [vmem:[#allocation2 + $0x140] sm:$0xff]
      %v3307 = vld [vmem:[#allocation2 + $0x150] sm:$0xff]
      %v3308 = vld [vmem:[#allocation2 + $0x158] sm:$0xff]
      %v3309 = vld [vmem:[#allocation2 + $0x168] sm:$0xff]
      %v3310 = vld [vmem:[#allocation2 + $0x170] sm:$0xff]
      %v3311 = vpack.c.bf16 %v3280, %v3279
      %v3312 = vpack.c.bf16 %v3282, %v3281
      %v3313 = vpack.c.bf16 %v3284, %v3283
      %v3314 = vpack.c.bf16 %v3286, %v3285
      %v3315 = vpack.c.bf16 %v3288, %v3287
      %v3316 = vpack.c.bf16 %v3290, %v3289
      %v3317 = vpack.c.bf16 %v3292, %v3291
      %v3318 = vpack.c.bf16 %v3294, %v3293
      %v3319 = vpack.c.bf16 %v3296, %v3295
      %v3320 = vpack.c.bf16 %v3298, %v3297
      %v3321 = vpack.c.bf16 %v3300, %v3299
      %v3322 = vpack.c.bf16 %v3302, %v3301
      %v3323 = vpack.c.bf16 %v3304, %v3303
      %v3324 = vpack.c.bf16 %v3306, %v3305
      %v3325 = vpack.c.bf16 %v3308, %v3307
      %v3326 = vpack.c.bf16 %v3310, %v3309
      %v3327 = vld [vmem:[%s4] sm:$0x3]
      %v3328 = vld [vmem:[#allocation2 + $0x1] sm:$0xff]
      %v3329 = vld [vmem:[#allocation2 + $0x9] sm:$0xff]
      %v3330 = vld [vmem:[#allocation2 + $0x19] sm:$0xff]
      %v3331 = vld [vmem:[#allocation2 + $0x21] sm:$0xff]
      %v3332 = vld [vmem:[#allocation2 + $0x31] sm:$0xff]
      %v3333 = vld [vmem:[#allocation2 + $0x39] sm:$0xff]
      %v3334 = vld [vmem:[#allocation2 + $0x49] sm:$0xff]
      %v3335 = vld [vmem:[#allocation2 + $0x51] sm:$0xff]
      %v3336 = vld [vmem:[#allocation2 + $0x61] sm:$0xff]
      %v3337 = vld [vmem:[#allocation2 + $0x69] sm:$0xff]
      %v3338 = vld [vmem:[#allocation2 + $0x79] sm:$0xff]
      %v3339 = vld [vmem:[#allocation2 + $0x81] sm:$0xff]
      %v3340 = vld [vmem:[#allocation2 + $0x91] sm:$0xff]
      %v3341 = vld [vmem:[#allocation2 + $0x99] sm:$0xff]
      %v3342 = vld [vmem:[#allocation2 + $0xa9] sm:$0xff]
      %v3343 = vld [vmem:[#allocation2 + $0xb1] sm:$0xff]
      %v3344 = vld [vmem:[#allocation2 + $0xc1] sm:$0xff]
      %v3345 = vld [vmem:[#allocation2 + $0xc9] sm:$0xff]
      %v3346 = vld [vmem:[#allocation2 + $0xd9] sm:$0xff]
      %v3347 = vld [vmem:[#allocation2 + $0xe1] sm:$0xff]
      %v3348 = vld [vmem:[#allocation2 + $0xf1] sm:$0xff]
      %v3349 = vld [vmem:[#allocation2 + $0xf9] sm:$0xff]
      %v3350 = vld [vmem:[#allocation2 + $0x109] sm:$0xff]
      %v3351 = vld [vmem:[#allocation2 + $0x111] sm:$0xff]
      %v3352 = vld [vmem:[#allocation2 + $0x121] sm:$0xff]
      %v3353 = vld [vmem:[#allocation2 + $0x129] sm:$0xff]
      %v3354 = vld [vmem:[#allocation2 + $0x139] sm:$0xff]
      %v3355 = vld [vmem:[#allocation2 + $0x141] sm:$0xff]
      %v3356 = vld [vmem:[#allocation2 + $0x151] sm:$0xff]
      %v3357 = vld [vmem:[#allocation2 + $0x159] sm:$0xff]
      %v3358 = vld [vmem:[#allocation2 + $0x169] sm:$0xff]
      %v3359 = vld [vmem:[#allocation2 + $0x171] sm:$0xff]
      %v3360 = vpack.c.bf16 %v3329, %v3328
      %v3361 = vpack.c.bf16 %v3331, %v3330
      %v3362 = vpack.c.bf16 %v3333, %v3332
      %v3363 = vpack.c.bf16 %v3335, %v3334
      %v3364 = vpack.c.bf16 %v3337, %v3336
      %v3365 = vpack.c.bf16 %v3339, %v3338
      %v3366 = vpack.c.bf16 %v3341, %v3340
      %v3367 = vpack.c.bf16 %v3343, %v3342
      %v3368 = vpack.c.bf16 %v3345, %v3344
      %v3369 = vpack.c.bf16 %v3347, %v3346
      %v3370 = vpack.c.bf16 %v3349, %v3348
      %v3371 = vpack.c.bf16 %v3351, %v3350
      %v3372 = vpack.c.bf16 %v3353, %v3352
      %v3373 = vpack.c.bf16 %v3355, %v3354
      %v3374 = vpack.c.bf16 %v3357, %v3356
      %v3375 = vpack.c.bf16 %v3359, %v3358
      %s3376 = scalar_lea.vmem %s4, 2
      %v3377 = vld [vmem:[%s3376] sm:$0x3]
      %v3379 = vsel %vm232, %v3360, 0
      %v3382 = vsel %vm232, %v3361, 0
      %v3385 = vsel %vm232, %v3362, 0
      %v3388 = vsel %vm232, %v3363, 0
      %v3391 = vsel %vm232, %v3364, 0
      %v3394 = vsel %vm232, %v3365, 0
      %v3397 = vsel %vm232, %v3366, 0
      %v3400 = vsel %vm232, %v3367, 0
      %v3403 = vsel %vm232, %v3368, 0
      %v3406 = vsel %vm232, %v3369, 0
      %v3409 = vsel %vm232, %v3370, 0
      %v3412 = vsel %vm232, %v3371, 0
      %v3415 = vsel %vm232, %v3372, 0
      %v3418 = vsel %vm232, %v3373, 0
      %v3421 = vsel %vm232, %v3374, 0
      %v3424 = vsel %vm232, %v3375, 0
      %v3427 = vsel %vm648, %v3377, 0
      %3429 = vmatprep.subr.bf16.mxu0 0
      %3430 = vmatpush1.bf16.msra.mxu0 %v3427
      %3431 = vmatprep.subr.bf16.mxu0 0
      %3432 = vmatpush1.bf16.msra.mxu0 0
      %3433 = vmatprep.subr.bf16.mxu0 0
      %3434 = vmatpush1.bf16.msra.mxu0 0
      %3435 = vmatprep.subr.bf16.mxu0 0
      %3436 = vmatpush1.bf16.msra.mxu0 0
      %3437 = vmatprep.subr.bf16.mxu0 0
      %3438 = vmatpush1.bf16.msra.mxu0 0
      %3439 = vmatprep.subr.bf16.mxu0 0
      %3440 = vmatpush1.bf16.msra.mxu0 0
      %3441 = vmatprep.subr.bf16.mxu0 0
      %3442 = vmatpush1.bf16.msra.mxu0 0
      %3443 = vmatprep.subr.bf16.mxu0 0
      %3444 = vmatpush1.bf16.msra.mxu0 0
      %3445 = vmatprep.subr.bf16.mxu0 0
      %3446 = vmatpush1.bf16.msra.mxu0 0
      %3447 = vmatprep.subr.bf16.mxu0 0
      %3448 = vmatpush1.bf16.msra.mxu0 0
      %3449 = vmatprep.subr.bf16.mxu0 0
      %3450 = vmatpush1.bf16.msra.mxu0 0
      %3451 = vmatprep.subr.bf16.mxu0 0
      %3452 = vmatpush1.bf16.msra.mxu0 0
      %3453 = vmatprep.subr.bf16.mxu0 0
      %3454 = vmatpush1.bf16.msra.mxu0 0
      %3455 = vmatprep.subr.bf16.mxu0 0
      %3456 = vmatpush1.bf16.msra.mxu0 0
      %3457 = vmatprep.subr.bf16.mxu0 0
      %3458 = vmatpush1.bf16.msra.mxu0 0
      %3459 = vmatprep.subr.bf16.mxu0 0
      %3460 = vmatpush1.bf16.msra.mxu0 0
      %3461 = vmatprep.mubr.bf16.mxu0 0
      %3462 = vmatmul.mubr.bf16.gmra.mrb[0].mxu0 %v3379
      %v3463 = vpop.f32.mrb[0].mxu0
      %v3464 = vadd.f32 0.0, %v3463
      %v3465 = vpop.f32.mrb[0].mxu0
      %v3466 = vpop.f32.mrb[0].mxu0
      %v3467 = vadd.f32 0.0, %v3466
      %v3468 = vpop.f32.mrb[0].mxu0
      %3469 = vmatprep.mubr.bf16.mxu0 0
      %3470 = vmatmul.mubr.bf16.gmra.mrb[0].mxu0 %v3382
      %v3471 = vpop.f32.mrb[0].mxu0
      %v3472 = vadd.f32 0.0, %v3471
      %v3473 = vpop.f32.mrb[0].mxu0
      %v3474 = vpop.f32.mrb[0].mxu0
      %v3475 = vadd.f32 0.0, %v3474
      %v3476 = vpop.f32.mrb[0].mxu0
      %3477 = vmatprep.mubr.bf16.mxu0 0
      %3478 = vmatmul.mubr.bf16.gmra.mrb[0].mxu0 %v3385
      %v3479 = vpop.f32.mrb[0].mxu0
      %v3480 = vadd.f32 0.0, %v3479
      %v3481 = vpop.f32.mrb[0].mxu0
      %v3482 = vpop.f32.mrb[0].mxu0
      %v3483 = vadd.f32 0.0, %v3482
      %v3484 = vpop.f32.mrb[0].mxu0
      %3485 = vmatprep.mubr.bf16.mxu0 0
      %3486 = vmatmul.mubr.bf16.gmra.mrb[0].mxu0 %v3388
      %v3487 = vpop.f32.mrb[0].mxu0
      %v3488 = vadd.f32 0.0, %v3487
      %v3489 = vpop.f32.mrb[0].mxu0
      %v3490 = vpop.f32.mrb[0].mxu0
      %v3491 = vadd.f32 0.0, %v3490
      %v3492 = vpop.f32.mrb[0].mxu0
      %3493 = vmatprep.mubr.bf16.mxu0 0
      %3494 = vmatmul.mubr.bf16.gmra.mrb[0].mxu0 %v3391
      %v3495 = vpop.f32.mrb[0].mxu0
      %v3496 = vadd.f32 0.0, %v3495
      %v3497 = vpop.f32.mrb[0].mxu0
      %v3498 = vpop.f32.mrb[0].mxu0
      %v3499 = vadd.f32 0.0, %v3498
      %v3500 = vpop.f32.mrb[0].mxu0
      %3501 = vmatprep.mubr.bf16.mxu0 0
      %3502 = vmatmul.mubr.bf16.gmra.mrb[0].mxu0 %v3394
      %v3503 = vpop.f32.mrb[0].mxu0
      %v3504 = vadd.f32 0.0, %v3503
      %v3505 = vpop.f32.mrb[0].mxu0
      %v3506 = vpop.f32.mrb[0].mxu0
      %v3507 = vadd.f32 0.0, %v3506
      %v3508 = vpop.f32.mrb[0].mxu0
      %3509 = vmatprep.mubr.bf16.mxu0 0
      %3510 = vmatmul.mubr.bf16.gmra.mrb[0].mxu0 %v3397
      %v3511 = vpop.f32.mrb[0].mxu0
      %v3512 = vadd.f32 0.0, %v3511
      %v3513 = vpop.f32.mrb[0].mxu0
      %v3514 = vpop.f32.mrb[0].mxu0
      %v3515 = vadd.f32 0.0, %v3514
      %v3516 = vpop.f32.mrb[0].mxu0
      %3517 = vmatprep.mubr.bf16.mxu0 0
      %3518 = vmatmul.mubr.bf16.gmra.mrb[0].mxu0 %v3400
      %v3519 = vpop.f32.mrb[0].mxu0
      %v3520 = vadd.f32 0.0, %v3519
      %v3521 = vpop.f32.mrb[0].mxu0
      %v3522 = vpop.f32.mrb[0].mxu0
      %v3523 = vadd.f32 0.0, %v3522
      %v3524 = vpop.f32.mrb[0].mxu0
      %3525 = vmatprep.mubr.bf16.mxu0 0
      %3526 = vmatmul.mubr.bf16.gmra.mrb[0].mxu0 %v3403
      %v3527 = vpop.f32.mrb[0].mxu0
      %v3528 = vadd.f32 0.0, %v3527
      %v3529 = vpop.f32.mrb[0].mxu0
      %v3530 = vpop.f32.mrb[0].mxu0
      %v3531 = vadd.f32 0.0, %v3530
      %v3532 = vpop.f32.mrb[0].mxu0
      %3533 = vmatprep.mubr.bf16.mxu0 0
      %3534 = vmatmul.mubr.bf16.gmra.mrb[0].mxu0 %v3406
      %v3535 = vpop.f32.mrb[0].mxu0
      %v3536 = vadd.f32 0.0, %v3535
      %v3537 = vpop.f32.mrb[0].mxu0
      %v3538 = vpop.f32.mrb[0].mxu0
      %v3539 = vadd.f32 0.0, %v3538
      %v3540 = vpop.f32.mrb[0].mxu0
      %3541 = vmatprep.mubr.bf16.mxu0 0
      %3542 = vmatmul.mubr.bf16.gmra.mrb[0].mxu0 %v3409
      %v3543 = vpop.f32.mrb[0].mxu0
      %v3544 = vadd.f32 0.0, %v3543
      %v3545 = vpop.f32.mrb[0].mxu0
      %v3546 = vpop.f32.mrb[0].mxu0
      %v3547 = vadd.f32 0.0, %v3546
      %v3548 = vpop.f32.mrb[0].mxu0
      %3549 = vmatprep.mubr.bf16.mxu0 0
      %3550 = vmatmul.mubr.bf16.gmra.mrb[0].mxu0 %v3412
      %v3551 = vpop.f32.mrb[0].mxu0
      %v3552 = vadd.f32 0.0, %v3551
      %v3553 = vpop.f32.mrb[0].mxu0
      %v3554 = vpop.f32.mrb[0].mxu0
      %v3555 = vadd.f32 0.0, %v3554
      %v3556 = vpop.f32.mrb[0].mxu0
      %3557 = vmatprep.mubr.bf16.mxu0 0
      %3558 = vmatmul.mubr.bf16.gmra.mrb[0].mxu0 %v3415
      %v3559 = vpop.f32.mrb[0].mxu0
      %v3560 = vadd.f32 0.0, %v3559
      %v3561 = vpop.f32.mrb[0].mxu0
      %v3562 = vpop.f32.mrb[0].mxu0
      %v3563 = vadd.f32 0.0, %v3562
      %v3564 = vpop.f32.mrb[0].mxu0
      %3565 = vmatprep.mubr.bf16.mxu0 0
      %3566 = vmatmul.mubr.bf16.gmra.mrb[0].mxu0 %v3418
      %v3567 = vpop.f32.mrb[0].mxu0
      %v3568 = vadd.f32 0.0, %v3567
      %v3569 = vpop.f32.mrb[0].mxu0
      %v3570 = vpop.f32.mrb[0].mxu0
      %v3571 = vadd.f32 0.0, %v3570
      %v3572 = vpop.f32.mrb[0].mxu0
      %3573 = vmatprep.mubr.bf16.mxu0 0
      %3574 = vmatmul.mubr.bf16.gmra.mrb[0].mxu0 %v3421
      %v3575 = vpop.f32.mrb[0].mxu0
      %v3576 = vadd.f32 0.0, %v3575
      %v3577 = vpop.f32.mrb[0].mxu0
      %v3578 = vpop.f32.mrb[0].mxu0
      %v3579 = vadd.f32 0.0, %v3578
      %v3580 = vpop.f32.mrb[0].mxu0
      %3581 = vmatprep.mubr.bf16.mxu0 0
      %3582 = vmatmul.mubr.bf16.gmra.mrb[0].mxu0 %v3424
      %v3583 = vpop.f32.mrb[0].mxu0
      %v3584 = vadd.f32 0.0, %v3583
      %v3585 = vpop.f32.mrb[0].mxu0
      %v3586 = vpop.f32.mrb[0].mxu0
      %v3587 = vadd.f32 0.0, %v3586
      %v3588 = vpop.f32.mrb[0].mxu0
      %3589 = vdwg.mxu0
      %v3591 = vsel %vm232, %v3311, 0
      %v3594 = vsel %vm232, %v3312, 0
      %v3597 = vsel %vm232, %v3313, 0
      %v3600 = vsel %vm232, %v3314, 0
      %v3603 = vsel %vm232, %v3315, 0
      %v3606 = vsel %vm232, %v3316, 0
      %v3609 = vsel %vm232, %v3317, 0
      %v3612 = vsel %vm232, %v3318, 0
      %v3615 = vsel %vm232, %v3319, 0
      %v3618 = vsel %vm232, %v3320, 0
      %v3621 = vsel %vm232, %v3321, 0
      %v3624 = vsel %vm232, %v3322, 0
      %v3627 = vsel %vm232, %v3323, 0
      %v3630 = vsel %vm232, %v3324, 0
      %v3633 = vsel %vm232, %v3325, 0
      %v3636 = vsel %vm232, %v3326, 0
      %v3639 = vsel %vm648, %v3327, 0
      %3641 = vmatprep.subr.bf16.mxu0 0
      %3642 = vmatpush1.bf16.msra.mxu0 %v3639
      %3643 = vmatprep.subr.bf16.mxu0 0
      %3644 = vmatpush1.bf16.msra.mxu0 0
      %3645 = vmatprep.subr.bf16.mxu0 0
      %3646 = vmatpush1.bf16.msra.mxu0 0
      %3647 = vmatprep.subr.bf16.mxu0 0
      %3648 = vmatpush1.bf16.msra.mxu0 0
      %3649 = vmatprep.subr.bf16.mxu0 0
      %3650 = vmatpush1.bf16.msra.mxu0 0
      %3651 = vmatprep.subr.bf16.mxu0 0
      %3652 = vmatpush1.bf16.msra.mxu0 0
      %3653 = vmatprep.subr.bf16.mxu0 0
      %3654 = vmatpush1.bf16.msra.mxu0 0
      %3655 = vmatprep.subr.bf16.mxu0 0
      %3656 = vmatpush1.bf16.msra.mxu0 0
      %3657 = vmatprep.subr.bf16.mxu0 0
      %3658 = vmatpush1.bf16.msra.mxu0 0
      %3659 = vmatprep.subr.bf16.mxu0 0
      %3660 = vmatpush1.bf16.msra.mxu0 0
      %3661 = vmatprep.subr.bf16.mxu0 0
      %3662 = vmatpush1.bf16.msra.mxu0 0
      %3663 = vmatprep.subr.bf16.mxu0 0
      %3664 = vmatpush1.bf16.msra.mxu0 0
      %3665 = vmatprep.subr.bf16.mxu0 0
      %3666 = vmatpush1.bf16.msra.mxu0 0
      %3667 = vmatprep.subr.bf16.mxu0 0
      %3668 = vmatpush1.bf16.msra.mxu0 0
      %3669 = vmatprep.subr.bf16.mxu0 0
      %3670 = vmatpush1.bf16.msra.mxu0 0
      %3671 = vmatprep.subr.bf16.mxu0 0
      %3672 = vmatpush1.bf16.msra.mxu0 0
      %3673 = vmatprep.mubr.bf16.mxu0 0
      %3674 = vmatmul.mubr.bf16.gmra.mrb[0].mxu0 %v3591
      %v3675 = vpop.f32.mrb[0].mxu0
      %v3676 = vadd.f32 %v3464, %v3675
      %v3677 = vpop.f32.mrb[0].mxu0
      %v3678 = vpop.f32.mrb[0].mxu0
      %v3679 = vadd.f32 %v3467, %v3678
      %v3680 = vpop.f32.mrb[0].mxu0
      %3681 = vmatprep.mubr.bf16.mxu0 0
      %3682 = vmatmul.mubr.bf16.gmra.mrb[0].mxu0 %v3594
      %v3683 = vpop.f32.mrb[0].mxu0
      %v3684 = vadd.f32 %v3472, %v3683
      %v3685 = vpop.f32.mrb[0].mxu0
      %v3686 = vpop.f32.mrb[0].mxu0
      %v3687 = vadd.f32 %v3475, %v3686
      %v3688 = vpop.f32.mrb[0].mxu0
      %3689 = vmatprep.mubr.bf16.mxu0 0
      %3690 = vmatmul.mubr.bf16.gmra.mrb[0].mxu0 %v3597
      %v3691 = vpop.f32.mrb[0].mxu0
      %v3692 = vadd.f32 %v3480, %v3691
      %v3693 = vpop.f32.mrb[0].mxu0
      %v3694 = vpop.f32.mrb[0].mxu0
      %v3695 = vadd.f32 %v3483, %v3694
      %v3696 = vpop.f32.mrb[0].mxu0
      %3697 = vmatprep.mubr.bf16.mxu0 0
      %3698 = vmatmul.mubr.bf16.gmra.mrb[0].mxu0 %v3600
      %v3699 = vpop.f32.mrb[0].mxu0
      %v3700 = vadd.f32 %v3488, %v3699
      %v3701 = vpop.f32.mrb[0].mxu0
      %v3702 = vpop.f32.mrb[0].mxu0
      %v3703 = vadd.f32 %v3491, %v3702
      %v3704 = vpop.f32.mrb[0].mxu0
      %3705 = vmatprep.mubr.bf16.mxu0 0
      %3706 = vmatmul.mubr.bf16.gmra.mrb[0].mxu0 %v3603
      %v3707 = vpop.f32.mrb[0].mxu0
      %v3708 = vadd.f32 %v3496, %v3707
      %v3709 = vpop.f32.mrb[0].mxu0
      %v3710 = vpop.f32.mrb[0].mxu0
      %v3711 = vadd.f32 %v3499, %v3710
      %v3712 = vpop.f32.mrb[0].mxu0
      %3713 = vmatprep.mubr.bf16.mxu0 0
      %3714 = vmatmul.mubr.bf16.gmra.mrb[0].mxu0 %v3606
      %v3715 = vpop.f32.mrb[0].mxu0
      %v3716 = vadd.f32 %v3504, %v3715
      %v3717 = vpop.f32.mrb[0].mxu0
      %v3718 = vpop.f32.mrb[0].mxu0
      %v3719 = vadd.f32 %v3507, %v3718
      %v3720 = vpop.f32.mrb[0].mxu0
      %3721 = vmatprep.mubr.bf16.mxu0 0
      %3722 = vmatmul.mubr.bf16.gmra.mrb[0].mxu0 %v3609
      %v3723 = vpop.f32.mrb[0].mxu0
      %v3724 = vadd.f32 %v3512, %v3723
      %v3725 = vpop.f32.mrb[0].mxu0
      %v3726 = vpop.f32.mrb[0].mxu0
      %v3727 = vadd.f32 %v3515, %v3726
      %v3728 = vpop.f32.mrb[0].mxu0
      %3729 = vmatprep.mubr.bf16.mxu0 0
      %3730 = vmatmul.mubr.bf16.gmra.mrb[0].mxu0 %v3612
      %v3731 = vpop.f32.mrb[0].mxu0
      %v3732 = vadd.f32 %v3520, %v3731
      %v3733 = vpop.f32.mrb[0].mxu0
      %v3734 = vpop.f32.mrb[0].mxu0
      %v3735 = vadd.f32 %v3523, %v3734
      %v3736 = vpop.f32.mrb[0].mxu0
      %3737 = vmatprep.mubr.bf16.mxu0 0
      %3738 = vmatmul.mubr.bf16.gmra.mrb[0].mxu0 %v3615
      %v3739 = vpop.f32.mrb[0].mxu0
      %v3740 = vadd.f32 %v3528, %v3739
      %v3741 = vpop.f32.mrb[0].mxu0
      %v3742 = vpop.f32.mrb[0].mxu0
      %v3743 = vadd.f32 %v3531, %v3742
      %v3744 = vpop.f32.mrb[0].mxu0
      %3745 = vmatprep.mubr.bf16.mxu0 0
      %3746 = vmatmul.mubr.bf16.gmra.mrb[0].mxu0 %v3618
      %v3747 = vpop.f32.mrb[0].mxu0
      %v3748 = vadd.f32 %v3536, %v3747
      %v3749 = vpop.f32.mrb[0].mxu0
      %v3750 = vpop.f32.mrb[0].mxu0
      %v3751 = vadd.f32 %v3539, %v3750
      %v3752 = vpop.f32.mrb[0].mxu0
      %3753 = vmatprep.mubr.bf16.mxu0 0
      %3754 = vmatmul.mubr.bf16.gmra.mrb[0].mxu0 %v3621
      %v3755 = vpop.f32.mrb[0].mxu0
      %v3756 = vadd.f32 %v3544, %v3755
      %v3757 = vpop.f32.mrb[0].mxu0
      %v3758 = vpop.f32.mrb[0].mxu0
      %v3759 = vadd.f32 %v3547, %v3758
      %v3760 = vpop.f32.mrb[0].mxu0
      %3761 = vmatprep.mubr.bf16.mxu0 0
      %3762 = vmatmul.mubr.bf16.gmra.mrb[0].mxu0 %v3624
      %v3763 = vpop.f32.mrb[0].mxu0
      %v3764 = vadd.f32 %v3552, %v3763
      %v3765 = vpop.f32.mrb[0].mxu0
      %v3766 = vpop.f32.mrb[0].mxu0
      %v3767 = vadd.f32 %v3555, %v3766
      %v3768 = vpop.f32.mrb[0].mxu0
      %3769 = vmatprep.mubr.bf16.mxu0 0
      %3770 = vmatmul.mubr.bf16.gmra.mrb[0].mxu0 %v3627
      %v3771 = vpop.f32.mrb[0].mxu0
      %v3772 = vadd.f32 %v3560, %v3771
      %v3773 = vpop.f32.mrb[0].mxu0
      %v3774 = vpop.f32.mrb[0].mxu0
      %v3775 = vadd.f32 %v3563, %v3774
      %v3776 = vpop.f32.mrb[0].mxu0
      %3777 = vmatprep.mubr.bf16.mxu0 0
      %3778 = vmatmul.mubr.bf16.gmra.mrb[0].mxu0 %v3630
      %v3779 = vpop.f32.mrb[0].mxu0
      %v3780 = vadd.f32 %v3568, %v3779
      %v3781 = vpop.f32.mrb[0].mxu0
      %v3782 = vpop.f32.mrb[0].mxu0
      %v3783 = vadd.f32 %v3571, %v3782
      %v3784 = vpop.f32.mrb[0].mxu0
      %3785 = vmatprep.mubr.bf16.mxu0 0
      %3786 = vmatmul.mubr.bf16.gmra.mrb[0].mxu0 %v3633
      %v3787 = vpop.f32.mrb[0].mxu0
      %v3788 = vadd.f32 %v3576, %v3787
      %v3789 = vpop.f32.mrb[0].mxu0
      %v3790 = vpop.f32.mrb[0].mxu0
      %v3791 = vadd.f32 %v3579, %v3790
      %v3792 = vpop.f32.mrb[0].mxu0
      %3793 = vmatprep.mubr.bf16.mxu0 0
      %3794 = vmatmul.mubr.bf16.gmra.mrb[0].mxu0 %v3636
      %v3795 = vpop.f32.mrb[0].mxu0
      %v3796 = vadd.f32 %v3584, %v3795
      %v3797 = vpop.f32.mrb[0].mxu0
      %v3798 = vpop.f32.mrb[0].mxu0
      %v3799 = vadd.f32 %v3587, %v3798
      %v3800 = vpop.f32.mrb[0].mxu0
      %3801 = vdwg.mxu0
      %v3802 = vld [vmem:[#allocation2 + $0x2] sm:$0xff]
      %v3803 = vld [vmem:[#allocation2 + $0xa] sm:$0xff]
      %v3804 = vld [vmem:[#allocation2 + $0x1a] sm:$0xff]
      %v3805 = vld [vmem:[#allocation2 + $0x22] sm:$0xff]
      %v3806 = vld [vmem:[#allocation2 + $0x32] sm:$0xff]
      %v3807 = vld [vmem:[#allocation2 + $0x3a] sm:$0xff]
      %v3808 = vld [vmem:[#allocation2 + $0x4a] sm:$0xff]
      %v3809 = vld [vmem:[#allocation2 + $0x52] sm:$0xff]
      %v3810 = vld [vmem:[#allocation2 + $0x62] sm:$0xff]
      %v3811 = vld [vmem:[#allocation2 + $0x6a] sm:$0xff]
      %v3812 = vld [vmem:[#allocation2 + $0x7a] sm:$0xff]
      %v3813 = vld [vmem:[#allocation2 + $0x82] sm:$0xff]
      %v3814 = vld [vmem:[#allocation2 + $0x92] sm:$0xff]
      %v3815 = vld [vmem:[#allocation2 + $0x9a] sm:$0xff]
      %v3816 = vld [vmem:[#allocation2 + $0xaa] sm:$0xff]
      %v3817 = vld [vmem:[#allocation2 + $0xb2] sm:$0xff]
      %v3818 = vld [vmem:[#allocation2 + $0xc2] sm:$0xff]
      %v3819 = vld [vmem:[#allocation2 + $0xca] sm:$0xff]
      %v3820 = vld [vmem:[#allocation2 + $0xda] sm:$0xff]
      %v3821 = vld [vmem:[#allocation2 + $0xe2] sm:$0xff]
      %v3822 = vld [vmem:[#allocation2 + $0xf2] sm:$0xff]
      %v3823 = vld [vmem:[#allocation2 + $0xfa] sm:$0xff]
      %v3824 = vld [vmem:[#allocation2 + $0x10a] sm:$0xff]
      %v3825 = vld [vmem:[#allocation2 + $0x112] sm:$0xff]
      %v3826 = vld [vmem:[#allocation2 + $0x122] sm:$0xff]
      %v3827 = vld [vmem:[#allocation2 + $0x12a] sm:$0xff]
      %v3828 = vld [vmem:[#allocation2 + $0x13a] sm:$0xff]
      %v3829 = vld [vmem:[#allocation2 + $0x142] sm:$0xff]
      %v3830 = vld [vmem:[#allocation2 + $0x152] sm:$0xff]
      %v3831 = vld [vmem:[#allocation2 + $0x15a] sm:$0xff]
      %v3832 = vld [vmem:[#allocation2 + $0x16a] sm:$0xff]
      %v3833 = vld [vmem:[#allocation2 + $0x172] sm:$0xff]
      %v3834 = vpack.c.bf16 %v3803, %v3802
      %v3835 = vpack.c.bf16 %v3805, %v3804
      %v3836 = vpack.c.bf16 %v3807, %v3806
      %v3837 = vpack.c.bf16 %v3809, %v3808
      %v3838 = vpack.c.bf16 %v3811, %v3810
      %v3839 = vpack.c.bf16 %v3813, %v3812
      %v3840 = vpack.c.bf16 %v3815, %v3814
      %v3841 = vpack.c.bf16 %v3817, %v3816
      %v3842 = vpack.c.bf16 %v3819, %v3818
      %v3843 = vpack.c.bf16 %v3821, %v3820
      %v3844 = vpack.c.bf16 %v3823, %v3822
      %v3845 = vpack.c.bf16 %v3825, %v3824
      %v3846 = vpack.c.bf16 %v3827, %v3826
      %v3847 = vpack.c.bf16 %v3829, %v3828
      %v3848 = vpack.c.bf16 %v3831, %v3830
      %v3849 = vpack.c.bf16 %v3833, %v3832
      %s3850 = scalar_lea.vmem %s4, 4
      %v3851 = vld [vmem:[%s3850] sm:$0x3]
      %v3853 = vsel %vm232, %v3834, 0
      %v3856 = vsel %vm232, %v3835, 0
      %v3859 = vsel %vm232, %v3836, 0
      %v3862 = vsel %vm232, %v3837, 0
      %v3865 = vsel %vm232, %v3838, 0
      %v3868 = vsel %vm232, %v3839, 0
      %v3871 = vsel %vm232, %v3840, 0
      %v3874 = vsel %vm232, %v3841, 0
      %v3877 = vsel %vm232, %v3842, 0
      %v3880 = vsel %vm232, %v3843, 0
      %v3883 = vsel %vm232, %v3844, 0
      %v3886 = vsel %vm232, %v3845, 0
      %v3889 = vsel %vm232, %v3846, 0
      %v3892 = vsel %vm232, %v3847, 0
      %v3895 = vsel %vm232, %v3848, 0
      %v3898 = vsel %vm232, %v3849, 0
      %v3901 = vsel %vm648, %v3851, 0
      %3903 = vmatprep.subr.bf16.mxu0 0
      %3904 = vmatpush1.bf16.msra.mxu0 %v3901
      %3905 = vmatprep.subr.bf16.mxu0 0
      %3906 = vmatpush1.bf16.msra.mxu0 0
      %3907 = vmatprep.subr.bf16.mxu0 0
      %3908 = vmatpush1.bf16.msra.mxu0 0
      %3909 = vmatprep.subr.bf16.mxu0 0
      %3910 = vmatpush1.bf16.msra.mxu0 0
      %3911 = vmatprep.subr.bf16.mxu0 0
      %3912 = vmatpush1.bf16.msra.mxu0 0
      %3913 = vmatprep.subr.bf16.mxu0 0
      %3914 = vmatpush1.bf16.msra.mxu0 0
      %3915 = vmatprep.subr.bf16.mxu0 0
      %3916 = vmatpush1.bf16.msra.mxu0 0
      %3917 = vmatprep.subr.bf16.mxu0 0
      %3918 = vmatpush1.bf16.msra.mxu0 0
      %3919 = vmatprep.subr.bf16.mxu0 0
      %3920 = vmatpush1.bf16.msra.mxu0 0
      %3921 = vmatprep.subr.bf16.mxu0 0
      %3922 = vmatpush1.bf16.msra.mxu0 0
      %3923 = vmatprep.subr.bf16.mxu0 0
      %3924 = vmatpush1.bf16.msra.mxu0 0
      %3925 = vmatprep.subr.bf16.mxu0 0
      %3926 = vmatpush1.bf16.msra.mxu0 0
      %3927 = vmatprep.subr.bf16.mxu0 0
      %3928 = vmatpush1.bf16.msra.mxu0 0
      %3929 = vmatprep.subr.bf16.mxu0 0
      %3930 = vmatpush1.bf16.msra.mxu0 0
      %3931 = vmatprep.subr.bf16.mxu0 0
      %3932 = vmatpush1.bf16.msra.mxu0 0
      %3933 = vmatprep.subr.bf16.mxu0 0
      %3934 = vmatpush1.bf16.msra.mxu0 0
      %3935 = vmatprep.mubr.bf16.mxu0 0
      %3936 = vmatmul.mubr.bf16.gmra.mrb[0].mxu0 %v3853
      %v3937 = vpop.f32.mrb[0].mxu0
      %v3938 = vadd.f32 0.0, %v3937
      %v3939 = vpop.f32.mrb[0].mxu0
      %v3940 = vpop.f32.mrb[0].mxu0
      %v3941 = vadd.f32 0.0, %v3940
      %v3942 = vpop.f32.mrb[0].mxu0
      %3943 = vmatprep.mubr.bf16.mxu0 0
      %3944 = vmatmul.mubr.bf16.gmra.mrb[0].mxu0 %v3856
      %v3945 = vpop.f32.mrb[0].mxu0
      %v3946 = vadd.f32 0.0, %v3945
      %v3947 = vpop.f32.mrb[0].mxu0
      %v3948 = vpop.f32.mrb[0].mxu0
      %v3949 = vadd.f32 0.0, %v3948
      %v3950 = vpop.f32.mrb[0].mxu0
      %3951 = vmatprep.mubr.bf16.mxu0 0
      %3952 = vmatmul.mubr.bf16.gmra.mrb[0].mxu0 %v3859
      %v3953 = vpop.f32.mrb[0].mxu0
      %v3954 = vadd.f32 0.0, %v3953
      %v3955 = vpop.f32.mrb[0].mxu0
      %v3956 = vpop.f32.mrb[0].mxu0
      %v3957 = vadd.f32 0.0, %v3956
      %v3958 = vpop.f32.mrb[0].mxu0
      %3959 = vmatprep.mubr.bf16.mxu0 0
      %3960 = vmatmul.mubr.bf16.gmra.mrb[0].mxu0 %v3862
      %v3961 = vpop.f32.mrb[0].mxu0
      %v3962 = vadd.f32 0.0, %v3961
      %v3963 = vpop.f32.mrb[0].mxu0
      %v3964 = vpop.f32.mrb[0].mxu0
      %v3965 = vadd.f32 0.0, %v3964
      %v3966 = vpop.f32.mrb[0].mxu0
      %3967 = vmatprep.mubr.bf16.mxu0 0
      %3968 = vmatmul.mubr.bf16.gmra.mrb[0].mxu0 %v3865
      %v3969 = vpop.f32.mrb[0].mxu0
      %v3970 = vadd.f32 0.0, %v3969
      %v3971 = vpop.f32.mrb[0].mxu0
      %v3972 = vpop.f32.mrb[0].mxu0
      %v3973 = vadd.f32 0.0, %v3972
      %v3974 = vpop.f32.mrb[0].mxu0
      %3975 = vmatprep.mubr.bf16.mxu0 0
      %3976 = vmatmul.mubr.bf16.gmra.mrb[0].mxu0 %v3868
      %v3977 = vpop.f32.mrb[0].mxu0
      %v3978 = vadd.f32 0.0, %v3977
      %v3979 = vpop.f32.mrb[0].mxu0
      %v3980 = vpop.f32.mrb[0].mxu0
      %v3981 = vadd.f32 0.0, %v3980
      %v3982 = vpop.f32.mrb[0].mxu0
      %3983 = vmatprep.mubr.bf16.mxu0 0
      %3984 = vmatmul.mubr.bf16.gmra.mrb[0].mxu0 %v3871
      %v3985 = vpop.f32.mrb[0].mxu0
      %v3986 = vadd.f32 0.0, %v3985
      %v3987 = vpop.f32.mrb[0].mxu0
      %v3988 = vpop.f32.mrb[0].mxu0
      %v3989 = vadd.f32 0.0, %v3988
      %v3990 = vpop.f32.mrb[0].mxu0
      %3991 = vmatprep.mubr.bf16.mxu0 0
      %3992 = vmatmul.mubr.bf16.gmra.mrb[0].mxu0 %v3874
      %v3993 = vpop.f32.mrb[0].mxu0
      %v3994 = vadd.f32 0.0, %v3993
      %v3995 = vpop.f32.mrb[0].mxu0
      %v3996 = vpop.f32.mrb[0].mxu0
      %v3997 = vadd.f32 0.0, %v3996
      %v3998 = vpop.f32.mrb[0].mxu0
      %3999 = vmatprep.mubr.bf16.mxu0 0
      %4000 = vmatmul.mubr.bf16.gmra.mrb[0].mxu0 %v3877
      %v4001 = vpop.f32.mrb[0].mxu0
      %v4002 = vadd.f32 0.0, %v4001
      %v4003 = vpop.f32.mrb[0].mxu0
      %v4004 = vpop.f32.mrb[0].mxu0
      %v4005 = vadd.f32 0.0, %v4004
      %v4006 = vpop.f32.mrb[0].mxu0
      %4007 = vmatprep.mubr.bf16.mxu0 0
      %4008 = vmatmul.mubr.bf16.gmra.mrb[0].mxu0 %v3880
      %v4009 = vpop.f32.mrb[0].mxu0
      %v4010 = vadd.f32 0.0, %v4009
      %v4011 = vpop.f32.mrb[0].mxu0
      %v4012 = vpop.f32.mrb[0].mxu0
      %v4013 = vadd.f32 0.0, %v4012
      %v4014 = vpop.f32.mrb[0].mxu0
      %4015 = vmatprep.mubr.bf16.mxu0 0
      %4016 = vmatmul.mubr.bf16.gmra.mrb[0].mxu0 %v3883
      %v4017 = vpop.f32.mrb[0].mxu0
      %v4018 = vadd.f32 0.0, %v4017
      %v4019 = vpop.f32.mrb[0].mxu0
      %v4020 = vpop.f32.mrb[0].mxu0
      %v4021 = vadd.f32 0.0, %v4020
      %v4022 = vpop.f32.mrb[0].mxu0
      %4023 = vmatprep.mubr.bf16.mxu0 0
      %4024 = vmatmul.mubr.bf16.gmra.mrb[0].mxu0 %v3886
      %v4025 = vpop.f32.mrb[0].mxu0
      %v4026 = vadd.f32 0.0, %v4025
      %v4027 = vpop.f32.mrb[0].mxu0
      %v4028 = vpop.f32.mrb[0].mxu0
      %v4029 = vadd.f32 0.0, %v4028
      %v4030 = vpop.f32.mrb[0].mxu0
      %4031 = vmatprep.mubr.bf16.mxu0 0
      %4032 = vmatmul.mubr.bf16.gmra.mrb[0].mxu0 %v3889
      %v4033 = vpop.f32.mrb[0].mxu0
      %v4034 = vadd.f32 0.0, %v4033
      %v4035 = vpop.f32.mrb[0].mxu0
      %v4036 = vpop.f32.mrb[0].mxu0
      %v4037 = vadd.f32 0.0, %v4036
      %v4038 = vpop.f32.mrb[0].mxu0
      %4039 = vmatprep.mubr.bf16.mxu0 0
      %4040 = vmatmul.mubr.bf16.gmra.mrb[0].mxu0 %v3892
      %v4041 = vpop.f32.mrb[0].mxu0
      %v4042 = vadd.f32 0.0, %v4041
      %v4043 = vpop.f32.mrb[0].mxu0
      %v4044 = vpop.f32.mrb[0].mxu0
      %v4045 = vadd.f32 0.0, %v4044
      %v4046 = vpop.f32.mrb[0].mxu0
      %4047 = vmatprep.mubr.bf16.mxu0 0
      %4048 = vmatmul.mubr.bf16.gmra.mrb[0].mxu0 %v3895
      %v4049 = vpop.f32.mrb[0].mxu0
      %v4050 = vadd.f32 0.0, %v4049
      %v4051 = vpop.f32.mrb[0].mxu0
      %v4052 = vpop.f32.mrb[0].mxu0
      %v4053 = vadd.f32 0.0, %v4052
      %v4054 = vpop.f32.mrb[0].mxu0
      %4055 = vmatprep.mubr.bf16.mxu0 0
      %4056 = vmatmul.mubr.bf16.gmra.mrb[0].mxu0 %v3898
      %v4057 = vpop.f32.mrb[0].mxu0
      %v4058 = vadd.f32 0.0, %v4057
      %v4059 = vpop.f32.mrb[0].mxu0
      %v4060 = vpop.f32.mrb[0].mxu0
      %v4061 = vadd.f32 0.0, %v4060
      %v4062 = vpop.f32.mrb[0].mxu0
      %4063 = vdwg.mxu0
      %v4064 = vadd.f32 %v3676, %v3938
      %v4065 = vadd.f32 %v3679, %v3941
      %v4066 = vadd.f32 %v3684, %v3946
      %v4067 = vadd.f32 %v3687, %v3949
      %v4068 = vadd.f32 %v3692, %v3954
      %v4069 = vadd.f32 %v3695, %v3957
      %v4070 = vadd.f32 %v3700, %v3962
      %v4071 = vadd.f32 %v3703, %v3965
      %v4072 = vadd.f32 %v3708, %v3970
      %v4073 = vadd.f32 %v3711, %v3973
      %v4074 = vadd.f32 %v3716, %v3978
      %v4075 = vadd.f32 %v3719, %v3981
      %v4076 = vadd.f32 %v3724, %v3986
      %v4077 = vadd.f32 %v3727, %v3989
      %v4078 = vadd.f32 %v3732, %v3994
      %v4079 = vadd.f32 %v3735, %v3997
      %v4080 = vadd.f32 %v3740, %v4002
      %v4081 = vadd.f32 %v3743, %v4005
      %v4082 = vadd.f32 %v3748, %v4010
      %v4083 = vadd.f32 %v3751, %v4013
      %v4084 = vadd.f32 %v3756, %v4018
      %v4085 = vadd.f32 %v3759, %v4021
      %v4086 = vadd.f32 %v3764, %v4026
      %v4087 = vadd.f32 %v3767, %v4029
      %v4088 = vadd.f32 %v3772, %v4034
      %v4089 = vadd.f32 %v3775, %v4037
      %v4090 = vadd.f32 %v3780, %v4042
      %v4091 = vadd.f32 %v3783, %v4045
      %v4092 = vadd.f32 %v3788, %v4050
      %v4093 = vadd.f32 %v3791, %v4053
      %v4094 = vadd.f32 %v3796, %v4058
      %v4095 = vadd.f32 %v3799, %v4061
      %v4096 = vld [vmem:[%s240] sm:$0xff]
      %v4097 = vld [vmem:[%s240 + $0x8] sm:$0xff]
      %v4098 = vld [vmem:[%s240 + $0x18] sm:$0xff]
      %v4099 = vld [vmem:[%s240 + $0x20] sm:$0xff]
      %v4100 = vld [vmem:[%s240 + $0x30] sm:$0xff]
      %v4101 = vld [vmem:[%s240 + $0x38] sm:$0xff]
      %v4102 = vld [vmem:[%s240 + $0x48] sm:$0xff]
      %v4103 = vld [vmem:[%s240 + $0x50] sm:$0xff]
      %v4104 = vld [vmem:[%s240 + $0x60] sm:$0xff]
      %v4105 = vld [vmem:[%s240 + $0x68] sm:$0xff]
      %v4106 = vld [vmem:[%s240 + $0x78] sm:$0xff]
      %v4107 = vld [vmem:[%s240 + $0x80] sm:$0xff]
      %v4108 = vld [vmem:[%s240 + $0x90] sm:$0xff]
      %v4109 = vld [vmem:[%s240 + $0x98] sm:$0xff]
      %v4110 = vld [vmem:[%s240 + $0xa8] sm:$0xff]
      %v4111 = vld [vmem:[%s240 + $0xb0] sm:$0xff]
      %v4112 = vld [vmem:[%s240 + $0xc0] sm:$0xff]
      %v4113 = vld [vmem:[%s240 + $0xc8] sm:$0xff]
      %v4114 = vld [vmem:[%s240 + $0xd8] sm:$0xff]
      %v4115 = vld [vmem:[%s240 + $0xe0] sm:$0xff]
      %v4116 = vld [vmem:[%s240 + $0xf0] sm:$0xff]
      %v4117 = vld [vmem:[%s240 + $0xf8] sm:$0xff]
      %v4118 = vld [vmem:[%s240 + $0x108] sm:$0xff]
      %v4119 = vld [vmem:[%s240 + $0x110] sm:$0xff]
      %v4120 = vld [vmem:[%s240 + $0x120] sm:$0xff]
      %v4121 = vld [vmem:[%s240 + $0x128] sm:$0xff]
      %v4122 = vld [vmem:[%s240 + $0x138] sm:$0xff]
      %v4123 = vld [vmem:[%s240 + $0x140] sm:$0xff]
      %v4124 = vld [vmem:[%s240 + $0x150] sm:$0xff]
      %v4125 = vld [vmem:[%s240 + $0x158] sm:$0xff]
      %v4126 = vld [vmem:[%s240 + $0x168] sm:$0xff]
      %v4127 = vld [vmem:[%s240 + $0x170] sm:$0xff]
      %v4128 = vpack.c.bf16 %v4097, %v4096
      %v4129 = vpack.c.bf16 %v4099, %v4098
      %v4130 = vpack.c.bf16 %v4101, %v4100
      %v4131 = vpack.c.bf16 %v4103, %v4102
      %v4132 = vpack.c.bf16 %v4105, %v4104
      %v4133 = vpack.c.bf16 %v4107, %v4106
      %v4134 = vpack.c.bf16 %v4109, %v4108
      %v4135 = vpack.c.bf16 %v4111, %v4110
      %v4136 = vpack.c.bf16 %v4113, %v4112
      %v4137 = vpack.c.bf16 %v4115, %v4114
      %v4138 = vpack.c.bf16 %v4117, %v4116
      %v4139 = vpack.c.bf16 %v4119, %v4118
      %v4140 = vpack.c.bf16 %v4121, %v4120
      %v4141 = vpack.c.bf16 %v4123, %v4122
      %v4142 = vpack.c.bf16 %v4125, %v4124
      %v4143 = vpack.c.bf16 %v4127, %v4126
      %s4144 = scalar_lea.vmem %s4, 6
      %v4145 = vld [vmem:[%s4144] sm:$0x3]
      %v4147 = vsel %vm232, %v4128, 0
      %v4150 = vsel %vm232, %v4129, 0
      %v4153 = vsel %vm232, %v4130, 0
      %v4156 = vsel %vm232, %v4131, 0
      %v4159 = vsel %vm232, %v4132, 0
      %v4162 = vsel %vm232, %v4133, 0
      %v4165 = vsel %vm232, %v4134, 0
      %v4168 = vsel %vm232, %v4135, 0
      %v4171 = vsel %vm232, %v4136, 0
      %v4174 = vsel %vm232, %v4137, 0
      %v4177 = vsel %vm232, %v4138, 0
      %v4180 = vsel %vm232, %v4139, 0
      %v4183 = vsel %vm232, %v4140, 0
      %v4186 = vsel %vm232, %v4141, 0
      %v4189 = vsel %vm232, %v4142, 0
      %v4192 = vsel %vm232, %v4143, 0
      %v4195 = vsel %vm648, %v4145, 0
      %4197 = vmatprep.subr.bf16.mxu0 0
      %4198 = vmatpush1.bf16.msra.mxu0 %v4195
      %4199 = vmatprep.subr.bf16.mxu0 0
      %4200 = vmatpush1.bf16.msra.mxu0 0
      %4201 = vmatprep.subr.bf16.mxu0 0
      %4202 = vmatpush1.bf16.msra.mxu0 0
      %4203 = vmatprep.subr.bf16.mxu0 0
      %4204 = vmatpush1.bf16.msra.mxu0 0
      %4205 = vmatprep.subr.bf16.mxu0 0
      %4206 = vmatpush1.bf16.msra.mxu0 0
      %4207 = vmatprep.subr.bf16.mxu0 0
      %4208 = vmatpush1.bf16.msra.mxu0 0
      %4209 = vmatprep.subr.bf16.mxu0 0
      %4210 = vmatpush1.bf16.msra.mxu0 0
      %4211 = vmatprep.subr.bf16.mxu0 0
      %4212 = vmatpush1.bf16.msra.mxu0 0
      %4213 = vmatprep.subr.bf16.mxu0 0
      %4214 = vmatpush1.bf16.msra.mxu0 0
      %4215 = vmatprep.subr.bf16.mxu0 0
      %4216 = vmatpush1.bf16.msra.mxu0 0
      %4217 = vmatprep.subr.bf16.mxu0 0
      %4218 = vmatpush1.bf16.msra.mxu0 0
      %4219 = vmatprep.subr.bf16.mxu0 0
      %4220 = vmatpush1.bf16.msra.mxu0 0
      %4221 = vmatprep.subr.bf16.mxu0 0
      %4222 = vmatpush1.bf16.msra.mxu0 0
      %4223 = vmatprep.subr.bf16.mxu0 0
      %4224 = vmatpush1.bf16.msra.mxu0 0
      %4225 = vmatprep.subr.bf16.mxu0 0
      %4226 = vmatpush1.bf16.msra.mxu0 0
      %4227 = vmatprep.subr.bf16.mxu0 0
      %4228 = vmatpush1.bf16.msra.mxu0 0
      %4229 = vmatprep.mubr.bf16.mxu0 0
      %4230 = vmatmul.mubr.bf16.gmra.mrb[0].mxu0 %v4147
      %v4231 = vpop.f32.mrb[0].mxu0
      %v4232 = vadd.f32 0.0, %v4231
      %v4233 = vpop.f32.mrb[0].mxu0
      %v4234 = vpop.f32.mrb[0].mxu0
      %v4235 = vadd.f32 0.0, %v4234
      %v4236 = vpop.f32.mrb[0].mxu0
      %4237 = vmatprep.mubr.bf16.mxu0 0
      %4238 = vmatmul.mubr.bf16.gmra.mrb[0].mxu0 %v4150
      %v4239 = vpop.f32.mrb[0].mxu0
      %v4240 = vadd.f32 0.0, %v4239
      %v4241 = vpop.f32.mrb[0].mxu0
      %v4242 = vpop.f32.mrb[0].mxu0
      %v4243 = vadd.f32 0.0, %v4242
      %v4244 = vpop.f32.mrb[0].mxu0
      %4245 = vmatprep.mubr.bf16.mxu0 0
      %4246 = vmatmul.mubr.bf16.gmra.mrb[0].mxu0 %v4153
      %v4247 = vpop.f32.mrb[0].mxu0
      %v4248 = vadd.f32 0.0, %v4247
      %v4249 = vpop.f32.mrb[0].mxu0
      %v4250 = vpop.f32.mrb[0].mxu0
      %v4251 = vadd.f32 0.0, %v4250
      %v4252 = vpop.f32.mrb[0].mxu0
      %4253 = vmatprep.mubr.bf16.mxu0 0
      %4254 = vmatmul.mubr.bf16.gmra.mrb[0].mxu0 %v4156
      %v4255 = vpop.f32.mrb[0].mxu0
      %v4256 = vadd.f32 0.0, %v4255
      %v4257 = vpop.f32.mrb[0].mxu0
      %v4258 = vpop.f32.mrb[0].mxu0
      %v4259 = vadd.f32 0.0, %v4258
      %v4260 = vpop.f32.mrb[0].mxu0
      %4261 = vmatprep.mubr.bf16.mxu0 0
      %4262 = vmatmul.mubr.bf16.gmra.mrb[0].mxu0 %v4159
      %v4263 = vpop.f32.mrb[0].mxu0
      %v4264 = vadd.f32 0.0, %v4263
      %v4265 = vpop.f32.mrb[0].mxu0
      %v4266 = vpop.f32.mrb[0].mxu0
      %v4267 = vadd.f32 0.0, %v4266
      %v4268 = vpop.f32.mrb[0].mxu0
      %4269 = vmatprep.mubr.bf16.mxu0 0
      %4270 = vmatmul.mubr.bf16.gmra.mrb[0].mxu0 %v4162
      %v4271 = vpop.f32.mrb[0].mxu0
      %v4272 = vadd.f32 0.0, %v4271
      %v4273 = vpop.f32.mrb[0].mxu0
      %v4274 = vpop.f32.mrb[0].mxu0
      %v4275 = vadd.f32 0.0, %v4274
      %v4276 = vpop.f32.mrb[0].mxu0
      %4277 = vmatprep.mubr.bf16.mxu0 0
      %4278 = vmatmul.mubr.bf16.gmra.mrb[0].mxu0 %v4165
      %v4279 = vpop.f32.mrb[0].mxu0
      %v4280 = vadd.f32 0.0, %v4279
      %v4281 = vpop.f32.mrb[0].mxu0
      %v4282 = vpop.f32.mrb[0].mxu0
      %v4283 = vadd.f32 0.0, %v4282
      %v4284 = vpop.f32.mrb[0].mxu0
      %4285 = vmatprep.mubr.bf16.mxu0 0
      %4286 = vmatmul.mubr.bf16.gmra.mrb[0].mxu0 %v4168
      %v4287 = vpop.f32.mrb[0].mxu0
      %v4288 = vadd.f32 0.0, %v4287
      %v4289 = vpop.f32.mrb[0].mxu0
      %v4290 = vpop.f32.mrb[0].mxu0
      %v4291 = vadd.f32 0.0, %v4290
      %v4292 = vpop.f32.mrb[0].mxu0
      %4293 = vmatprep.mubr.bf16.mxu0 0
      %4294 = vmatmul.mubr.bf16.gmra.mrb[0].mxu0 %v4171
      %v4295 = vpop.f32.mrb[0].mxu0
      %v4296 = vadd.f32 0.0, %v4295
      %v4297 = vpop.f32.mrb[0].mxu0
      %v4298 = vpop.f32.mrb[0].mxu0
      %v4299 = vadd.f32 0.0, %v4298
      %v4300 = vpop.f32.mrb[0].mxu0
      %4301 = vmatprep.mubr.bf16.mxu0 0
      %4302 = vmatmul.mubr.bf16.gmra.mrb[0].mxu0 %v4174
      %v4303 = vpop.f32.mrb[0].mxu0
      %v4304 = vadd.f32 0.0, %v4303
      %v4305 = vpop.f32.mrb[0].mxu0
      %v4306 = vpop.f32.mrb[0].mxu0
      %v4307 = vadd.f32 0.0, %v4306
      %v4308 = vpop.f32.mrb[0].mxu0
      %4309 = vmatprep.mubr.bf16.mxu0 0
      %4310 = vmatmul.mubr.bf16.gmra.mrb[0].mxu0 %v4177
      %v4311 = vpop.f32.mrb[0].mxu0
      %v4312 = vadd.f32 0.0, %v4311
      %v4313 = vpop.f32.mrb[0].mxu0
      %v4314 = vpop.f32.mrb[0].mxu0
      %v4315 = vadd.f32 0.0, %v4314
      %v4316 = vpop.f32.mrb[0].mxu0
      %4317 = vmatprep.mubr.bf16.mxu0 0
      %4318 = vmatmul.mubr.bf16.gmra.mrb[0].mxu0 %v4180
      %v4319 = vpop.f32.mrb[0].mxu0
      %v4320 = vadd.f32 0.0, %v4319
      %v4321 = vpop.f32.mrb[0].mxu0
      %v4322 = vpop.f32.mrb[0].mxu0
      %v4323 = vadd.f32 0.0, %v4322
      %v4324 = vpop.f32.mrb[0].mxu0
      %4325 = vmatprep.mubr.bf16.mxu0 0
      %4326 = vmatmul.mubr.bf16.gmra.mrb[0].mxu0 %v4183
      %v4327 = vpop.f32.mrb[0].mxu0
      %v4328 = vadd.f32 0.0, %v4327
      %v4329 = vpop.f32.mrb[0].mxu0
      %v4330 = vpop.f32.mrb[0].mxu0
      %v4331 = vadd.f32 0.0, %v4330
      %v4332 = vpop.f32.mrb[0].mxu0
      %4333 = vmatprep.mubr.bf16.mxu0 0
      %4334 = vmatmul.mubr.bf16.gmra.mrb[0].mxu0 %v4186
      %v4335 = vpop.f32.mrb[0].mxu0
      %v4336 = vadd.f32 0.0, %v4335
      %v4337 = vpop.f32.mrb[0].mxu0
      %v4338 = vpop.f32.mrb[0].mxu0
      %v4339 = vadd.f32 0.0, %v4338
      %v4340 = vpop.f32.mrb[0].mxu0
      %4341 = vmatprep.mubr.bf16.mxu0 0
      %4342 = vmatmul.mubr.bf16.gmra.mrb[0].mxu0 %v4189
      %v4343 = vpop.f32.mrb[0].mxu0
      %v4344 = vadd.f32 0.0, %v4343
      %v4345 = vpop.f32.mrb[0].mxu0
      %v4346 = vpop.f32.mrb[0].mxu0
      %v4347 = vadd.f32 0.0, %v4346
      %v4348 = vpop.f32.mrb[0].mxu0
      %4349 = vmatprep.mubr.bf16.mxu0 0
      %4350 = vmatmul.mubr.bf16.gmra.mrb[0].mxu0 %v4192
      %v4351 = vpop.f32.mrb[0].mxu0
      %v4352 = vadd.f32 0.0, %v4351
      %v4353 = vpop.f32.mrb[0].mxu0
      %v4354 = vpop.f32.mrb[0].mxu0
      %v4355 = vadd.f32 0.0, %v4354
      %v4356 = vpop.f32.mrb[0].mxu0
      %4357 = vdwg.mxu0
      %v4358 = vadd.f32 %v4064, %v4232
      %v4359 = vadd.f32 %v4065, %v4235
      %v4360 = vadd.f32 %v4066, %v4240
      %v4361 = vadd.f32 %v4067, %v4243
      %v4362 = vadd.f32 %v4068, %v4248
      %v4363 = vadd.f32 %v4069, %v4251
      %v4364 = vadd.f32 %v4070, %v4256
      %v4365 = vadd.f32 %v4071, %v4259
      %v4366 = vadd.f32 %v4072, %v4264
      %v4367 = vadd.f32 %v4073, %v4267
      %v4368 = vadd.f32 %v4074, %v4272
      %v4369 = vadd.f32 %v4075, %v4275
      %v4370 = vadd.f32 %v4076, %v4280
      %v4371 = vadd.f32 %v4077, %v4283
      %v4372 = vadd.f32 %v4078, %v4288
      %v4373 = vadd.f32 %v4079, %v4291
      %v4374 = vadd.f32 %v4080, %v4296
      %v4375 = vadd.f32 %v4081, %v4299
      %v4376 = vadd.f32 %v4082, %v4304
      %v4377 = vadd.f32 %v4083, %v4307
      %v4378 = vadd.f32 %v4084, %v4312
      %v4379 = vadd.f32 %v4085, %v4315
      %v4380 = vadd.f32 %v4086, %v4320
      %v4381 = vadd.f32 %v4087, %v4323
      %v4382 = vadd.f32 %v4088, %v4328
      %v4383 = vadd.f32 %v4089, %v4331
      %v4384 = vadd.f32 %v4090, %v4336
      %v4385 = vadd.f32 %v4091, %v4339
      %v4386 = vadd.f32 %v4092, %v4344
      %v4387 = vadd.f32 %v4093, %v4347
      %v4388 = vadd.f32 %v4094, %v4352
      %v4389 = vadd.f32 %v4095, %v4355
      %v4390 = vld [vmem:[%s240 + $0x1] sm:$0xff]
      %v4391 = vld [vmem:[%s240 + $0x9] sm:$0xff]
      %v4392 = vld [vmem:[%s240 + $0x19] sm:$0xff]
      %v4393 = vld [vmem:[%s240 + $0x21] sm:$0xff]
      %v4394 = vld [vmem:[%s240 + $0x31] sm:$0xff]
      %v4395 = vld [vmem:[%s240 + $0x39] sm:$0xff]
      %v4396 = vld [vmem:[%s240 + $0x49] sm:$0xff]
      %v4397 = vld [vmem:[%s240 + $0x51] sm:$0xff]
      %v4398 = vld [vmem:[%s240 + $0x61] sm:$0xff]
      %v4399 = vld [vmem:[%s240 + $0x69] sm:$0xff]
      %v4400 = vld [vmem:[%s240 + $0x79] sm:$0xff]
      %v4401 = vld [vmem:[%s240 + $0x81] sm:$0xff]
      %v4402 = vld [vmem:[%s240 + $0x91] sm:$0xff]
      %v4403 = vld [vmem:[%s240 + $0x99] sm:$0xff]
      %v4404 = vld [vmem:[%s240 + $0xa9] sm:$0xff]
      %v4405 = vld [vmem:[%s240 + $0xb1] sm:$0xff]
      %v4406 = vld [vmem:[%s240 + $0xc1] sm:$0xff]
      %v4407 = vld [vmem:[%s240 + $0xc9] sm:$0xff]
      %v4408 = vld [vmem:[%s240 + $0xd9] sm:$0xff]
      %v4409 = vld [vmem:[%s240 + $0xe1] sm:$0xff]
      %v4410 = vld [vmem:[%s240 + $0xf1] sm:$0xff]
      %v4411 = vld [vmem:[%s240 + $0xf9] sm:$0xff]
      %v4412 = vld [vmem:[%s240 + $0x109] sm:$0xff]
      %v4413 = vld [vmem:[%s240 + $0x111] sm:$0xff]
      %v4414 = vld [vmem:[%s240 + $0x121] sm:$0xff]
      %v4415 = vld [vmem:[%s240 + $0x129] sm:$0xff]
      %v4416 = vld [vmem:[%s240 + $0x139] sm:$0xff]
      %v4417 = vld [vmem:[%s240 + $0x141] sm:$0xff]
      %v4418 = vld [vmem:[%s240 + $0x151] sm:$0xff]
      %v4419 = vld [vmem:[%s240 + $0x159] sm:$0xff]
      %v4420 = vld [vmem:[%s240 + $0x169] sm:$0xff]
      %v4421 = vld [vmem:[%s240 + $0x171] sm:$0xff]
      %v4422 = vpack.c.bf16 %v4391, %v4390
      %v4423 = vpack.c.bf16 %v4393, %v4392
      %v4424 = vpack.c.bf16 %v4395, %v4394
      %v4425 = vpack.c.bf16 %v4397, %v4396
      %v4426 = vpack.c.bf16 %v4399, %v4398
      %v4427 = vpack.c.bf16 %v4401, %v4400
      %v4428 = vpack.c.bf16 %v4403, %v4402
      %v4429 = vpack.c.bf16 %v4405, %v4404
      %v4430 = vpack.c.bf16 %v4407, %v4406
      %v4431 = vpack.c.bf16 %v4409, %v4408
      %v4432 = vpack.c.bf16 %v4411, %v4410
      %v4433 = vpack.c.bf16 %v4413, %v4412
      %v4434 = vpack.c.bf16 %v4415, %v4414
      %v4435 = vpack.c.bf16 %v4417, %v4416
      %v4436 = vpack.c.bf16 %v4419, %v4418
      %v4437 = vpack.c.bf16 %v4421, %v4420
      %s4438 = scalar_lea.vmem %s4, 8
      %v4439 = vld [vmem:[%s4438] sm:$0x3]
      %v4441 = vsel %vm232, %v4422, 0
      %v4444 = vsel %vm232, %v4423, 0
      %v4447 = vsel %vm232, %v4424, 0
      %v4450 = vsel %vm232, %v4425, 0
      %v4453 = vsel %vm232, %v4426, 0
      %v4456 = vsel %vm232, %v4427, 0
      %v4459 = vsel %vm232, %v4428, 0
      %v4462 = vsel %vm232, %v4429, 0
      %v4465 = vsel %vm232, %v4430, 0
      %v4468 = vsel %vm232, %v4431, 0
      %v4471 = vsel %vm232, %v4432, 0
      %v4474 = vsel %vm232, %v4433, 0
      %v4477 = vsel %vm232, %v4434, 0
      %v4480 = vsel %vm232, %v4435, 0
      %v4483 = vsel %vm232, %v4436, 0
      %v4486 = vsel %vm232, %v4437, 0
      %v4489 = vsel %vm648, %v4439, 0
      %4491 = vmatprep.subr.bf16.mxu0 0
      %4492 = vmatpush1.bf16.msra.mxu0 %v4489
      %4493 = vmatprep.subr.bf16.mxu0 0
      %4494 = vmatpush1.bf16.msra.mxu0 0
      %4495 = vmatprep.subr.bf16.mxu0 0
      %4496 = vmatpush1.bf16.msra.mxu0 0
      %4497 = vmatprep.subr.bf16.mxu0 0
      %4498 = vmatpush1.bf16.msra.mxu0 0
      %4499 = vmatprep.subr.bf16.mxu0 0
      %4500 = vmatpush1.bf16.msra.mxu0 0
      %4501 = vmatprep.subr.bf16.mxu0 0
      %4502 = vmatpush1.bf16.msra.mxu0 0
      %4503 = vmatprep.subr.bf16.mxu0 0
      %4504 = vmatpush1.bf16.msra.mxu0 0
      %4505 = vmatprep.subr.bf16.mxu0 0
      %4506 = vmatpush1.bf16.msra.mxu0 0
      %4507 = vmatprep.subr.bf16.mxu0 0
      %4508 = vmatpush1.bf16.msra.mxu0 0
      %4509 = vmatprep.subr.bf16.mxu0 0
      %4510 = vmatpush1.bf16.msra.mxu0 0
      %4511 = vmatprep.subr.bf16.mxu0 0
      %4512 = vmatpush1.bf16.msra.mxu0 0
      %4513 = vmatprep.subr.bf16.mxu0 0
      %4514 = vmatpush1.bf16.msra.mxu0 0
      %4515 = vmatprep.subr.bf16.mxu0 0
      %4516 = vmatpush1.bf16.msra.mxu0 0
      %4517 = vmatprep.subr.bf16.mxu0 0
      %4518 = vmatpush1.bf16.msra.mxu0 0
      %4519 = vmatprep.subr.bf16.mxu0 0
      %4520 = vmatpush1.bf16.msra.mxu0 0
      %4521 = vmatprep.subr.bf16.mxu0 0
      %4522 = vmatpush1.bf16.msra.mxu0 0
      %4523 = vmatprep.mubr.bf16.mxu0 0
      %4524 = vmatmul.mubr.bf16.gmra.mrb[0].mxu0 %v4441
      %v4525 = vpop.f32.mrb[0].mxu0
      %v4526 = vadd.f32 0.0, %v4525
      %v4527 = vpop.f32.mrb[0].mxu0
      %v4528 = vpop.f32.mrb[0].mxu0
      %v4529 = vadd.f32 0.0, %v4528
      %v4530 = vpop.f32.mrb[0].mxu0
      %4531 = vmatprep.mubr.bf16.mxu0 0
      %4532 = vmatmul.mubr.bf16.gmra.mrb[0].mxu0 %v4444
      %v4533 = vpop.f32.mrb[0].mxu0
      %v4534 = vadd.f32 0.0, %v4533
      %v4535 = vpop.f32.mrb[0].mxu0
      %v4536 = vpop.f32.mrb[0].mxu0
      %v4537 = vadd.f32 0.0, %v4536
      %v4538 = vpop.f32.mrb[0].mxu0
      %4539 = vmatprep.mubr.bf16.mxu0 0
      %4540 = vmatmul.mubr.bf16.gmra.mrb[0].mxu0 %v4447
      %v4541 = vpop.f32.mrb[0].mxu0
      %v4542 = vadd.f32 0.0, %v4541
      %v4543 = vpop.f32.mrb[0].mxu0
      %v4544 = vpop.f32.mrb[0].mxu0
      %v4545 = vadd.f32 0.0, %v4544
      %v4546 = vpop.f32.mrb[0].mxu0
      %4547 = vmatprep.mubr.bf16.mxu0 0
      %4548 = vmatmul.mubr.bf16.gmra.mrb[0].mxu0 %v4450
      %v4549 = vpop.f32.mrb[0].mxu0
      %v4550 = vadd.f32 0.0, %v4549
      %v4551 = vpop.f32.mrb[0].mxu0
      %v4552 = vpop.f32.mrb[0].mxu0
      %v4553 = vadd.f32 0.0, %v4552
      %v4554 = vpop.f32.mrb[0].mxu0
      %4555 = vmatprep.mubr.bf16.mxu0 0
      %4556 = vmatmul.mubr.bf16.gmra.mrb[0].mxu0 %v4453
      %v4557 = vpop.f32.mrb[0].mxu0
      %v4558 = vadd.f32 0.0, %v4557
      %v4559 = vpop.f32.mrb[0].mxu0
      %v4560 = vpop.f32.mrb[0].mxu0
      %v4561 = vadd.f32 0.0, %v4560
      %v4562 = vpop.f32.mrb[0].mxu0
      %4563 = vmatprep.mubr.bf16.mxu0 0
      %4564 = vmatmul.mubr.bf16.gmra.mrb[0].mxu0 %v4456
      %v4565 = vpop.f32.mrb[0].mxu0
      %v4566 = vadd.f32 0.0, %v4565
      %v4567 = vpop.f32.mrb[0].mxu0
      %v4568 = vpop.f32.mrb[0].mxu0
      %v4569 = vadd.f32 0.0, %v4568
      %v4570 = vpop.f32.mrb[0].mxu0
      %4571 = vmatprep.mubr.bf16.mxu0 0
      %4572 = vmatmul.mubr.bf16.gmra.mrb[0].mxu0 %v4459
      %v4573 = vpop.f32.mrb[0].mxu0
      %v4574 = vadd.f32 0.0, %v4573
      %v4575 = vpop.f32.mrb[0].mxu0
      %v4576 = vpop.f32.mrb[0].mxu0
      %v4577 = vadd.f32 0.0, %v4576
      %v4578 = vpop.f32.mrb[0].mxu0
      %4579 = vmatprep.mubr.bf16.mxu0 0
      %4580 = vmatmul.mubr.bf16.gmra.mrb[0].mxu0 %v4462
      %v4581 = vpop.f32.mrb[0].mxu0
      %v4582 = vadd.f32 0.0, %v4581
      %v4583 = vpop.f32.mrb[0].mxu0
      %v4584 = vpop.f32.mrb[0].mxu0
      %v4585 = vadd.f32 0.0, %v4584
      %v4586 = vpop.f32.mrb[0].mxu0
      %4587 = vmatprep.mubr.bf16.mxu0 0
      %4588 = vmatmul.mubr.bf16.gmra.mrb[0].mxu0 %v4465
      %v4589 = vpop.f32.mrb[0].mxu0
      %v4590 = vadd.f32 0.0, %v4589
      %v4591 = vpop.f32.mrb[0].mxu0
      %v4592 = vpop.f32.mrb[0].mxu0
      %v4593 = vadd.f32 0.0, %v4592
      %v4594 = vpop.f32.mrb[0].mxu0
      %4595 = vmatprep.mubr.bf16.mxu0 0
      %4596 = vmatmul.mubr.bf16.gmra.mrb[0].mxu0 %v4468
      %v4597 = vpop.f32.mrb[0].mxu0
      %v4598 = vadd.f32 0.0, %v4597
      %v4599 = vpop.f32.mrb[0].mxu0
      %v4600 = vpop.f32.mrb[0].mxu0
      %v4601 = vadd.f32 0.0, %v4600
      %v4602 = vpop.f32.mrb[0].mxu0
      %4603 = vmatprep.mubr.bf16.mxu0 0
      %4604 = vmatmul.mubr.bf16.gmra.mrb[0].mxu0 %v4471
      %v4605 = vpop.f32.mrb[0].mxu0
      %v4606 = vadd.f32 0.0, %v4605
      %v4607 = vpop.f32.mrb[0].mxu0
      %v4608 = vpop.f32.mrb[0].mxu0
      %v4609 = vadd.f32 0.0, %v4608
      %v4610 = vpop.f32.mrb[0].mxu0
      %4611 = vmatprep.mubr.bf16.mxu0 0
      %4612 = vmatmul.mubr.bf16.gmra.mrb[0].mxu0 %v4474
      %v4613 = vpop.f32.mrb[0].mxu0
      %v4614 = vadd.f32 0.0, %v4613
      %v4615 = vpop.f32.mrb[0].mxu0
      %v4616 = vpop.f32.mrb[0].mxu0
      %v4617 = vadd.f32 0.0, %v4616
      %v4618 = vpop.f32.mrb[0].mxu0
      %4619 = vmatprep.mubr.bf16.mxu0 0
      %4620 = vmatmul.mubr.bf16.gmra.mrb[0].mxu0 %v4477
      %v4621 = vpop.f32.mrb[0].mxu0
      %v4622 = vadd.f32 0.0, %v4621
      %v4623 = vpop.f32.mrb[0].mxu0
      %v4624 = vpop.f32.mrb[0].mxu0
      %v4625 = vadd.f32 0.0, %v4624
      %v4626 = vpop.f32.mrb[0].mxu0
      %4627 = vmatprep.mubr.bf16.mxu0 0
      %4628 = vmatmul.mubr.bf16.gmra.mrb[0].mxu0 %v4480
      %v4629 = vpop.f32.mrb[0].mxu0
      %v4630 = vadd.f32 0.0, %v4629
      %v4631 = vpop.f32.mrb[0].mxu0
      %v4632 = vpop.f32.mrb[0].mxu0
      %v4633 = vadd.f32 0.0, %v4632
      %v4634 = vpop.f32.mrb[0].mxu0
      %4635 = vmatprep.mubr.bf16.mxu0 0
      %4636 = vmatmul.mubr.bf16.gmra.mrb[0].mxu0 %v4483
      %v4637 = vpop.f32.mrb[0].mxu0
      %v4638 = vadd.f32 0.0, %v4637
      %v4639 = vpop.f32.mrb[0].mxu0
      %v4640 = vpop.f32.mrb[0].mxu0
      %v4641 = vadd.f32 0.0, %v4640
      %v4642 = vpop.f32.mrb[0].mxu0
      %4643 = vmatprep.mubr.bf16.mxu0 0
      %4644 = vmatmul.mubr.bf16.gmra.mrb[0].mxu0 %v4486
      %v4645 = vpop.f32.mrb[0].mxu0
      %v4646 = vadd.f32 0.0, %v4645
      %v4647 = vpop.f32.mrb[0].mxu0
      %v4648 = vpop.f32.mrb[0].mxu0
      %v4649 = vadd.f32 0.0, %v4648
      %v4650 = vpop.f32.mrb[0].mxu0
      %4651 = vdwg.mxu0
      %v4652 = vadd.f32 %v4358, %v4526
      %v4653 = vadd.f32 %v4359, %v4529
      %v4654 = vadd.f32 %v4360, %v4534
      %v4655 = vadd.f32 %v4361, %v4537
      %v4656 = vadd.f32 %v4362, %v4542
      %v4657 = vadd.f32 %v4363, %v4545
      %v4658 = vadd.f32 %v4364, %v4550
      %v4659 = vadd.f32 %v4365, %v4553
      %v4660 = vadd.f32 %v4366, %v4558
      %v4661 = vadd.f32 %v4367, %v4561
      %v4662 = vadd.f32 %v4368, %v4566
      %v4663 = vadd.f32 %v4369, %v4569
      %v4664 = vadd.f32 %v4370, %v4574
      %v4665 = vadd.f32 %v4371, %v4577
      %v4666 = vadd.f32 %v4372, %v4582
      %v4667 = vadd.f32 %v4373, %v4585
      %v4668 = vadd.f32 %v4374, %v4590
      %v4669 = vadd.f32 %v4375, %v4593
      %v4670 = vadd.f32 %v4376, %v4598
      %v4671 = vadd.f32 %v4377, %v4601
      %v4672 = vadd.f32 %v4378, %v4606
      %v4673 = vadd.f32 %v4379, %v4609
      %v4674 = vadd.f32 %v4380, %v4614
      %v4675 = vadd.f32 %v4381, %v4617
      %v4676 = vadd.f32 %v4382, %v4622
      %v4677 = vadd.f32 %v4383, %v4625
      %v4678 = vadd.f32 %v4384, %v4630
      %v4679 = vadd.f32 %v4385, %v4633
      %v4680 = vadd.f32 %v4386, %v4638
      %v4681 = vadd.f32 %v4387, %v4641
      %v4682 = vadd.f32 %v4388, %v4646
      %v4683 = vadd.f32 %v4389, %v4649
      %v4684 = vld [vmem:[%s240 + $0x2] sm:$0xff]
      %v4685 = vld [vmem:[%s240 + $0xa] sm:$0xff]
      %v4686 = vld [vmem:[%s240 + $0x1a] sm:$0xff]
      %v4687 = vld [vmem:[%s240 + $0x22] sm:$0xff]
      %v4688 = vld [vmem:[%s240 + $0x32] sm:$0xff]
      %v4689 = vld [vmem:[%s240 + $0x3a] sm:$0xff]
      %v4690 = vld [vmem:[%s240 + $0x4a] sm:$0xff]
      %v4691 = vld [vmem:[%s240 + $0x52] sm:$0xff]
      %v4692 = vld [vmem:[%s240 + $0x62] sm:$0xff]
      %v4693 = vld [vmem:[%s240 + $0x6a] sm:$0xff]
      %v4694 = vld [vmem:[%s240 + $0x7a] sm:$0xff]
      %v4695 = vld [vmem:[%s240 + $0x82] sm:$0xff]
      %v4696 = vld [vmem:[%s240 + $0x92] sm:$0xff]
      %v4697 = vld [vmem:[%s240 + $0x9a] sm:$0xff]
      %v4698 = vld [vmem:[%s240 + $0xaa] sm:$0xff]
      %v4699 = vld [vmem:[%s240 + $0xb2] sm:$0xff]
      %v4700 = vld [vmem:[%s240 + $0xc2] sm:$0xff]
      %v4701 = vld [vmem:[%s240 + $0xca] sm:$0xff]
      %v4702 = vld [vmem:[%s240 + $0xda] sm:$0xff]
      %v4703 = vld [vmem:[%s240 + $0xe2] sm:$0xff]
      %v4704 = vld [vmem:[%s240 + $0xf2] sm:$0xff]
      %v4705 = vld [vmem:[%s240 + $0xfa] sm:$0xff]
      %v4706 = vld [vmem:[%s240 + $0x10a] sm:$0xff]
      %v4707 = vld [vmem:[%s240 + $0x112] sm:$0xff]
      %v4708 = vld [vmem:[%s240 + $0x122] sm:$0xff]
      %v4709 = vld [vmem:[%s240 + $0x12a] sm:$0xff]
      %v4710 = vld [vmem:[%s240 + $0x13a] sm:$0xff]
      %v4711 = vld [vmem:[%s240 + $0x142] sm:$0xff]
      %v4712 = vld [vmem:[%s240 + $0x152] sm:$0xff]
      %v4713 = vld [vmem:[%s240 + $0x15a] sm:$0xff]
      %v4714 = vld [vmem:[%s240 + $0x16a] sm:$0xff]
      %v4715 = vld [vmem:[%s240 + $0x172] sm:$0xff]
      %v4716 = vpack.c.bf16 %v4685, %v4684
      %v4717 = vpack.c.bf16 %v4687, %v4686
      %v4718 = vpack.c.bf16 %v4689, %v4688
      %v4719 = vpack.c.bf16 %v4691, %v4690
      %v4720 = vpack.c.bf16 %v4693, %v4692
      %v4721 = vpack.c.bf16 %v4695, %v4694
      %v4722 = vpack.c.bf16 %v4697, %v4696
      %v4723 = vpack.c.bf16 %v4699, %v4698
      %v4724 = vpack.c.bf16 %v4701, %v4700
      %v4725 = vpack.c.bf16 %v4703, %v4702
      %v4726 = vpack.c.bf16 %v4705, %v4704
      %v4727 = vpack.c.bf16 %v4707, %v4706
      %v4728 = vpack.c.bf16 %v4709, %v4708
      %v4729 = vpack.c.bf16 %v4711, %v4710
      %v4730 = vpack.c.bf16 %v4713, %v4712
      %v4731 = vpack.c.bf16 %v4715, %v4714
      %s4732 = scalar_lea.vmem %s4, 10
      %v4733 = vld [vmem:[%s4732] sm:$0x3]
      %v4735 = vsel %vm232, %v4716, 0
      %v4738 = vsel %vm232, %v4717, 0
      %v4741 = vsel %vm232, %v4718, 0
      %v4744 = vsel %vm232, %v4719, 0
      %v4747 = vsel %vm232, %v4720, 0
      %v4750 = vsel %vm232, %v4721, 0
      %v4753 = vsel %vm232, %v4722, 0
      %v4756 = vsel %vm232, %v4723, 0
      %v4759 = vsel %vm232, %v4724, 0
      %v4762 = vsel %vm232, %v4725, 0
      %v4765 = vsel %vm232, %v4726, 0
      %v4768 = vsel %vm232, %v4727, 0
      %v4771 = vsel %vm232, %v4728, 0
      %v4774 = vsel %vm232, %v4729, 0
      %v4777 = vsel %vm232, %v4730, 0
      %v4780 = vsel %vm232, %v4731, 0
      %v4783 = vsel %vm648, %v4733, 0
      %4785 = vmatprep.subr.bf16.mxu0 0
      %4786 = vmatpush1.bf16.msra.mxu0 %v4783
      %4787 = vmatprep.subr.bf16.mxu0 0
      %4788 = vmatpush1.bf16.msra.mxu0 0
      %4789 = vmatprep.subr.bf16.mxu0 0
      %4790 = vmatpush1.bf16.msra.mxu0 0
      %4791 = vmatprep.subr.bf16.mxu0 0
      %4792 = vmatpush1.bf16.msra.mxu0 0
      %4793 = vmatprep.subr.bf16.mxu0 0
      %4794 = vmatpush1.bf16.msra.mxu0 0
      %4795 = vmatprep.subr.bf16.mxu0 0
      %4796 = vmatpush1.bf16.msra.mxu0 0
      %4797 = vmatprep.subr.bf16.mxu0 0
      %4798 = vmatpush1.bf16.msra.mxu0 0
      %4799 = vmatprep.subr.bf16.mxu0 0
      %4800 = vmatpush1.bf16.msra.mxu0 0
      %4801 = vmatprep.subr.bf16.mxu0 0
      %4802 = vmatpush1.bf16.msra.mxu0 0
      %4803 = vmatprep.subr.bf16.mxu0 0
      %4804 = vmatpush1.bf16.msra.mxu0 0
      %4805 = vmatprep.subr.bf16.mxu0 0
      %4806 = vmatpush1.bf16.msra.mxu0 0
      %4807 = vmatprep.subr.bf16.mxu0 0
      %4808 = vmatpush1.bf16.msra.mxu0 0
      %4809 = vmatprep.subr.bf16.mxu0 0
      %4810 = vmatpush1.bf16.msra.mxu0 0
      %4811 = vmatprep.subr.bf16.mxu0 0
      %4812 = vmatpush1.bf16.msra.mxu0 0
      %4813 = vmatprep.subr.bf16.mxu0 0
      %4814 = vmatpush1.bf16.msra.mxu0 0
      %4815 = vmatprep.subr.bf16.mxu0 0
      %4816 = vmatpush1.bf16.msra.mxu0 0
      %4817 = vmatprep.mubr.bf16.mxu0 0
      %4818 = vmatmul.mubr.bf16.gmra.mrb[0].mxu0 %v4735
      %v4819 = vpop.f32.mrb[0].mxu0
      %v4820 = vadd.f32 0.0, %v4819
      %v4821 = vpop.f32.mrb[0].mxu0
      %v4822 = vpop.f32.mrb[0].mxu0
      %v4823 = vadd.f32 0.0, %v4822
      %v4824 = vpop.f32.mrb[0].mxu0
      %4825 = vmatprep.mubr.bf16.mxu0 0
      %4826 = vmatmul.mubr.bf16.gmra.mrb[0].mxu0 %v4738
      %v4827 = vpop.f32.mrb[0].mxu0
      %v4828 = vadd.f32 0.0, %v4827
      %v4829 = vpop.f32.mrb[0].mxu0
      %v4830 = vpop.f32.mrb[0].mxu0
      %v4831 = vadd.f32 0.0, %v4830
      %v4832 = vpop.f32.mrb[0].mxu0
      %4833 = vmatprep.mubr.bf16.mxu0 0
      %4834 = vmatmul.mubr.bf16.gmra.mrb[0].mxu0 %v4741
      %v4835 = vpop.f32.mrb[0].mxu0
      %v4836 = vadd.f32 0.0, %v4835
      %v4837 = vpop.f32.mrb[0].mxu0
      %v4838 = vpop.f32.mrb[0].mxu0
      %v4839 = vadd.f32 0.0, %v4838
      %v4840 = vpop.f32.mrb[0].mxu0
      %4841 = vmatprep.mubr.bf16.mxu0 0
      %4842 = vmatmul.mubr.bf16.gmra.mrb[0].mxu0 %v4744
      %v4843 = vpop.f32.mrb[0].mxu0
      %v4844 = vadd.f32 0.0, %v4843
      %v4845 = vpop.f32.mrb[0].mxu0
      %v4846 = vpop.f32.mrb[0].mxu0
      %v4847 = vadd.f32 0.0, %v4846
      %v4848 = vpop.f32.mrb[0].mxu0
      %4849 = vmatprep.mubr.bf16.mxu0 0
      %4850 = vmatmul.mubr.bf16.gmra.mrb[0].mxu0 %v4747
      %v4851 = vpop.f32.mrb[0].mxu0
      %v4852 = vadd.f32 0.0, %v4851
      %v4853 = vpop.f32.mrb[0].mxu0
      %v4854 = vpop.f32.mrb[0].mxu0
      %v4855 = vadd.f32 0.0, %v4854
      %v4856 = vpop.f32.mrb[0].mxu0
      %4857 = vmatprep.mubr.bf16.mxu0 0
      %4858 = vmatmul.mubr.bf16.gmra.mrb[0].mxu0 %v4750
      %v4859 = vpop.f32.mrb[0].mxu0
      %v4860 = vadd.f32 0.0, %v4859
      %v4861 = vpop.f32.mrb[0].mxu0
      %v4862 = vpop.f32.mrb[0].mxu0
      %v4863 = vadd.f32 0.0, %v4862
      %v4864 = vpop.f32.mrb[0].mxu0
      %4865 = vmatprep.mubr.bf16.mxu0 0
      %4866 = vmatmul.mubr.bf16.gmra.mrb[0].mxu0 %v4753
      %v4867 = vpop.f32.mrb[0].mxu0
      %v4868 = vadd.f32 0.0, %v4867
      %v4869 = vpop.f32.mrb[0].mxu0
      %v4870 = vpop.f32.mrb[0].mxu0
      %v4871 = vadd.f32 0.0, %v4870
      %v4872 = vpop.f32.mrb[0].mxu0
      %4873 = vmatprep.mubr.bf16.mxu0 0
      %4874 = vmatmul.mubr.bf16.gmra.mrb[0].mxu0 %v4756
      %v4875 = vpop.f32.mrb[0].mxu0
      %v4876 = vadd.f32 0.0, %v4875
      %v4877 = vpop.f32.mrb[0].mxu0
      %v4878 = vpop.f32.mrb[0].mxu0
      %v4879 = vadd.f32 0.0, %v4878
      %v4880 = vpop.f32.mrb[0].mxu0
      %4881 = vmatprep.mubr.bf16.mxu0 0
      %4882 = vmatmul.mubr.bf16.gmra.mrb[0].mxu0 %v4759
      %v4883 = vpop.f32.mrb[0].mxu0
      %v4884 = vadd.f32 0.0, %v4883
      %v4885 = vpop.f32.mrb[0].mxu0
      %v4886 = vpop.f32.mrb[0].mxu0
      %v4887 = vadd.f32 0.0, %v4886
      %v4888 = vpop.f32.mrb[0].mxu0
      %4889 = vmatprep.mubr.bf16.mxu0 0
      %4890 = vmatmul.mubr.bf16.gmra.mrb[0].mxu0 %v4762
      %v4891 = vpop.f32.mrb[0].mxu0
      %v4892 = vadd.f32 0.0, %v4891
      %v4893 = vpop.f32.mrb[0].mxu0
      %v4894 = vpop.f32.mrb[0].mxu0
      %v4895 = vadd.f32 0.0, %v4894
      %v4896 = vpop.f32.mrb[0].mxu0
      %4897 = vmatprep.mubr.bf16.mxu0 0
      %4898 = vmatmul.mubr.bf16.gmra.mrb[0].mxu0 %v4765
      %v4899 = vpop.f32.mrb[0].mxu0
      %v4900 = vadd.f32 0.0, %v4899
      %v4901 = vpop.f32.mrb[0].mxu0
      %v4902 = vpop.f32.mrb[0].mxu0
      %v4903 = vadd.f32 0.0, %v4902
      %v4904 = vpop.f32.mrb[0].mxu0
      %4905 = vmatprep.mubr.bf16.mxu0 0
      %4906 = vmatmul.mubr.bf16.gmra.mrb[0].mxu0 %v4768
      %v4907 = vpop.f32.mrb[0].mxu0
      %v4908 = vadd.f32 0.0, %v4907
      %v4909 = vpop.f32.mrb[0].mxu0
      %v4910 = vpop.f32.mrb[0].mxu0
      %v4911 = vadd.f32 0.0, %v4910
      %v4912 = vpop.f32.mrb[0].mxu0
      %4913 = vmatprep.mubr.bf16.mxu0 0
      %4914 = vmatmul.mubr.bf16.gmra.mrb[0].mxu0 %v4771
      %v4915 = vpop.f32.mrb[0].mxu0
      %v4916 = vadd.f32 0.0, %v4915
      %v4917 = vpop.f32.mrb[0].mxu0
      %v4918 = vpop.f32.mrb[0].mxu0
      %v4919 = vadd.f32 0.0, %v4918
      %v4920 = vpop.f32.mrb[0].mxu0
      %4921 = vmatprep.mubr.bf16.mxu0 0
      %4922 = vmatmul.mubr.bf16.gmra.mrb[0].mxu0 %v4774
      %v4923 = vpop.f32.mrb[0].mxu0
      %v4924 = vadd.f32 0.0, %v4923
      %v4925 = vpop.f32.mrb[0].mxu0
      %v4926 = vpop.f32.mrb[0].mxu0
      %v4927 = vadd.f32 0.0, %v4926
      %v4928 = vpop.f32.mrb[0].mxu0
      %4929 = vmatprep.mubr.bf16.mxu0 0
      %4930 = vmatmul.mubr.bf16.gmra.mrb[0].mxu0 %v4777
      %v4931 = vpop.f32.mrb[0].mxu0
      %v4932 = vadd.f32 0.0, %v4931
      %v4933 = vpop.f32.mrb[0].mxu0
      %v4934 = vpop.f32.mrb[0].mxu0
      %v4935 = vadd.f32 0.0, %v4934
      %v4936 = vpop.f32.mrb[0].mxu0
      %4937 = vmatprep.mubr.bf16.mxu0 0
      %4938 = vmatmul.mubr.bf16.gmra.mrb[0].mxu0 %v4780
      %v4939 = vpop.f32.mrb[0].mxu0
      %v4940 = vadd.f32 0.0, %v4939
      %v4941 = vpop.f32.mrb[0].mxu0
      %v4942 = vpop.f32.mrb[0].mxu0
      %v4943 = vadd.f32 0.0, %v4942
      %v4944 = vpop.f32.mrb[0].mxu0
      %4945 = vdwg.mxu0
      %v4946 = vadd.f32 %v4652, %v4820
      %v4947 = vadd.f32 %v4653, %v4823
      %v4948 = vadd.f32 %v4654, %v4828
      %v4949 = vadd.f32 %v4655, %v4831
      %v4950 = vadd.f32 %v4656, %v4836
      %v4951 = vadd.f32 %v4657, %v4839
      %v4952 = vadd.f32 %v4658, %v4844
      %v4953 = vadd.f32 %v4659, %v4847
      %v4954 = vadd.f32 %v4660, %v4852
      %v4955 = vadd.f32 %v4661, %v4855
      %v4956 = vadd.f32 %v4662, %v4860
      %v4957 = vadd.f32 %v4663, %v4863
      %v4958 = vadd.f32 %v4664, %v4868
      %v4959 = vadd.f32 %v4665, %v4871
      %v4960 = vadd.f32 %v4666, %v4876
      %v4961 = vadd.f32 %v4667, %v4879
      %v4962 = vadd.f32 %v4668, %v4884
      %v4963 = vadd.f32 %v4669, %v4887
      %v4964 = vadd.f32 %v4670, %v4892
      %v4965 = vadd.f32 %v4671, %v4895
      %v4966 = vadd.f32 %v4672, %v4900
      %v4967 = vadd.f32 %v4673, %v4903
      %v4968 = vadd.f32 %v4674, %v4908
      %v4969 = vadd.f32 %v4675, %v4911
      %v4970 = vadd.f32 %v4676, %v4916
      %v4971 = vadd.f32 %v4677, %v4919
      %v4972 = vadd.f32 %v4678, %v4924
      %v4973 = vadd.f32 %v4679, %v4927
      %v4974 = vadd.f32 %v4680, %v4932
      %v4975 = vadd.f32 %v4681, %v4935
      %v4976 = vadd.f32 %v4682, %v4940
      %v4977 = vadd.f32 %v4683, %v4943
      %v4978 = vld [vmem:[%s2201] sm:$0xff]
      %v4979 = vld [vmem:[%s2201 + $0x8] sm:$0xff]
      %v4980 = vld [vmem:[%s2201 + $0x18] sm:$0xff]
      %v4981 = vld [vmem:[%s2201 + $0x20] sm:$0xff]
      %v4982 = vld [vmem:[%s2201 + $0x30] sm:$0xff]
      %v4983 = vld [vmem:[%s2201 + $0x38] sm:$0xff]
      %v4984 = vld [vmem:[%s2201 + $0x48] sm:$0xff]
      %v4985 = vld [vmem:[%s2201 + $0x50] sm:$0xff]
      %v4986 = vld [vmem:[%s2201 + $0x60] sm:$0xff]
      %v4987 = vld [vmem:[%s2201 + $0x68] sm:$0xff]
      %v4988 = vld [vmem:[%s2201 + $0x78] sm:$0xff]
      %v4989 = vld [vmem:[%s2201 + $0x80] sm:$0xff]
      %v4990 = vld [vmem:[%s2201 + $0x90] sm:$0xff]
      %v4991 = vld [vmem:[%s2201 + $0x98] sm:$0xff]
      %v4992 = vld [vmem:[%s2201 + $0xa8] sm:$0xff]
      %v4993 = vld [vmem:[%s2201 + $0xb0] sm:$0xff]
      %v4994 = vld [vmem:[%s2201 + $0xc0] sm:$0xff]
      %v4995 = vld [vmem:[%s2201 + $0xc8] sm:$0xff]
      %v4996 = vld [vmem:[%s2201 + $0xd8] sm:$0xff]
      %v4997 = vld [vmem:[%s2201 + $0xe0] sm:$0xff]
      %v4998 = vld [vmem:[%s2201 + $0xf0] sm:$0xff]
      %v4999 = vld [vmem:[%s2201 + $0xf8] sm:$0xff]
      %v5000 = vld [vmem:[%s2201 + $0x108] sm:$0xff]
      %v5001 = vld [vmem:[%s2201 + $0x110] sm:$0xff]
      %v5002 = vld [vmem:[%s2201 + $0x120] sm:$0xff]
      %v5003 = vld [vmem:[%s2201 + $0x128] sm:$0xff]
      %v5004 = vld [vmem:[%s2201 + $0x138] sm:$0xff]
      %v5005 = vld [vmem:[%s2201 + $0x140] sm:$0xff]
      %v5006 = vld [vmem:[%s2201 + $0x150] sm:$0xff]
      %v5007 = vld [vmem:[%s2201 + $0x158] sm:$0xff]
      %v5008 = vld [vmem:[%s2201 + $0x168] sm:$0xff]
      %v5009 = vld [vmem:[%s2201 + $0x170] sm:$0xff]
      %v5010 = vpack.c.bf16 %v4979, %v4978
      %v5011 = vpack.c.bf16 %v4981, %v4980
      %v5012 = vpack.c.bf16 %v4983, %v4982
      %v5013 = vpack.c.bf16 %v4985, %v4984
      %v5014 = vpack.c.bf16 %v4987, %v4986
      %v5015 = vpack.c.bf16 %v4989, %v4988
      %v5016 = vpack.c.bf16 %v4991, %v4990
      %v5017 = vpack.c.bf16 %v4993, %v4992
      %v5018 = vpack.c.bf16 %v4995, %v4994
      %v5019 = vpack.c.bf16 %v4997, %v4996
      %v5020 = vpack.c.bf16 %v4999, %v4998
      %v5021 = vpack.c.bf16 %v5001, %v5000
      %v5022 = vpack.c.bf16 %v5003, %v5002
      %v5023 = vpack.c.bf16 %v5005, %v5004
      %v5024 = vpack.c.bf16 %v5007, %v5006
      %v5025 = vpack.c.bf16 %v5009, %v5008
      %s5026 = scalar_lea.vmem %s4, 12
      %v5027 = vld [vmem:[%s5026] sm:$0x3]
      %v5029 = vsel %vm232, %v5010, 0
      %v5032 = vsel %vm232, %v5011, 0
      %v5035 = vsel %vm232, %v5012, 0
      %v5038 = vsel %vm232, %v5013, 0
      %v5041 = vsel %vm232, %v5014, 0
      %v5044 = vsel %vm232, %v5015, 0
      %v5047 = vsel %vm232, %v5016, 0
      %v5050 = vsel %vm232, %v5017, 0
      %v5053 = vsel %vm232, %v5018, 0
      %v5056 = vsel %vm232, %v5019, 0
      %v5059 = vsel %vm232, %v5020, 0
      %v5062 = vsel %vm232, %v5021, 0
      %v5065 = vsel %vm232, %v5022, 0
      %v5068 = vsel %vm232, %v5023, 0
      %v5071 = vsel %vm232, %v5024, 0
      %v5074 = vsel %vm232, %v5025, 0
      %v5077 = vsel %vm648, %v5027, 0
      %5079 = vmatprep.subr.bf16.mxu0 0
      %5080 = vmatpush1.bf16.msra.mxu0 %v5077
      %5081 = vmatprep.subr.bf16.mxu0 0
      %5082 = vmatpush1.bf16.msra.mxu0 0
      %5083 = vmatprep.subr.bf16.mxu0 0
      %5084 = vmatpush1.bf16.msra.mxu0 0
      %5085 = vmatprep.subr.bf16.mxu0 0
      %5086 = vmatpush1.bf16.msra.mxu0 0
      %5087 = vmatprep.subr.bf16.mxu0 0
      %5088 = vmatpush1.bf16.msra.mxu0 0
      %5089 = vmatprep.subr.bf16.mxu0 0
      %5090 = vmatpush1.bf16.msra.mxu0 0
      %5091 = vmatprep.subr.bf16.mxu0 0
      %5092 = vmatpush1.bf16.msra.mxu0 0
      %5093 = vmatprep.subr.bf16.mxu0 0
      %5094 = vmatpush1.bf16.msra.mxu0 0
      %5095 = vmatprep.subr.bf16.mxu0 0
      %5096 = vmatpush1.bf16.msra.mxu0 0
      %5097 = vmatprep.subr.bf16.mxu0 0
      %5098 = vmatpush1.bf16.msra.mxu0 0
      %5099 = vmatprep.subr.bf16.mxu0 0
      %5100 = vmatpush1.bf16.msra.mxu0 0
      %5101 = vmatprep.subr.bf16.mxu0 0
      %5102 = vmatpush1.bf16.msra.mxu0 0
      %5103 = vmatprep.subr.bf16.mxu0 0
      %5104 = vmatpush1.bf16.msra.mxu0 0
      %5105 = vmatprep.subr.bf16.mxu0 0
      %5106 = vmatpush1.bf16.msra.mxu0 0
      %5107 = vmatprep.subr.bf16.mxu0 0
      %5108 = vmatpush1.bf16.msra.mxu0 0
      %5109 = vmatprep.subr.bf16.mxu0 0
      %5110 = vmatpush1.bf16.msra.mxu0 0
      %5111 = vmatprep.mubr.bf16.mxu0 0
      %5112 = vmatmul.mubr.bf16.gmra.mrb[0].mxu0 %v5029
      %v5113 = vpop.f32.mrb[0].mxu0
      %v5114 = vadd.f32 0.0, %v5113
      %v5115 = vpop.f32.mrb[0].mxu0
      %v5116 = vpop.f32.mrb[0].mxu0
      %v5117 = vadd.f32 0.0, %v5116
      %v5118 = vpop.f32.mrb[0].mxu0
      %5119 = vmatprep.mubr.bf16.mxu0 0
      %5120 = vmatmul.mubr.bf16.gmra.mrb[0].mxu0 %v5032
      %v5121 = vpop.f32.mrb[0].mxu0
      %v5122 = vadd.f32 0.0, %v5121
      %v5123 = vpop.f32.mrb[0].mxu0
      %v5124 = vpop.f32.mrb[0].mxu0
      %v5125 = vadd.f32 0.0, %v5124
      %v5126 = vpop.f32.mrb[0].mxu0
      %5127 = vmatprep.mubr.bf16.mxu0 0
      %5128 = vmatmul.mubr.bf16.gmra.mrb[0].mxu0 %v5035
      %v5129 = vpop.f32.mrb[0].mxu0
      %v5130 = vadd.f32 0.0, %v5129
      %v5131 = vpop.f32.mrb[0].mxu0
      %v5132 = vpop.f32.mrb[0].mxu0
      %v5133 = vadd.f32 0.0, %v5132
      %v5134 = vpop.f32.mrb[0].mxu0
      %5135 = vmatprep.mubr.bf16.mxu0 0
      %5136 = vmatmul.mubr.bf16.gmra.mrb[0].mxu0 %v5038
      %v5137 = vpop.f32.mrb[0].mxu0
      %v5138 = vadd.f32 0.0, %v5137
      %v5139 = vpop.f32.mrb[0].mxu0
      %v5140 = vpop.f32.mrb[0].mxu0
      %v5141 = vadd.f32 0.0, %v5140
      %v5142 = vpop.f32.mrb[0].mxu0
      %5143 = vmatprep.mubr.bf16.mxu0 0
      %5144 = vmatmul.mubr.bf16.gmra.mrb[0].mxu0 %v5041
      %v5145 = vpop.f32.mrb[0].mxu0
      %v5146 = vadd.f32 0.0, %v5145
      %v5147 = vpop.f32.mrb[0].mxu0
      %v5148 = vpop.f32.mrb[0].mxu0
      %v5149 = vadd.f32 0.0, %v5148
      %v5150 = vpop.f32.mrb[0].mxu0
      %5151 = vmatprep.mubr.bf16.mxu0 0
      %5152 = vmatmul.mubr.bf16.gmra.mrb[0].mxu0 %v5044
      %v5153 = vpop.f32.mrb[0].mxu0
      %v5154 = vadd.f32 0.0, %v5153
      %v5155 = vpop.f32.mrb[0].mxu0
      %v5156 = vpop.f32.mrb[0].mxu0
      %v5157 = vadd.f32 0.0, %v5156
      %v5158 = vpop.f32.mrb[0].mxu0
      %5159 = vmatprep.mubr.bf16.mxu0 0
      %5160 = vmatmul.mubr.bf16.gmra.mrb[0].mxu0 %v5047
      %v5161 = vpop.f32.mrb[0].mxu0
      %v5162 = vadd.f32 0.0, %v5161
      %v5163 = vpop.f32.mrb[0].mxu0
      %v5164 = vpop.f32.mrb[0].mxu0
      %v5165 = vadd.f32 0.0, %v5164
      %v5166 = vpop.f32.mrb[0].mxu0
      %5167 = vmatprep.mubr.bf16.mxu0 0
      %5168 = vmatmul.mubr.bf16.gmra.mrb[0].mxu0 %v5050
      %v5169 = vpop.f32.mrb[0].mxu0
      %v5170 = vadd.f32 0.0, %v5169
      %v5171 = vpop.f32.mrb[0].mxu0
      %v5172 = vpop.f32.mrb[0].mxu0
      %v5173 = vadd.f32 0.0, %v5172
      %v5174 = vpop.f32.mrb[0].mxu0
      %5175 = vmatprep.mubr.bf16.mxu0 0
      %5176 = vmatmul.mubr.bf16.gmra.mrb[0].mxu0 %v5053
      %v5177 = vpop.f32.mrb[0].mxu0
      %v5178 = vadd.f32 0.0, %v5177
      %v5179 = vpop.f32.mrb[0].mxu0
      %v5180 = vpop.f32.mrb[0].mxu0
      %v5181 = vadd.f32 0.0, %v5180
      %v5182 = vpop.f32.mrb[0].mxu0
      %5183 = vmatprep.mubr.bf16.mxu0 0
      %5184 = vmatmul.mubr.bf16.gmra.mrb[0].mxu0 %v5056
      %v5185 = vpop.f32.mrb[0].mxu0
      %v5186 = vadd.f32 0.0, %v5185
      %v5187 = vpop.f32.mrb[0].mxu0
      %v5188 = vpop.f32.mrb[0].mxu0
      %v5189 = vadd.f32 0.0, %v5188
      %v5190 = vpop.f32.mrb[0].mxu0
      %5191 = vmatprep.mubr.bf16.mxu0 0
      %5192 = vmatmul.mubr.bf16.gmra.mrb[0].mxu0 %v5059
      %v5193 = vpop.f32.mrb[0].mxu0
      %v5194 = vadd.f32 0.0, %v5193
      %v5195 = vpop.f32.mrb[0].mxu0
      %v5196 = vpop.f32.mrb[0].mxu0
      %v5197 = vadd.f32 0.0, %v5196
      %v5198 = vpop.f32.mrb[0].mxu0
      %5199 = vmatprep.mubr.bf16.mxu0 0
      %5200 = vmatmul.mubr.bf16.gmra.mrb[0].mxu0 %v5062
      %v5201 = vpop.f32.mrb[0].mxu0
      %v5202 = vadd.f32 0.0, %v5201
      %v5203 = vpop.f32.mrb[0].mxu0
      %v5204 = vpop.f32.mrb[0].mxu0
      %v5205 = vadd.f32 0.0, %v5204
      %v5206 = vpop.f32.mrb[0].mxu0
      %5207 = vmatprep.mubr.bf16.mxu0 0
      %5208 = vmatmul.mubr.bf16.gmra.mrb[0].mxu0 %v5065
      %v5209 = vpop.f32.mrb[0].mxu0
      %v5210 = vadd.f32 0.0, %v5209
      %v5211 = vpop.f32.mrb[0].mxu0
      %v5212 = vpop.f32.mrb[0].mxu0
      %v5213 = vadd.f32 0.0, %v5212
      %v5214 = vpop.f32.mrb[0].mxu0
      %5215 = vmatprep.mubr.bf16.mxu0 0
      %5216 = vmatmul.mubr.bf16.gmra.mrb[0].mxu0 %v5068
      %v5217 = vpop.f32.mrb[0].mxu0
      %v5218 = vadd.f32 0.0, %v5217
      %v5219 = vpop.f32.mrb[0].mxu0
      %v5220 = vpop.f32.mrb[0].mxu0
      %v5221 = vadd.f32 0.0, %v5220
      %v5222 = vpop.f32.mrb[0].mxu0
      %5223 = vmatprep.mubr.bf16.mxu0 0
      %5224 = vmatmul.mubr.bf16.gmra.mrb[0].mxu0 %v5071
      %v5225 = vpop.f32.mrb[0].mxu0
      %v5226 = vadd.f32 0.0, %v5225
      %v5227 = vpop.f32.mrb[0].mxu0
      %v5228 = vpop.f32.mrb[0].mxu0
      %v5229 = vadd.f32 0.0, %v5228
      %v5230 = vpop.f32.mrb[0].mxu0
      %5231 = vmatprep.mubr.bf16.mxu0 0
      %5232 = vmatmul.mubr.bf16.gmra.mrb[0].mxu0 %v5074
      %v5233 = vpop.f32.mrb[0].mxu0
      %v5234 = vadd.f32 0.0, %v5233
      %v5235 = vpop.f32.mrb[0].mxu0
      %v5236 = vpop.f32.mrb[0].mxu0
      %v5237 = vadd.f32 0.0, %v5236
      %v5238 = vpop.f32.mrb[0].mxu0
      %5239 = vdwg.mxu0
      %v5240 = vadd.f32 %v4946, %v5114
      %v5241 = vadd.f32 %v4947, %v5117
      %v5242 = vadd.f32 %v4948, %v5122
      %v5243 = vadd.f32 %v4949, %v5125
      %v5244 = vadd.f32 %v4950, %v5130
      %v5245 = vadd.f32 %v4951, %v5133
      %v5246 = vadd.f32 %v4952, %v5138
      %v5247 = vadd.f32 %v4953, %v5141
      %v5248 = vadd.f32 %v4954, %v5146
      %v5249 = vadd.f32 %v4955, %v5149
      %v5250 = vadd.f32 %v4956, %v5154
      %v5251 = vadd.f32 %v4957, %v5157
      %v5252 = vadd.f32 %v4958, %v5162
      %v5253 = vadd.f32 %v4959, %v5165
      %v5254 = vadd.f32 %v4960, %v5170
      %v5255 = vadd.f32 %v4961, %v5173
      %v5256 = vadd.f32 %v4962, %v5178
      %v5257 = vadd.f32 %v4963, %v5181
      %v5258 = vadd.f32 %v4964, %v5186
      %v5259 = vadd.f32 %v4965, %v5189
      %v5260 = vadd.f32 %v4966, %v5194
      %v5261 = vadd.f32 %v4967, %v5197
      %v5262 = vadd.f32 %v4968, %v5202
      %v5263 = vadd.f32 %v4969, %v5205
      %v5264 = vadd.f32 %v4970, %v5210
      %v5265 = vadd.f32 %v4971, %v5213
      %v5266 = vadd.f32 %v4972, %v5218
      %v5267 = vadd.f32 %v4973, %v5221
      %v5268 = vadd.f32 %v4974, %v5226
      %v5269 = vadd.f32 %v4975, %v5229
      %v5270 = vadd.f32 %v4976, %v5234
      %v5271 = vadd.f32 %v4977, %v5237
      %v5272 = vld [vmem:[%s2201 + $0x1] sm:$0xff]
      %v5273 = vld [vmem:[%s2201 + $0x9] sm:$0xff]
      %v5274 = vld [vmem:[%s2201 + $0x19] sm:$0xff]
      %v5275 = vld [vmem:[%s2201 + $0x21] sm:$0xff]
      %v5276 = vld [vmem:[%s2201 + $0x31] sm:$0xff]
      %v5277 = vld [vmem:[%s2201 + $0x39] sm:$0xff]
      %v5278 = vld [vmem:[%s2201 + $0x49] sm:$0xff]
      %v5279 = vld [vmem:[%s2201 + $0x51] sm:$0xff]
      %v5280 = vld [vmem:[%s2201 + $0x61] sm:$0xff]
      %v5281 = vld [vmem:[%s2201 + $0x69] sm:$0xff]
      %v5282 = vld [vmem:[%s2201 + $0x79] sm:$0xff]
      %v5283 = vld [vmem:[%s2201 + $0x81] sm:$0xff]
      %v5284 = vld [vmem:[%s2201 + $0x91] sm:$0xff]
      %v5285 = vld [vmem:[%s2201 + $0x99] sm:$0xff]
      %v5286 = vld [vmem:[%s2201 + $0xa9] sm:$0xff]
      %v5287 = vld [vmem:[%s2201 + $0xb1] sm:$0xff]
      %v5288 = vld [vmem:[%s2201 + $0xc1] sm:$0xff]
      %v5289 = vld [vmem:[%s2201 + $0xc9] sm:$0xff]
      %v5290 = vld [vmem:[%s2201 + $0xd9] sm:$0xff]
      %v5291 = vld [vmem:[%s2201 + $0xe1] sm:$0xff]
      %v5292 = vld [vmem:[%s2201 + $0xf1] sm:$0xff]
      %v5293 = vld [vmem:[%s2201 + $0xf9] sm:$0xff]
      %v5294 = vld [vmem:[%s2201 + $0x109] sm:$0xff]
      %v5295 = vld [vmem:[%s2201 + $0x111] sm:$0xff]
      %v5296 = vld [vmem:[%s2201 + $0x121] sm:$0xff]
      %v5297 = vld [vmem:[%s2201 + $0x129] sm:$0xff]
      %v5298 = vld [vmem:[%s2201 + $0x139] sm:$0xff]
      %v5299 = vld [vmem:[%s2201 + $0x141] sm:$0xff]
      %v5300 = vld [vmem:[%s2201 + $0x151] sm:$0xff]
      %v5301 = vld [vmem:[%s2201 + $0x159] sm:$0xff]
      %v5302 = vld [vmem:[%s2201 + $0x169] sm:$0xff]
      %v5303 = vld [vmem:[%s2201 + $0x171] sm:$0xff]
      %v5304 = vpack.c.bf16 %v5273, %v5272
      %v5305 = vpack.c.bf16 %v5275, %v5274
      %v5306 = vpack.c.bf16 %v5277, %v5276
      %v5307 = vpack.c.bf16 %v5279, %v5278
      %v5308 = vpack.c.bf16 %v5281, %v5280
      %v5309 = vpack.c.bf16 %v5283, %v5282
      %v5310 = vpack.c.bf16 %v5285, %v5284
      %v5311 = vpack.c.bf16 %v5287, %v5286
      %v5312 = vpack.c.bf16 %v5289, %v5288
      %v5313 = vpack.c.bf16 %v5291, %v5290
      %v5314 = vpack.c.bf16 %v5293, %v5292
      %v5315 = vpack.c.bf16 %v5295, %v5294
      %v5316 = vpack.c.bf16 %v5297, %v5296
      %v5317 = vpack.c.bf16 %v5299, %v5298
      %v5318 = vpack.c.bf16 %v5301, %v5300
      %v5319 = vpack.c.bf16 %v5303, %v5302
      %s5320 = scalar_lea.vmem %s4, 14
      %v5321 = vld [vmem:[%s5320] sm:$0x3]
      %v5323 = vsel %vm232, %v5304, 0
      %v5326 = vsel %vm232, %v5305, 0
      %v5329 = vsel %vm232, %v5306, 0
      %v5332 = vsel %vm232, %v5307, 0
      %v5335 = vsel %vm232, %v5308, 0
      %v5338 = vsel %vm232, %v5309, 0
      %v5341 = vsel %vm232, %v5310, 0
      %v5344 = vsel %vm232, %v5311, 0
      %v5347 = vsel %vm232, %v5312, 0
      %v5350 = vsel %vm232, %v5313, 0
      %v5353 = vsel %vm232, %v5314, 0
      %v5356 = vsel %vm232, %v5315, 0
      %v5359 = vsel %vm232, %v5316, 0
      %v5362 = vsel %vm232, %v5317, 0
      %v5365 = vsel %vm232, %v5318, 0
      %v5368 = vsel %vm232, %v5319, 0
      %v5371 = vsel %vm648, %v5321, 0
      %5373 = vmatprep.subr.bf16.mxu0 0
      %5374 = vmatpush1.bf16.msra.mxu0 %v5371
      %5375 = vmatprep.subr.bf16.mxu0 0
      %5376 = vmatpush1.bf16.msra.mxu0 0
      %5377 = vmatprep.subr.bf16.mxu0 0
      %5378 = vmatpush1.bf16.msra.mxu0 0
      %5379 = vmatprep.subr.bf16.mxu0 0
      %5380 = vmatpush1.bf16.msra.mxu0 0
      %5381 = vmatprep.subr.bf16.mxu0 0
      %5382 = vmatpush1.bf16.msra.mxu0 0
      %5383 = vmatprep.subr.bf16.mxu0 0
      %5384 = vmatpush1.bf16.msra.mxu0 0
      %5385 = vmatprep.subr.bf16.mxu0 0
      %5386 = vmatpush1.bf16.msra.mxu0 0
      %5387 = vmatprep.subr.bf16.mxu0 0
      %5388 = vmatpush1.bf16.msra.mxu0 0
      %5389 = vmatprep.subr.bf16.mxu0 0
      %5390 = vmatpush1.bf16.msra.mxu0 0
      %5391 = vmatprep.subr.bf16.mxu0 0
      %5392 = vmatpush1.bf16.msra.mxu0 0
      %5393 = vmatprep.subr.bf16.mxu0 0
      %5394 = vmatpush1.bf16.msra.mxu0 0
      %5395 = vmatprep.subr.bf16.mxu0 0
      %5396 = vmatpush1.bf16.msra.mxu0 0
      %5397 = vmatprep.subr.bf16.mxu0 0
      %5398 = vmatpush1.bf16.msra.mxu0 0
      %5399 = vmatprep.subr.bf16.mxu0 0
      %5400 = vmatpush1.bf16.msra.mxu0 0
      %5401 = vmatprep.subr.bf16.mxu0 0
      %5402 = vmatpush1.bf16.msra.mxu0 0
      %5403 = vmatprep.subr.bf16.mxu0 0
      %5404 = vmatpush1.bf16.msra.mxu0 0
      %5405 = vmatprep.mubr.bf16.mxu0 0
      %5406 = vmatmul.mubr.bf16.gmra.mrb[0].mxu0 %v5323
      %v5407 = vpop.f32.mrb[0].mxu0
      %v5408 = vadd.f32 0.0, %v5407
      %v5409 = vpop.f32.mrb[0].mxu0
      %v5410 = vpop.f32.mrb[0].mxu0
      %v5411 = vadd.f32 0.0, %v5410
      %v5412 = vpop.f32.mrb[0].mxu0
      %5413 = vmatprep.mubr.bf16.mxu0 0
      %5414 = vmatmul.mubr.bf16.gmra.mrb[0].mxu0 %v5326
      %v5415 = vpop.f32.mrb[0].mxu0
      %v5416 = vadd.f32 0.0, %v5415
      %v5417 = vpop.f32.mrb[0].mxu0
      %v5418 = vpop.f32.mrb[0].mxu0
      %v5419 = vadd.f32 0.0, %v5418
      %v5420 = vpop.f32.mrb[0].mxu0
      %5421 = vmatprep.mubr.bf16.mxu0 0
      %5422 = vmatmul.mubr.bf16.gmra.mrb[0].mxu0 %v5329
      %v5423 = vpop.f32.mrb[0].mxu0
      %v5424 = vadd.f32 0.0, %v5423
      %v5425 = vpop.f32.mrb[0].mxu0
      %v5426 = vpop.f32.mrb[0].mxu0
      %v5427 = vadd.f32 0.0, %v5426
      %v5428 = vpop.f32.mrb[0].mxu0
      %5429 = vmatprep.mubr.bf16.mxu0 0
      %5430 = vmatmul.mubr.bf16.gmra.mrb[0].mxu0 %v5332
      %v5431 = vpop.f32.mrb[0].mxu0
      %v5432 = vadd.f32 0.0, %v5431
      %v5433 = vpop.f32.mrb[0].mxu0
      %v5434 = vpop.f32.mrb[0].mxu0
      %v5435 = vadd.f32 0.0, %v5434
      %v5436 = vpop.f32.mrb[0].mxu0
      %5437 = vmatprep.mubr.bf16.mxu0 0
      %5438 = vmatmul.mubr.bf16.gmra.mrb[0].mxu0 %v5335
      %v5439 = vpop.f32.mrb[0].mxu0
      %v5440 = vadd.f32 0.0, %v5439
      %v5441 = vpop.f32.mrb[0].mxu0
      %v5442 = vpop.f32.mrb[0].mxu0
      %v5443 = vadd.f32 0.0, %v5442
      %v5444 = vpop.f32.mrb[0].mxu0
      %5445 = vmatprep.mubr.bf16.mxu0 0
      %5446 = vmatmul.mubr.bf16.gmra.mrb[0].mxu0 %v5338
      %v5447 = vpop.f32.mrb[0].mxu0
      %v5448 = vadd.f32 0.0, %v5447
      %v5449 = vpop.f32.mrb[0].mxu0
      %v5450 = vpop.f32.mrb[0].mxu0
      %v5451 = vadd.f32 0.0, %v5450
      %v5452 = vpop.f32.mrb[0].mxu0
      %5453 = vmatprep.mubr.bf16.mxu0 0
      %5454 = vmatmul.mubr.bf16.gmra.mrb[0].mxu0 %v5341
      %v5455 = vpop.f32.mrb[0].mxu0
      %v5456 = vadd.f32 0.0, %v5455
      %v5457 = vpop.f32.mrb[0].mxu0
      %v5458 = vpop.f32.mrb[0].mxu0
      %v5459 = vadd.f32 0.0, %v5458
      %v5460 = vpop.f32.mrb[0].mxu0
      %5461 = vmatprep.mubr.bf16.mxu0 0
      %5462 = vmatmul.mubr.bf16.gmra.mrb[0].mxu0 %v5344
      %v5463 = vpop.f32.mrb[0].mxu0
      %v5464 = vadd.f32 0.0, %v5463
      %v5465 = vpop.f32.mrb[0].mxu0
      %v5466 = vpop.f32.mrb[0].mxu0
      %v5467 = vadd.f32 0.0, %v5466
      %v5468 = vpop.f32.mrb[0].mxu0
      %5469 = vmatprep.mubr.bf16.mxu0 0
      %5470 = vmatmul.mubr.bf16.gmra.mrb[0].mxu0 %v5347
      %v5471 = vpop.f32.mrb[0].mxu0
      %v5472 = vadd.f32 0.0, %v5471
      %v5473 = vpop.f32.mrb[0].mxu0
      %v5474 = vpop.f32.mrb[0].mxu0
      %v5475 = vadd.f32 0.0, %v5474
      %v5476 = vpop.f32.mrb[0].mxu0
      %5477 = vmatprep.mubr.bf16.mxu0 0
      %5478 = vmatmul.mubr.bf16.gmra.mrb[0].mxu0 %v5350
      %v5479 = vpop.f32.mrb[0].mxu0
      %v5480 = vadd.f32 0.0, %v5479
      %v5481 = vpop.f32.mrb[0].mxu0
      %v5482 = vpop.f32.mrb[0].mxu0
      %v5483 = vadd.f32 0.0, %v5482
      %v5484 = vpop.f32.mrb[0].mxu0
      %5485 = vmatprep.mubr.bf16.mxu0 0
      %5486 = vmatmul.mubr.bf16.gmra.mrb[0].mxu0 %v5353
      %v5487 = vpop.f32.mrb[0].mxu0
      %v5488 = vadd.f32 0.0, %v5487
      %v5489 = vpop.f32.mrb[0].mxu0
      %v5490 = vpop.f32.mrb[0].mxu0
      %v5491 = vadd.f32 0.0, %v5490
      %v5492 = vpop.f32.mrb[0].mxu0
      %5493 = vmatprep.mubr.bf16.mxu0 0
      %5494 = vmatmul.mubr.bf16.gmra.mrb[0].mxu0 %v5356
      %v5495 = vpop.f32.mrb[0].mxu0
      %v5496 = vadd.f32 0.0, %v5495
      %v5497 = vpop.f32.mrb[0].mxu0
      %v5498 = vpop.f32.mrb[0].mxu0
      %v5499 = vadd.f32 0.0, %v5498
      %v5500 = vpop.f32.mrb[0].mxu0
      %5501 = vmatprep.mubr.bf16.mxu0 0
      %5502 = vmatmul.mubr.bf16.gmra.mrb[0].mxu0 %v5359
      %v5503 = vpop.f32.mrb[0].mxu0
      %v5504 = vadd.f32 0.0, %v5503
      %v5505 = vpop.f32.mrb[0].mxu0
      %v5506 = vpop.f32.mrb[0].mxu0
      %v5507 = vadd.f32 0.0, %v5506
      %v5508 = vpop.f32.mrb[0].mxu0
      %5509 = vmatprep.mubr.bf16.mxu0 0
      %5510 = vmatmul.mubr.bf16.gmra.mrb[0].mxu0 %v5362
      %v5511 = vpop.f32.mrb[0].mxu0
      %v5512 = vadd.f32 0.0, %v5511
      %v5513 = vpop.f32.mrb[0].mxu0
      %v5514 = vpop.f32.mrb[0].mxu0
      %v5515 = vadd.f32 0.0, %v5514
      %v5516 = vpop.f32.mrb[0].mxu0
      %5517 = vmatprep.mubr.bf16.mxu0 0
      %5518 = vmatmul.mubr.bf16.gmra.mrb[0].mxu0 %v5365
      %v5519 = vpop.f32.mrb[0].mxu0
      %v5520 = vadd.f32 0.0, %v5519
      %v5521 = vpop.f32.mrb[0].mxu0
      %v5522 = vpop.f32.mrb[0].mxu0
      %v5523 = vadd.f32 0.0, %v5522
      %v5524 = vpop.f32.mrb[0].mxu0
      %5525 = vmatprep.mubr.bf16.mxu0 0
      %5526 = vmatmul.mubr.bf16.gmra.mrb[0].mxu0 %v5368
      %v5527 = vpop.f32.mrb[0].mxu0
      %v5528 = vadd.f32 0.0, %v5527
      %v5529 = vpop.f32.mrb[0].mxu0
      %v5530 = vpop.f32.mrb[0].mxu0
      %v5531 = vadd.f32 0.0, %v5530
      %v5532 = vpop.f32.mrb[0].mxu0
      %5533 = vdwg.mxu0
      %v5534 = vadd.f32 %v5240, %v5408
      %v5535 = vadd.f32 %v5241, %v5411
      %v5536 = vadd.f32 %v5242, %v5416
      %v5537 = vadd.f32 %v5243, %v5419
      %v5538 = vadd.f32 %v5244, %v5424
      %v5539 = vadd.f32 %v5245, %v5427
      %v5540 = vadd.f32 %v5246, %v5432
      %v5541 = vadd.f32 %v5247, %v5435
      %v5542 = vadd.f32 %v5248, %v5440
      %v5543 = vadd.f32 %v5249, %v5443
      %v5544 = vadd.f32 %v5250, %v5448
      %v5545 = vadd.f32 %v5251, %v5451
      %v5546 = vadd.f32 %v5252, %v5456
      %v5547 = vadd.f32 %v5253, %v5459
      %v5548 = vadd.f32 %v5254, %v5464
      %v5549 = vadd.f32 %v5255, %v5467
      %v5550 = vadd.f32 %v5256, %v5472
      %v5551 = vadd.f32 %v5257, %v5475
      %v5552 = vadd.f32 %v5258, %v5480
      %v5553 = vadd.f32 %v5259, %v5483
      %v5554 = vadd.f32 %v5260, %v5488
      %v5555 = vadd.f32 %v5261, %v5491
      %v5556 = vadd.f32 %v5262, %v5496
      %v5557 = vadd.f32 %v5263, %v5499
      %v5558 = vadd.f32 %v5264, %v5504
      %v5559 = vadd.f32 %v5265, %v5507
      %v5560 = vadd.f32 %v5266, %v5512
      %v5561 = vadd.f32 %v5267, %v5515
      %v5562 = vadd.f32 %v5268, %v5520
      %v5563 = vadd.f32 %v5269, %v5523
      %v5564 = vadd.f32 %v5270, %v5528
      %v5565 = vadd.f32 %v5271, %v5531
      %v5566 = vld [vmem:[%s2201 + $0x2] sm:$0xff]
      %v5567 = vld [vmem:[%s2201 + $0xa] sm:$0xff]
      %v5568 = vld [vmem:[%s2201 + $0x1a] sm:$0xff]
      %v5569 = vld [vmem:[%s2201 + $0x22] sm:$0xff]
      %v5570 = vld [vmem:[%s2201 + $0x32] sm:$0xff]
      %v5571 = vld [vmem:[%s2201 + $0x3a] sm:$0xff]
      %v5572 = vld [vmem:[%s2201 + $0x4a] sm:$0xff]
      %v5573 = vld [vmem:[%s2201 + $0x52] sm:$0xff]
      %v5574 = vld [vmem:[%s2201 + $0x62] sm:$0xff]
      %v5575 = vld [vmem:[%s2201 + $0x6a] sm:$0xff]
      %v5576 = vld [vmem:[%s2201 + $0x7a] sm:$0xff]
      %v5577 = vld [vmem:[%s2201 + $0x82] sm:$0xff]
      %v5578 = vld [vmem:[%s2201 + $0x92] sm:$0xff]
      %v5579 = vld [vmem:[%s2201 + $0x9a] sm:$0xff]
      %v5580 = vld [vmem:[%s2201 + $0xaa] sm:$0xff]
      %v5581 = vld [vmem:[%s2201 + $0xb2] sm:$0xff]
      %v5582 = vld [vmem:[%s2201 + $0xc2] sm:$0xff]
      %v5583 = vld [vmem:[%s2201 + $0xca] sm:$0xff]
      %v5584 = vld [vmem:[%s2201 + $0xda] sm:$0xff]
      %v5585 = vld [vmem:[%s2201 + $0xe2] sm:$0xff]
      %v5586 = vld [vmem:[%s2201 + $0xf2] sm:$0xff]
      %v5587 = vld [vmem:[%s2201 + $0xfa] sm:$0xff]
      %v5588 = vld [vmem:[%s2201 + $0x10a] sm:$0xff]
      %v5589 = vld [vmem:[%s2201 + $0x112] sm:$0xff]
      %v5590 = vld [vmem:[%s2201 + $0x122] sm:$0xff]
      %v5591 = vld [vmem:[%s2201 + $0x12a] sm:$0xff]
      %v5592 = vld [vmem:[%s2201 + $0x13a] sm:$0xff]
      %v5593 = vld [vmem:[%s2201 + $0x142] sm:$0xff]
      %v5594 = vld [vmem:[%s2201 + $0x152] sm:$0xff]
      %v5595 = vld [vmem:[%s2201 + $0x15a] sm:$0xff]
      %v5596 = vld [vmem:[%s2201 + $0x16a] sm:$0xff]
      %v5597 = vld [vmem:[%s2201 + $0x172] sm:$0xff]
      %v5598 = vpack.c.bf16 %v5567, %v5566
      %v5599 = vpack.c.bf16 %v5569, %v5568
      %v5600 = vpack.c.bf16 %v5571, %v5570
      %v5601 = vpack.c.bf16 %v5573, %v5572
      %v5602 = vpack.c.bf16 %v5575, %v5574
      %v5603 = vpack.c.bf16 %v5577, %v5576
      %v5604 = vpack.c.bf16 %v5579, %v5578
      %v5605 = vpack.c.bf16 %v5581, %v5580
      %v5606 = vpack.c.bf16 %v5583, %v5582
      %v5607 = vpack.c.bf16 %v5585, %v5584
      %v5608 = vpack.c.bf16 %v5587, %v5586
      %v5609 = vpack.c.bf16 %v5589, %v5588
      %v5610 = vpack.c.bf16 %v5591, %v5590
      %v5611 = vpack.c.bf16 %v5593, %v5592
      %v5612 = vpack.c.bf16 %v5595, %v5594
      %v5613 = vpack.c.bf16 %v5597, %v5596
      %s5614 = scalar_lea.vmem %s4, 16
      %v5615 = vld [vmem:[%s5614] sm:$0x3]
      %v5617 = vsel %vm232, %v5598, 0
      %v5620 = vsel %vm232, %v5599, 0
      %v5623 = vsel %vm232, %v5600, 0
      %v5626 = vsel %vm232, %v5601, 0
      %v5629 = vsel %vm232, %v5602, 0
      %v5632 = vsel %vm232, %v5603, 0
      %v5635 = vsel %vm232, %v5604, 0
      %v5638 = vsel %vm232, %v5605, 0
      %v5641 = vsel %vm232, %v5606, 0
      %v5644 = vsel %vm232, %v5607, 0
      %v5647 = vsel %vm232, %v5608, 0
      %v5650 = vsel %vm232, %v5609, 0
      %v5653 = vsel %vm232, %v5610, 0
      %v5656 = vsel %vm232, %v5611, 0
      %v5659 = vsel %vm232, %v5612, 0
      %v5662 = vsel %vm232, %v5613, 0
      %v5665 = vsel %vm648, %v5615, 0
      %5667 = vmatprep.subr.bf16.mxu0 0
      %5668 = vmatpush1.bf16.msra.mxu0 %v5665
      %5669 = vmatprep.subr.bf16.mxu0 0
      %5670 = vmatpush1.bf16.msra.mxu0 0
      %5671 = vmatprep.subr.bf16.mxu0 0
      %5672 = vmatpush1.bf16.msra.mxu0 0
      %5673 = vmatprep.subr.bf16.mxu0 0
      %5674 = vmatpush1.bf16.msra.mxu0 0
      %5675 = vmatprep.subr.bf16.mxu0 0
      %5676 = vmatpush1.bf16.msra.mxu0 0
      %5677 = vmatprep.subr.bf16.mxu0 0
      %5678 = vmatpush1.bf16.msra.mxu0 0
      %5679 = vmatprep.subr.bf16.mxu0 0
      %5680 = vmatpush1.bf16.msra.mxu0 0
      %5681 = vmatprep.subr.bf16.mxu0 0
      %5682 = vmatpush1.bf16.msra.mxu0 0
      %5683 = vmatprep.subr.bf16.mxu0 0
      %5684 = vmatpush1.bf16.msra.mxu0 0
      %5685 = vmatprep.subr.bf16.mxu0 0
      %5686 = vmatpush1.bf16.msra.mxu0 0
      %5687 = vmatprep.subr.bf16.mxu0 0
      %5688 = vmatpush1.bf16.msra.mxu0 0
      %5689 = vmatprep.subr.bf16.mxu0 0
      %5690 = vmatpush1.bf16.msra.mxu0 0
      %5691 = vmatprep.subr.bf16.mxu0 0
      %5692 = vmatpush1.bf16.msra.mxu0 0
      %5693 = vmatprep.subr.bf16.mxu0 0
      %5694 = vmatpush1.bf16.msra.mxu0 0
      %5695 = vmatprep.subr.bf16.mxu0 0
      %5696 = vmatpush1.bf16.msra.mxu0 0
      %5697 = vmatprep.subr.bf16.mxu0 0
      %5698 = vmatpush1.bf16.msra.mxu0 0
      %5699 = vmatprep.mubr.bf16.mxu0 0
      %5700 = vmatmul.mubr.bf16.gmra.mrb[0].mxu0 %v5617
      %v5701 = vpop.f32.mrb[0].mxu0
      %v5702 = vadd.f32 0.0, %v5701
      %v5703 = vpop.f32.mrb[0].mxu0
      %v5704 = vpop.f32.mrb[0].mxu0
      %v5705 = vadd.f32 0.0, %v5704
      %v5706 = vpop.f32.mrb[0].mxu0
      %5707 = vmatprep.mubr.bf16.mxu0 0
      %5708 = vmatmul.mubr.bf16.gmra.mrb[0].mxu0 %v5620
      %v5709 = vpop.f32.mrb[0].mxu0
      %v5710 = vadd.f32 0.0, %v5709
      %v5711 = vpop.f32.mrb[0].mxu0
      %v5712 = vpop.f32.mrb[0].mxu0
      %v5713 = vadd.f32 0.0, %v5712
      %v5714 = vpop.f32.mrb[0].mxu0
      %5715 = vmatprep.mubr.bf16.mxu0 0
      %5716 = vmatmul.mubr.bf16.gmra.mrb[0].mxu0 %v5623
      %v5717 = vpop.f32.mrb[0].mxu0
      %v5718 = vadd.f32 0.0, %v5717
      %v5719 = vpop.f32.mrb[0].mxu0
      %v5720 = vpop.f32.mrb[0].mxu0
      %v5721 = vadd.f32 0.0, %v5720
      %v5722 = vpop.f32.mrb[0].mxu0
      %5723 = vmatprep.mubr.bf16.mxu0 0
      %5724 = vmatmul.mubr.bf16.gmra.mrb[0].mxu0 %v5626
      %v5725 = vpop.f32.mrb[0].mxu0
      %v5726 = vadd.f32 0.0, %v5725
      %v5727 = vpop.f32.mrb[0].mxu0
      %v5728 = vpop.f32.mrb[0].mxu0
      %v5729 = vadd.f32 0.0, %v5728
      %v5730 = vpop.f32.mrb[0].mxu0
      %5731 = vmatprep.mubr.bf16.mxu0 0
      %5732 = vmatmul.mubr.bf16.gmra.mrb[0].mxu0 %v5629
      %v5733 = vpop.f32.mrb[0].mxu0
      %v5734 = vadd.f32 0.0, %v5733
      %v5735 = vpop.f32.mrb[0].mxu0
      %v5736 = vpop.f32.mrb[0].mxu0
      %v5737 = vadd.f32 0.0, %v5736
      %v5738 = vpop.f32.mrb[0].mxu0
      %5739 = vmatprep.mubr.bf16.mxu0 0
      %5740 = vmatmul.mubr.bf16.gmra.mrb[0].mxu0 %v5632
      %v5741 = vpop.f32.mrb[0].mxu0
      %v5742 = vadd.f32 0.0, %v5741
      %v5743 = vpop.f32.mrb[0].mxu0
      %v5744 = vpop.f32.mrb[0].mxu0
      %v5745 = vadd.f32 0.0, %v5744
      %v5746 = vpop.f32.mrb[0].mxu0
      %5747 = vmatprep.mubr.bf16.mxu0 0
      %5748 = vmatmul.mubr.bf16.gmra.mrb[0].mxu0 %v5635
      %v5749 = vpop.f32.mrb[0].mxu0
      %v5750 = vadd.f32 0.0, %v5749
      %v5751 = vpop.f32.mrb[0].mxu0
      %v5752 = vpop.f32.mrb[0].mxu0
      %v5753 = vadd.f32 0.0, %v5752
      %v5754 = vpop.f32.mrb[0].mxu0
      %5755 = vmatprep.mubr.bf16.mxu0 0
      %5756 = vmatmul.mubr.bf16.gmra.mrb[0].mxu0 %v5638
      %v5757 = vpop.f32.mrb[0].mxu0
      %v5758 = vadd.f32 0.0, %v5757
      %v5759 = vpop.f32.mrb[0].mxu0
      %v5760 = vpop.f32.mrb[0].mxu0
      %v5761 = vadd.f32 0.0, %v5760
      %v5762 = vpop.f32.mrb[0].mxu0
      %5763 = vmatprep.mubr.bf16.mxu0 0
      %5764 = vmatmul.mubr.bf16.gmra.mrb[0].mxu0 %v5641
      %v5765 = vpop.f32.mrb[0].mxu0
      %v5766 = vadd.f32 0.0, %v5765
      %v5767 = vpop.f32.mrb[0].mxu0
      %v5768 = vpop.f32.mrb[0].mxu0
      %v5769 = vadd.f32 0.0, %v5768
      %v5770 = vpop.f32.mrb[0].mxu0
      %5771 = vmatprep.mubr.bf16.mxu0 0
      %5772 = vmatmul.mubr.bf16.gmra.mrb[0].mxu0 %v5644
      %v5773 = vpop.f32.mrb[0].mxu0
      %v5774 = vadd.f32 0.0, %v5773
      %v5775 = vpop.f32.mrb[0].mxu0
      %v5776 = vpop.f32.mrb[0].mxu0
      %v5777 = vadd.f32 0.0, %v5776
      %v5778 = vpop.f32.mrb[0].mxu0
      %5779 = vmatprep.mubr.bf16.mxu0 0
      %5780 = vmatmul.mubr.bf16.gmra.mrb[0].mxu0 %v5647
      %v5781 = vpop.f32.mrb[0].mxu0
      %v5782 = vadd.f32 0.0, %v5781
      %v5783 = vpop.f32.mrb[0].mxu0
      %v5784 = vpop.f32.mrb[0].mxu0
      %v5785 = vadd.f32 0.0, %v5784
      %v5786 = vpop.f32.mrb[0].mxu0
      %5787 = vmatprep.mubr.bf16.mxu0 0
      %5788 = vmatmul.mubr.bf16.gmra.mrb[0].mxu0 %v5650
      %v5789 = vpop.f32.mrb[0].mxu0
      %v5790 = vadd.f32 0.0, %v5789
      %v5791 = vpop.f32.mrb[0].mxu0
      %v5792 = vpop.f32.mrb[0].mxu0
      %v5793 = vadd.f32 0.0, %v5792
      %v5794 = vpop.f32.mrb[0].mxu0
      %5795 = vmatprep.mubr.bf16.mxu0 0
      %5796 = vmatmul.mubr.bf16.gmra.mrb[0].mxu0 %v5653
      %v5797 = vpop.f32.mrb[0].mxu0
      %v5798 = vadd.f32 0.0, %v5797
      %v5799 = vpop.f32.mrb[0].mxu0
      %v5800 = vpop.f32.mrb[0].mxu0
      %v5801 = vadd.f32 0.0, %v5800
      %v5802 = vpop.f32.mrb[0].mxu0
      %5803 = vmatprep.mubr.bf16.mxu0 0
      %5804 = vmatmul.mubr.bf16.gmra.mrb[0].mxu0 %v5656
      %v5805 = vpop.f32.mrb[0].mxu0
      %v5806 = vadd.f32 0.0, %v5805
      %v5807 = vpop.f32.mrb[0].mxu0
      %v5808 = vpop.f32.mrb[0].mxu0
      %v5809 = vadd.f32 0.0, %v5808
      %v5810 = vpop.f32.mrb[0].mxu0
      %5811 = vmatprep.mubr.bf16.mxu0 0
      %5812 = vmatmul.mubr.bf16.gmra.mrb[0].mxu0 %v5659
      %v5813 = vpop.f32.mrb[0].mxu0
      %v5814 = vadd.f32 0.0, %v5813
      %v5815 = vpop.f32.mrb[0].mxu0
      %v5816 = vpop.f32.mrb[0].mxu0
      %v5817 = vadd.f32 0.0, %v5816
      %v5818 = vpop.f32.mrb[0].mxu0
      %5819 = vmatprep.mubr.bf16.mxu0 0
      %5820 = vmatmul.mubr.bf16.gmra.mrb[0].mxu0 %v5662
      %v5821 = vpop.f32.mrb[0].mxu0
      %v5822 = vadd.f32 0.0, %v5821
      %v5823 = vpop.f32.mrb[0].mxu0
      %v5824 = vpop.f32.mrb[0].mxu0
      %v5825 = vadd.f32 0.0, %v5824
      %v5826 = vpop.f32.mrb[0].mxu0
      %5827 = vdwg.mxu0
      %v5828 = vadd.f32 %v5534, %v5702
      %v5829 = vadd.f32 %v5535, %v5705
      %v5830 = vadd.f32 %v5536, %v5710
      %v5831 = vadd.f32 %v5537, %v5713
      %v5832 = vadd.f32 %v5538, %v5718
      %v5833 = vadd.f32 %v5539, %v5721
      %v5834 = vadd.f32 %v5540, %v5726
      %v5835 = vadd.f32 %v5541, %v5729
      %v5836 = vadd.f32 %v5542, %v5734
      %v5837 = vadd.f32 %v5543, %v5737
      %v5838 = vadd.f32 %v5544, %v5742
      %v5839 = vadd.f32 %v5545, %v5745
      %v5840 = vadd.f32 %v5546, %v5750
      %v5841 = vadd.f32 %v5547, %v5753
      %v5842 = vadd.f32 %v5548, %v5758
      %v5843 = vadd.f32 %v5549, %v5761
      %v5844 = vadd.f32 %v5550, %v5766
      %v5845 = vadd.f32 %v5551, %v5769
      %v5846 = vadd.f32 %v5552, %v5774
      %v5847 = vadd.f32 %v5553, %v5777
      %v5848 = vadd.f32 %v5554, %v5782
      %v5849 = vadd.f32 %v5555, %v5785
      %v5850 = vadd.f32 %v5556, %v5790
      %v5851 = vadd.f32 %v5557, %v5793
      %v5852 = vadd.f32 %v5558, %v5798
      %v5853 = vadd.f32 %v5559, %v5801
      %v5854 = vadd.f32 %v5560, %v5806
      %v5855 = vadd.f32 %v5561, %v5809
      %v5856 = vadd.f32 %v5562, %v5814
      %v5857 = vadd.f32 %v5563, %v5817
      %v5858 = vadd.f32 %v5564, %v5822
      %v5859 = vadd.f32 %v5565, %v5825
      %v5860 = vld [vmem:[%s221] sm:$0xff]
      %v5861 = vld [vmem:[%s221 + $0x8] sm:$0xff]
      %v5862 = vld [vmem:[%s221 + $0x10] sm:$0xff]
      %v5863 = vld [vmem:[%s221 + $0x18] sm:$0xff]
      %v5864 = vld [vmem:[%s221 + $0x20] sm:$0xff]
      %v5865 = vld [vmem:[%s221 + $0x28] sm:$0xff]
      %v5866 = vld [vmem:[%s221 + $0x30] sm:$0xff]
      %v5867 = vld [vmem:[%s221 + $0x38] sm:$0xff]
      %v5868 = vld [vmem:[%s221 + $0x40] sm:$0xff]
      %v5869 = vld [vmem:[%s221 + $0x48] sm:$0xff]
      %v5870 = vld [vmem:[%s221 + $0x50] sm:$0xff]
      %v5871 = vld [vmem:[%s221 + $0x58] sm:$0xff]
      %v5872 = vld [vmem:[%s221 + $0x60] sm:$0xff]
      %v5873 = vld [vmem:[%s221 + $0x68] sm:$0xff]
      %v5874 = vld [vmem:[%s221 + $0x70] sm:$0xff]
      %v5875 = vld [vmem:[%s221 + $0x78] sm:$0xff]
      %v5876 = vld [vmem:[%s221 + $0x80] sm:$0xff]
      %v5877 = vld [vmem:[%s221 + $0x88] sm:$0xff]
      %v5878 = vld [vmem:[%s221 + $0x90] sm:$0xff]
      %v5879 = vld [vmem:[%s221 + $0x98] sm:$0xff]
      %v5880 = vld [vmem:[%s221 + $0xa0] sm:$0xff]
      %v5881 = vld [vmem:[%s221 + $0xa8] sm:$0xff]
      %v5882 = vld [vmem:[%s221 + $0xb0] sm:$0xff]
      %v5883 = vld [vmem:[%s221 + $0xb8] sm:$0xff]
      %v5884 = vld [vmem:[%s221 + $0xc0] sm:$0xff]
      %v5885 = vld [vmem:[%s221 + $0xc8] sm:$0xff]
      %v5886 = vld [vmem:[%s221 + $0xd0] sm:$0xff]
      %v5887 = vld [vmem:[%s221 + $0xd8] sm:$0xff]
      %v5888 = vld [vmem:[%s221 + $0xe0] sm:$0xff]
      %v5889 = vld [vmem:[%s221 + $0xe8] sm:$0xff]
      %v5890 = vld [vmem:[%s221 + $0xf0] sm:$0xff]
      %v5891 = vld [vmem:[%s221 + $0xf8] sm:$0xff]
      %v5892 = vadd.f32 %v5828, %v5860
      %v5893 = vadd.f32 %v5829, %v5861
      %v5894 = vadd.f32 %v5830, %v5862
      %v5895 = vadd.f32 %v5831, %v5863
      %v5896 = vadd.f32 %v5832, %v5864
      %v5897 = vadd.f32 %v5833, %v5865
      %v5898 = vadd.f32 %v5834, %v5866
      %v5899 = vadd.f32 %v5835, %v5867
      %v5900 = vadd.f32 %v5836, %v5868
      %v5901 = vadd.f32 %v5837, %v5869
      %v5902 = vadd.f32 %v5838, %v5870
      %v5903 = vadd.f32 %v5839, %v5871
      %v5904 = vadd.f32 %v5840, %v5872
      %v5905 = vadd.f32 %v5841, %v5873
      %v5906 = vadd.f32 %v5842, %v5874
      %v5907 = vadd.f32 %v5843, %v5875
      %v5908 = vadd.f32 %v5844, %v5876
      %v5909 = vadd.f32 %v5845, %v5877
      %v5910 = vadd.f32 %v5846, %v5878
      %v5911 = vadd.f32 %v5847, %v5879
      %v5912 = vadd.f32 %v5848, %v5880
      %v5913 = vadd.f32 %v5849, %v5881
      %v5914 = vadd.f32 %v5850, %v5882
      %v5915 = vadd.f32 %v5851, %v5883
      %v5916 = vadd.f32 %v5852, %v5884
      %v5917 = vadd.f32 %v5853, %v5885
      %v5918 = vadd.f32 %v5854, %v5886
      %v5919 = vadd.f32 %v5855, %v5887
      %v5920 = vadd.f32 %v5856, %v5888
      %v5921 = vadd.f32 %v5857, %v5889
      %v5922 = vadd.f32 %v5858, %v5890
      %v5923 = vadd.f32 %v5859, %v5891
      %5924 = vst.msk [vmem:[%s226] sm:$0xff] %vm232, %v5892
      %5925 = vst.msk [vmem:[%s226 + $0x8] sm:$0xff] %vm232, %v5893
      %5926 = vst.msk [vmem:[%s226 + $0x10] sm:$0xff] %vm232, %v5894
      %5927 = vst.msk [vmem:[%s226 + $0x18] sm:$0xff] %vm232, %v5895
      %5928 = vst.msk [vmem:[%s226 + $0x20] sm:$0xff] %vm232, %v5896
      %5929 = vst.msk [vmem:[%s226 + $0x28] sm:$0xff] %vm232, %v5897
      %5930 = vst.msk [vmem:[%s226 + $0x30] sm:$0xff] %vm232, %v5898
      %5931 = vst.msk [vmem:[%s226 + $0x38] sm:$0xff] %vm232, %v5899
      %5932 = vst.msk [vmem:[%s226 + $0x40] sm:$0xff] %vm232, %v5900
      %5933 = vst.msk [vmem:[%s226 + $0x48] sm:$0xff] %vm232, %v5901
      %5934 = vst.msk [vmem:[%s226 + $0x50] sm:$0xff] %vm232, %v5902
      %5935 = vst.msk [vmem:[%s226 + $0x58] sm:$0xff] %vm232, %v5903
      %5936 = vst.msk [vmem:[%s226 + $0x60] sm:$0xff] %vm232, %v5904
      %5937 = vst.msk [vmem:[%s226 + $0x68] sm:$0xff] %vm232, %v5905
      %5938 = vst.msk [vmem:[%s226 + $0x70] sm:$0xff] %vm232, %v5906
      %5939 = vst.msk [vmem:[%s226 + $0x78] sm:$0xff] %vm232, %v5907
      %5940 = vst.msk [vmem:[%s226 + $0x80] sm:$0xff] %vm232, %v5908
      %5941 = vst.msk [vmem:[%s226 + $0x88] sm:$0xff] %vm232, %v5909
      %5942 = vst.msk [vmem:[%s226 + $0x90] sm:$0xff] %vm232, %v5910
      %5943 = vst.msk [vmem:[%s226 + $0x98] sm:$0xff] %vm232, %v5911
      %5944 = vst.msk [vmem:[%s226 + $0xa0] sm:$0xff] %vm232, %v5912
      %5945 = vst.msk [vmem:[%s226 + $0xa8] sm:$0xff] %vm232, %v5913
      %5946 = vst.msk [vmem:[%s226 + $0xb0] sm:$0xff] %vm232, %v5914
      %5947 = vst.msk [vmem:[%s226 + $0xb8] sm:$0xff] %vm232, %v5915
      %5948 = vst.msk [vmem:[%s226 + $0xc0] sm:$0xff] %vm232, %v5916
      %5949 = vst.msk [vmem:[%s226 + $0xc8] sm:$0xff] %vm232, %v5917
      %5950 = vst.msk [vmem:[%s226 + $0xd0] sm:$0xff] %vm232, %v5918
      %5951 = vst.msk [vmem:[%s226 + $0xd8] sm:$0xff] %vm232, %v5919
      %5952 = vst.msk [vmem:[%s226 + $0xe0] sm:$0xff] %vm232, %v5920
      %5953 = vst.msk [vmem:[%s226 + $0xe8] sm:$0xff] %vm232, %v5921
      %5954 = vst.msk [vmem:[%s226 + $0xf0] sm:$0xff] %vm232, %v5922
      %5955 = vst.msk [vmem:[%s226 + $0xf8] sm:$0xff] %vm232, %v5923
      %p5956 = scmp.lt.s32.totalorder %s18, 1
      %s5957 = scalar_select %p5956, %s18, 1
      %s5958 = smul.addr %s5957, 32
      %s5959 = smul.addr %s5958, 8
      %s5960 = scalar_lea.vmem %s5, %s5959
      // Predicated region
      $region41: #{tpu_custom_call.1} parent=39 // pred_check
        %p5961 = pneg %p146
      $region42: #{tpu_custom_call.1} parent=39 // pred_check_branch
        %5963 = sbr.rel (%p5961) target = $region44
      $region43: #{tpu_custom_call.1} parent=39 // pred_region
        _
      $region44: #{tpu_custom_call.1} parent=39 // pred_fallthru
        _
    $region40: #{tpu_custom_call.1} parent=5 // pred_fallthru
      _
    %p5964 = scmp.le.s32.totalorder 2, %s13
    // Predicated region
    $region45: #{tpu_custom_call.1} parent=5 // pred_check
      %p5965 = pneg %p5964
    $region46: #{tpu_custom_call.1} parent=5 // pred_check_branch
      %5967 = sbr.rel (%p5965) target = $region48
    $region47: #{tpu_custom_call.1} parent=5 // pred_region
      %s5968 = ssub.s32 %s13, 2
      // Predicated region
      $region49: #{tpu_custom_call.1} parent=47 // pred_check
        %p5969 = pneg %p152
      $region50: #{tpu_custom_call.1} parent=47 // pred_check_branch
        %5971 = sbr.rel (%p5969) target = $region52
      $region51: #{tpu_custom_call.1} parent=47 // pred_region
        %p5972 = scmp.lt.s32.totalorder %s19, 1
        %s5973 = scalar_select %p5972, %s19, 1
        %s5974 = smul.addr %s5973, 32
        %s5975 = smul.addr %s5974, 8
        %s5976 = scalar_lea.vmem %s5, %s5975
      $region52: #{tpu_custom_call.1} parent=47 // pred_fallthru
        _
    $region48: #{tpu_custom_call.1} parent=5 // pred_fallthru
      _
  $region6: #{tpu_custom_call.1} parent=0 // loop_footer
    %s17 = sadd.s32 1, %s13
  $region7: #{tpu_custom_call.1} parent=0 // loop_footer_branch
    %12 = sbr.rel target = $region3
  $region8: #{tpu_custom_call.1} parent=0 // loop_exit
    _

</llo_original>
